<compile_context>
chip_gen: v7x
topology: tpu7x:2x2x1
jax: 0.10.0
libtpu: 0.0.40
codegen_flags: <defaults>
</compile_context>

<pallas_src>
import functools
import numpy as np
import jax
import jax.numpy as jnp
from jax.experimental import pallas as pl
from jax.experimental.pallas import tpu as pltpu

LANES = 128              # one full lane register (action dim + layer-5 padded to this)
MAX_SINGLE_BLOCK = 512   # up to this many batch rows -> one grid step


# ------------------------------------------------------------------ kernel ---
def actor_kernel(x_ref,
                 w1_ref, b1_ref,
                 w2_ref, b2_ref,
                 w3_ref, b3_ref,
                 w4_ref, b4_ref,
                 w5_ref, b5_ref,
                 w6_ref, b6_ref,
                 scale_ref,
                 o_ref):
    """6-layer MLP: bf16 MXU matmuls, bf16 inter-layer activations,
    f32 accumulation / bias / tanh / per-column action scaling."""

    def dense(h_bf16, w_ref, b_ref):
        # bf16 x bf16 -> f32 accumulation on the MXU, f32 bias add.
        return jnp.dot(h_bf16, w_ref[...],
                       preferred_element_type=jnp.float32) + b_ref[...]

    def relu_bf16(z_f32):
        # Keep inter-layer activations in bf16: halves VMEM traffic between
        # layers and avoids a per-layer cast inside dense (VALU/ld-st bound).
        return jnp.maximum(z_f32, 0.0).astype(jnp.bfloat16)

    h = x_ref[...].astype(jnp.bfloat16)               # [TB, state_dim]
    h = relu_bf16(dense(h, w1_ref, b1_ref))           # [TB, 512]
    h = relu_bf16(dense(h, w2_ref, b2_ref))           # [TB, 384]
    h = relu_bf16(dense(h, w3_ref, b3_ref))           # [TB, 256]
    h = relu_bf16(dense(h, w4_ref, b4_ref))           # [TB, 128]
    h = relu_bf16(dense(h, w5_ref, b5_ref))           # [TB, 128] (64 real + 64 zero lanes)
    a = jnp.tanh(dense(h, w6_ref, b6_ref))            # [TB, 128] f32
    # Per-column action scaling; padded lanes carry scale 0 -> exact zeros.
    o_ref[...] = a * scale_ref[...]


# ---------------------------------------------------- one-time param prep ---
def prepare_actor_params(params, scales, action_dim):
    """Hoist padding + bf16 casting out of the per-call path.

    params: list of (w:[in,out] f32, b:[1,out] f32).  Layer 5 output and the
    final layer are zero-padded to 128 lanes (numerically exact).  Returns the
    flat tuple of kernel-ready arrays (bf16 weights, f32 biases, f32 scale)."""
    (w1, b1), (w2, b2), (w3, b3), (w4, b4), (w5, b5), (w6, b6) = params
    h5 = w5.shape[1]   # 64

    # Pad layer-5 output to 128 lanes: relu of the zero columns is exactly 0.
    w5p = jnp.zeros((w5.shape[0], LANES), jnp.float32).at[:, :h5].set(w5)
    b5p = jnp.zeros((1, LANES), jnp.float32).at[:, :h5].set(b5)
    # Pad layer-6 input rows (see zeros) and output cols to 128 lanes.
    w6p = jnp.zeros((LANES, LANES), jnp.float32).at[:h5, :action_dim].set(w6)
    b6p = jnp.zeros((1, LANES), jnp.float32).at[:, :action_dim].set(b6)
    scale_p = jnp.zeros((1, LANES), jnp.float32).at[:, :action_dim].set(scales)

    ws = [w1, w2, w3, w4, w5p, w6p]
    bs = [b1, b2, b3, b4, b5p, b6p]
    prepared = []
    for w, b in zip(ws, bs):
        prepared.append(jnp.asarray(w, jnp.bfloat16))   # MXU-native operand
        prepared.append(jnp.asarray(b, jnp.float32))
    prepared.append(jnp.asarray(scale_p, jnp.float32))
    return tuple(prepared)


# ----------------------------------------------------------------- wrapper ---
def _pick_block_rows(b):
    """Block-row choice: one grid step for small/medium batches, otherwise a
    big block that divides B exactly (keeps jnp.pad off the call path)."""
    if b <= MAX_SINGLE_BLOCK:
        return b
    for cand in (512, 384, 256, 128):
        if b % cand == 0:
            return cand
    # TODO(synk): for huge ragged batches, pad once outside the jit or mask
    # the ragged last block; whole-batch single block keeps the path pad-free.
    return b


def actor_forward(state, prepared, *, action_dim):
    """state: [B, state_dim] f32, prepared: output of prepare_actor_params.
    Returns [B, action_dim] f32 scaled actions."""
    b, state_dim = state.shape
    block_b = _pick_block_rows(b)
    num_blocks = b // block_b
    grid = (num_blocks,)

    const_map = lambda i: (0, 0)      # weights stay VMEM-resident across steps
    in_specs = [pl.BlockSpec((block_b, state_dim), lambda i: (i, 0))]
    for p in prepared:
        in_specs.append(pl.BlockSpec(p.shape, const_map))
    out_specs = pl.BlockSpec((block_b, LANES), lambda i: (i, 0))

    # Advisory cost hint so XLA schedules around this tiny call.
    layer_shapes = [prepared[2 * k].shape for k in range(6)]
    flops = 2 * b * sum(kk * nn for kk, nn in layer_shapes)
    bytes_accessed = (
        b * state_dim * 4
        + sum(int(np.prod(p.shape)) * p.dtype.itemsize for p in prepared)
        + b * LANES * 4)
    cost = pl.CostEstimate(flops=flops,
                           transcendentals=b * LANES,
                           bytes_accessed=bytes_accessed)

    # With a single grid step the semantics tag is moot; for multi-block
    # batches "parallel" is kept (TODO(synk): pltpu.CORE_PARALLEL / core_map
    # to genuinely shard batch blocks across v7x's two TensorCores).
    sem = ("arbitrary",) if num_blocks == 1 else ("parallel",)

    out = pl.pallas_call(
        actor_kernel,
        out_shape=jax.ShapeDtypeStruct((b, LANES), jnp.float32),
        grid=grid,
        in_specs=in_specs,
        out_specs=out_specs,
        compiler_params=pltpu.CompilerParams(dimension_semantics=sem),
        cost_estimate=cost,
    )(state, *prepared)

    return out[:, :action_dim]


# ---------------------------------------------------------------- init glue ---
def xavier_uniform(key, fan_in, fan_out):
    bound = float(np.sqrt(6.0 / (fan_in + fan_out)))
    # stored as [in, out] (already transposed for the kernel's x @ W)
    return jax.random.uniform(key, (fan_in, fan_out), jnp.float32, -bound, bound)


def linear_bias(key, fan_in, fan_out):
    # PyTorch Linear default bias init: U(-1/sqrt(fan_in), 1/sqrt(fan_in))
    bound = float(1.0 / np.sqrt(fan_in))
    return jax.random.uniform(key, (1, fan_out), jnp.float32, -bound, bound)


def make_actor_params(key, state_dim, action_dim):
    dims = [state_dim, 512, 384, 256, 128, 64, action_dim]
    params = []
    for i in range(6):
        key, kw, kb = jax.random.split(key, 3)
        params.append((xavier_uniform(kw, dims[i], dims[i + 1]),
                       linear_bias(kb, dims[i], dims[i + 1])))
    return params


def reference_forward(state, params, scales):
    """Plain-JAX reference with the same mixed precision as the kernel
    (bf16 MXU operands + bf16 inter-layer activations, f32 accumulation)."""
    h = state.astype(jnp.bfloat16)
    for i, (w, b) in enumerate(params):
        z = jnp.dot(h, w.astype(jnp.bfloat16),
                    preferred_element_type=jnp.float32) + b
        h = jnp.maximum(z, 0.0).astype(jnp.bfloat16) if i < 5 else jnp.tanh(z)
    return h * scales


# -------------------------------------------------------------------- main ---
if __name__ == "__main__":
    key = jax.random.PRNGKey(0)

    state_dim = 16
    action_dim = 3

    key, kp = jax.random.split(key)
    params = make_actor_params(kp, state_dim, action_dim)

    momentum_wheel_scale = 160 * 2 * np.pi / 60
    back_wheel_scale = 60 * 2 * np.pi / 60
    steering_scale = np.radians(20)
    scales = jnp.asarray(
        [[momentum_wheel_scale, back_wheel_scale, steering_scale]], jnp.float32)

    # One-time prep (padding + bf16 cast) — off the per-call path.
    prepared = prepare_actor_params(params, scales, action_dim)

    fwd = jax.jit(functools.partial(actor_forward, action_dim=action_dim))

    # 256: single grid step (typical batch); 7: tiny ragged inference batch
    # (whole-batch block, no padding); 1024: multi-block path (block=512).
    for batch in (256, 7, 1024):
        key, kx = jax.random.split(key)
        state = jax.random.normal(kx, (batch, state_dim), jnp.float32)
        actions = fwd(state, prepared)
        jax.block_until_ready(actions)
        ref = reference_forward(state, params, scales)
        np.testing.assert_allclose(np.asarray(actions), np.asarray(ref),
                                   rtol=1e-3, atol=1e-3)

    print("KERNEL_OK")
</pallas_src>

<mosaic_0001>
module attributes {stable_mosaic.version = 11 : i64} {
  func.func @actor_kernel(%arg0: i32, %arg1: memref<256x16xf32, #tpu.memory_space<vmem>>, %arg2: memref<16x512xbf16, #tpu.memory_space<vmem>>, %arg3: memref<1x512xf32, #tpu.memory_space<vmem>>, %arg4: memref<512x384xbf16, #tpu.memory_space<vmem>>, %arg5: memref<1x384xf32, #tpu.memory_space<vmem>>, %arg6: memref<384x256xbf16, #tpu.memory_space<vmem>>, %arg7: memref<1x256xf32, #tpu.memory_space<vmem>>, %arg8: memref<256x128xbf16, #tpu.memory_space<vmem>>, %arg9: memref<1x128xf32, #tpu.memory_space<vmem>>, %arg10: memref<128x128xbf16, #tpu.memory_space<vmem>>, %arg11: memref<1x128xf32, #tpu.memory_space<vmem>>, %arg12: memref<128x128xbf16, #tpu.memory_space<vmem>>, %arg13: memref<1x128xf32, #tpu.memory_space<vmem>>, %arg14: memref<1x128xf32, #tpu.memory_space<vmem>>, %arg15: memref<256x128xf32, #tpu.memory_space<vmem>>) attributes {dimension_semantics = [#tpu.dimension_semantics<arbitrary>], iteration_bounds = array<i64: 1>, scalar_prefetch = 0 : i64, scratch_operands = 0 : i64, tpu.core_type = #tpu.core_type<tc>, window_params = [{transform_indices = @transform_0, window_bounds = array<i64: 256, 16>}, {pipeline_mode = #tpu.pipeline_mode<synchronous>, transform_indices = @transform_1, window_bounds = array<i64: 16, 512>}, {pipeline_mode = #tpu.pipeline_mode<synchronous>, transform_indices = @transform_2, window_bounds = array<i64: 1, 512>}, {pipeline_mode = #tpu.pipeline_mode<synchronous>, transform_indices = @transform_3, window_bounds = array<i64: 512, 384>}, {pipeline_mode = #tpu.pipeline_mode<synchronous>, transform_indices = @transform_4, window_bounds = array<i64: 1, 384>}, {pipeline_mode = #tpu.pipeline_mode<synchronous>, transform_indices = @transform_5, window_bounds = array<i64: 384, 256>}, {pipeline_mode = #tpu.pipeline_mode<synchronous>, transform_indices = @transform_6, window_bounds = array<i64: 1, 256>}, {pipeline_mode = #tpu.pipeline_mode<synchronous>, transform_indices = @transform_7, window_bounds = array<i64: 256, 128>}, {pipeline_mode = #tpu.pipeline_mode<synchronous>, transform_indices = @transform_8, window_bounds = array<i64: 1, 128>}, {pipeline_mode = #tpu.pipeline_mode<synchronous>, transform_indices = @transform_9, window_bounds = array<i64: 128, 128>}, {pipeline_mode = #tpu.pipeline_mode<synchronous>, transform_indices = @transform_10, window_bounds = array<i64: 1, 128>}, {pipeline_mode = #tpu.pipeline_mode<synchronous>, transform_indices = @transform_11, window_bounds = array<i64: 128, 128>}, {pipeline_mode = #tpu.pipeline_mode<synchronous>, transform_indices = @transform_12, window_bounds = array<i64: 1, 128>}, {pipeline_mode = #tpu.pipeline_mode<synchronous>, transform_indices = @transform_13, window_bounds = array<i64: 1, 128>}, {transform_indices = @transform_14, window_bounds = array<i64: 256, 128>}]} {
    %c0 = arith.constant 0 : index
    %c0_0 = arith.constant 0 : index
    %0 = vector.load %arg1[%c0, %c0_0] : memref<256x16xf32, #tpu.memory_space<vmem>>, vector<256x16xf32>
    %1 = arith.truncf %0 : vector<256x16xf32> to vector<256x16xbf16>
    %c0_1 = arith.constant 0 : index
    %c0_2 = arith.constant 0 : index
    %2 = vector.load %arg2[%c0_1, %c0_2] : memref<16x512xbf16, #tpu.memory_space<vmem>>, vector<16x512xbf16>
    %cst = arith.constant dense<0.000000e+00> : vector<256x512xf32>
    %3 = tpu.matmul %1, %2, %cst {dimension_numbers = #tpu.dot_dimension_numbers<[1], [0], [0], [1], [0, 0, 1, 1], [], []>} : vector<256x16xbf16>, vector<16x512xbf16>, vector<256x512xf32> -> vector<256x512xf32>
    %c0_3 = arith.constant 0 : index
    %c0_4 = arith.constant 0 : index
    %4 = vector.load %arg3[%c0_3, %c0_4] : memref<1x512xf32, #tpu.memory_space<vmem>>, vector<1x512xf32>
    %5 = vector.broadcast %4 : vector<1x512xf32> to vector<256x512xf32>
    %6 = arith.addf %3, %5 : vector<256x512xf32>
    %cst_5 = arith.constant 0.000000e+00 : f32
    %7 = vector.broadcast %cst_5 : f32 to vector<256x512xf32>
    %8 = arith.maximumf %6, %7 : vector<256x512xf32>
    %9 = arith.truncf %8 : vector<256x512xf32> to vector<256x512xbf16>
    %c0_6 = arith.constant 0 : index
    %c0_7 = arith.constant 0 : index
    %10 = vector.load %arg4[%c0_6, %c0_7] : memref<512x384xbf16, #tpu.memory_space<vmem>>, vector<512x384xbf16>
    %cst_8 = arith.constant dense<0.000000e+00> : vector<256x384xf32>
    %11 = tpu.matmul %9, %10, %cst_8 {dimension_numbers = #tpu.dot_dimension_numbers<[1], [0], [0], [1], [0, 0, 1, 1], [], []>} : vector<256x512xbf16>, vector<512x384xbf16>, vector<256x384xf32> -> vector<256x384xf32>
    %c0_9 = arith.constant 0 : index
    %c0_10 = arith.constant 0 : index
    %12 = vector.load %arg5[%c0_9, %c0_10] : memref<1x384xf32, #tpu.memory_space<vmem>>, vector<1x384xf32>
    %13 = vector.broadcast %12 : vector<1x384xf32> to vector<256x384xf32>
    %14 = arith.addf %11, %13 : vector<256x384xf32>
    %cst_11 = arith.constant 0.000000e+00 : f32
    %15 = vector.broadcast %cst_11 : f32 to vector<256x384xf32>
    %16 = arith.maximumf %14, %15 : vector<256x384xf32>
    %17 = arith.truncf %16 : vector<256x384xf32> to vector<256x384xbf16>
    %c0_12 = arith.constant 0 : index
    %c0_13 = arith.constant 0 : index
    %18 = vector.load %arg6[%c0_12, %c0_13] : memref<384x256xbf16, #tpu.memory_space<vmem>>, vector<384x256xbf16>
    %cst_14 = arith.constant dense<0.000000e+00> : vector<256x256xf32>
    %19 = tpu.matmul %17, %18, %cst_14 {dimension_numbers = #tpu.dot_dimension_numbers<[1], [0], [0], [1], [0, 0, 1, 1], [], []>} : vector<256x384xbf16>, vector<384x256xbf16>, vector<256x256xf32> -> vector<256x256xf32>
    %c0_15 = arith.constant 0 : index
    %c0_16 = arith.constant 0 : index
    %20 = vector.load %arg7[%c0_15, %c0_16] : memref<1x256xf32, #tpu.memory_space<vmem>>, vector<1x256xf32>
    %21 = vector.broadcast %20 : vector<1x256xf32> to vector<256x256xf32>
    %22 = arith.addf %19, %21 : vector<256x256xf32>
    %cst_17 = arith.constant 0.000000e+00 : f32
    %23 = vector.broadcast %cst_17 : f32 to vector<256x256xf32>
    %24 = arith.maximumf %22, %23 : vector<256x256xf32>
    %25 = arith.truncf %24 : vector<256x256xf32> to vector<256x256xbf16>
    %c0_18 = arith.constant 0 : index
    %c0_19 = arith.constant 0 : index
    %26 = vector.load %arg8[%c0_18, %c0_19] : memref<256x128xbf16, #tpu.memory_space<vmem>>, vector<256x128xbf16>
    %cst_20 = arith.constant dense<0.000000e+00> : vector<256x128xf32>
    %27 = tpu.matmul %25, %26, %cst_20 {dimension_numbers = #tpu.dot_dimension_numbers<[1], [0], [0], [1], [0, 0, 1, 1], [], []>} : vector<256x256xbf16>, vector<256x128xbf16>, vector<256x128xf32> -> vector<256x128xf32>
    %c0_21 = arith.constant 0 : index
    %c0_22 = arith.constant 0 : index
    %28 = vector.load %arg9[%c0_21, %c0_22] : memref<1x128xf32, #tpu.memory_space<vmem>>, vector<1x128xf32>
    %29 = vector.broadcast %28 : vector<1x128xf32> to vector<256x128xf32>
    %30 = arith.addf %27, %29 : vector<256x128xf32>
    %cst_23 = arith.constant 0.000000e+00 : f32
    %31 = vector.broadcast %cst_23 : f32 to vector<256x128xf32>
    %32 = arith.maximumf %30, %31 : vector<256x128xf32>
    %33 = arith.truncf %32 : vector<256x128xf32> to vector<256x128xbf16>
    %c0_24 = arith.constant 0 : index
    %c0_25 = arith.constant 0 : index
    %34 = vector.load %arg10[%c0_24, %c0_25] : memref<128x128xbf16, #tpu.memory_space<vmem>>, vector<128x128xbf16>
    %cst_26 = arith.constant dense<0.000000e+00> : vector<256x128xf32>
    %35 = tpu.matmul %33, %34, %cst_26 {dimension_numbers = #tpu.dot_dimension_numbers<[1], [0], [0], [1], [0, 0, 1, 1], [], []>} : vector<256x128xbf16>, vector<128x128xbf16>, vector<256x128xf32> -> vector<256x128xf32>
    %c0_27 = arith.constant 0 : index
    %c0_28 = arith.constant 0 : index
    %36 = vector.load %arg11[%c0_27, %c0_28] : memref<1x128xf32, #tpu.memory_space<vmem>>, vector<1x128xf32>
    %37 = vector.broadcast %36 : vector<1x128xf32> to vector<256x128xf32>
    %38 = arith.addf %35, %37 : vector<256x128xf32>
    %cst_29 = arith.constant 0.000000e+00 : f32
    %39 = vector.broadcast %cst_29 : f32 to vector<256x128xf32>
    %40 = arith.maximumf %38, %39 : vector<256x128xf32>
    %41 = arith.truncf %40 : vector<256x128xf32> to vector<256x128xbf16>
    %c0_30 = arith.constant 0 : index
    %c0_31 = arith.constant 0 : index
    %42 = vector.load %arg12[%c0_30, %c0_31] : memref<128x128xbf16, #tpu.memory_space<vmem>>, vector<128x128xbf16>
    %cst_32 = arith.constant dense<0.000000e+00> : vector<256x128xf32>
    %43 = tpu.matmul %41, %42, %cst_32 {dimension_numbers = #tpu.dot_dimension_numbers<[1], [0], [0], [1], [0, 0, 1, 1], [], []>} : vector<256x128xbf16>, vector<128x128xbf16>, vector<256x128xf32> -> vector<256x128xf32>
    %c0_33 = arith.constant 0 : index
    %c0_34 = arith.constant 0 : index
    %44 = vector.load %arg13[%c0_33, %c0_34] : memref<1x128xf32, #tpu.memory_space<vmem>>, vector<1x128xf32>
    %45 = vector.broadcast %44 : vector<1x128xf32> to vector<256x128xf32>
    %46 = arith.addf %43, %45 : vector<256x128xf32>
    %47 = math.tanh %46 : vector<256x128xf32>
    %c0_35 = arith.constant 0 : index
    %c0_36 = arith.constant 0 : index
    %48 = vector.load %arg14[%c0_35, %c0_36] : memref<1x128xf32, #tpu.memory_space<vmem>>, vector<1x128xf32>
    %49 = vector.broadcast %48 : vector<1x128xf32> to vector<256x128xf32>
    %50 = arith.mulf %47, %49 : vector<256x128xf32>
    %c0_37 = arith.constant 0 : index
    %c0_38 = arith.constant 0 : index
    %51 = vector.load %arg15[%c0_37, %c0_38] : memref<256x128xf32, #tpu.memory_space<vmem>>, vector<256x128xf32>
    tpu.vector_store %arg15[%c0_37, %c0_38], %50 {strides = array<i32>} : memref<256x128xf32, #tpu.memory_space<vmem>>, vector<256x128xf32>,
    return
  }
  func.func @transform_0(%arg0: i32) -> (i32, i32) {
    %c0_i32 = arith.constant 0 : i32
    %c0_i32_0 = arith.constant 0 : i32
    return %arg0, %c0_i32 : i32, i32
  }
  func.func @transform_1(%arg0: i32) -> (i32, i32) {
    %c0_i32 = arith.constant 0 : i32
    %c0_i32_0 = arith.constant 0 : i32
    %c0_i32_1 = arith.constant 0 : i32
    return %c0_i32, %c0_i32_0 : i32, i32
  }
  func.func @transform_2(%arg0: i32) -> (i32, i32) {
    %c0_i32 = arith.constant 0 : i32
    %c0_i32_0 = arith.constant 0 : i32
    %c0_i32_1 = arith.constant 0 : i32
    return %c0_i32, %c0_i32_0 : i32, i32
  }
  func.func @transform_3(%arg0: i32) -> (i32, i32) {
    %c0_i32 = arith.constant 0 : i32
    %c0_i32_0 = arith.constant 0 : i32
    %c0_i32_1 = arith.constant 0 : i32
    return %c0_i32, %c0_i32_0 : i32, i32
  }
  func.func @transform_4(%arg0: i32) -> (i32, i32) {
    %c0_i32 = arith.constant 0 : i32
    %c0_i32_0 = arith.constant 0 : i32
    %c0_i32_1 = arith.constant 0 : i32
    return %c0_i32, %c0_i32_0 : i32, i32
  }
  func.func @transform_5(%arg0: i32) -> (i32, i32) {
    %c0_i32 = arith.constant 0 : i32
    %c0_i32_0 = arith.constant 0 : i32
    %c0_i32_1 = arith.constant 0 : i32
    return %c0_i32, %c0_i32_0 : i32, i32
  }
  func.func @transform_6(%arg0: i32) -> (i32, i32) {
    %c0_i32 = arith.constant 0 : i32
    %c0_i32_0 = arith.constant 0 : i32
    %c0_i32_1 = arith.constant 0 : i32
    return %c0_i32, %c0_i32_0 : i32, i32
  }
  func.func @transform_7(%arg0: i32) -> (i32, i32) {
    %c0_i32 = arith.constant 0 : i32
    %c0_i32_0 = arith.constant 0 : i32
    %c0_i32_1 = arith.constant 0 : i32
    return %c0_i32, %c0_i32_0 : i32, i32
  }
  func.func @transform_8(%arg0: i32) -> (i32, i32) {
    %c0_i32 = arith.constant 0 : i32
    %c0_i32_0 = arith.constant 0 : i32
    %c0_i32_1 = arith.constant 0 : i32
    return %c0_i32, %c0_i32_0 : i32, i32
  }
  func.func @transform_9(%arg0: i32) -> (i32, i32) {
    %c0_i32 = arith.constant 0 : i32
    %c0_i32_0 = arith.constant 0 : i32
    %c0_i32_1 = arith.constant 0 : i32
    return %c0_i32, %c0_i32_0 : i32, i32
  }
  func.func @transform_10(%arg0: i32) -> (i32, i32) {
    %c0_i32 = arith.constant 0 : i32
    %c0_i32_0 = arith.constant 0 : i32
    %c0_i32_1 = arith.constant 0 : i32
    return %c0_i32, %c0_i32_0 : i32, i32
  }
  func.func @transform_11(%arg0: i32) -> (i32, i32) {
    %c0_i32 = arith.constant 0 : i32
    %c0_i32_0 = arith.constant 0 : i32
    %c0_i32_1 = arith.constant 0 : i32
    return %c0_i32, %c0_i32_0 : i32, i32
  }
  func.func @transform_12(%arg0: i32) -> (i32, i32) {
    %c0_i32 = arith.constant 0 : i32
    %c0_i32_0 = arith.constant 0 : i32
    %c0_i32_1 = arith.constant 0 : i32
    return %c0_i32, %c0_i32_0 : i32, i32
  }
  func.func @transform_13(%arg0: i32) -> (i32, i32) {
    %c0_i32 = arith.constant 0 : i32
    %c0_i32_0 = arith.constant 0 : i32
    %c0_i32_1 = arith.constant 0 : i32
    return %c0_i32, %c0_i32_0 : i32, i32
  }
  func.func @transform_14(%arg0: i32) -> (i32, i32) {
    %c0_i32 = arith.constant 0 : i32
    %c0_i32_0 = arith.constant 0 : i32
    return %arg0, %c0_i32 : i32, i32
  }
}

</mosaic_0001>

<llo_original>
// kernel: actor_forward.1
$region0: #{actor_forward.1}
  #allocation0 [shape = 'u32[]', space=smem, size = 0x4, offset = 0x4, fixed_abs, tag = 'smem constant byte address 0x4 - core index']
  #allocation1 [shape = 'u32[144,128]{1,0:T(1,128)}', space=vmem, size = 0x12000, scoped, tag = 'internal scratch']
  %s0 = inlined_call_operand.vmem [shape: f32[256,16], index: 0, kind: input, shape index: {}]
  %s1 = inlined_call_operand.vmem [shape: bf16[16,512], index: 1, kind: input, shape index: {}]
  %s2 = inlined_call_operand.vmem [shape: f32[1,512], index: 2, kind: input, shape index: {}]
  %s3 = inlined_call_operand.hbm [shape: bf16[512,384], index: 3, kind: input, shape index: {}]
  %s4 = inlined_call_operand.vmem [shape: f32[1,384], index: 4, kind: input, shape index: {}]
  %s5 = inlined_call_operand.hbm [shape: bf16[384,256], index: 5, kind: input, shape index: {}]
  %s6 = inlined_call_operand.vmem [shape: f32[1,256], index: 6, kind: input, shape index: {}]
  %s7 = inlined_call_operand.vmem [shape: bf16[256,128], index: 7, kind: input, shape index: {}]
  %s8 = inlined_call_operand.vmem [shape: f32[1,128], index: 8, kind: input, shape index: {}]
  %s9 = inlined_call_operand.vmem [shape: bf16[128,128], index: 9, kind: input, shape index: {}]
  %s10 = inlined_call_operand.vmem [shape: f32[1,128], index: 10, kind: input, shape index: {}]
  %s11 = inlined_call_operand.vmem [shape: bf16[128,128], index: 11, kind: input, shape index: {}]
  %s12 = inlined_call_operand.vmem [shape: f32[1,128], index: 12, kind: input, shape index: {}]
  %s13 = inlined_call_operand.vmem [shape: f32[1,128], index: 13, kind: input, shape index: {}]
  %s14 = inlined_call_operand.vmem [shape: f32[256,128], index: 14, kind: output, shape index: {}]
  %s15 = sld [smem:[#allocation0]]
  $region74: #{actor_forward.1} parent=0
    _
  %s17 = ssub.s32 1, %s15
  %s18 = scalar_select 0, %s17, %s15
  $region1: #{actor_forward.1} parent=0
    #allocation2 [shape = 'u8[393216]{0}', space=vmem, size = 0x60000, scoped, tag = 'input window, operand 3, single buffered']
    #allocation3 [shape = 's32[1]{0}', space=sflag, size = 0x4, scoped, tag = 'scoped memory for actor_forward.1']
    #allocation4 [shape = 'u8[196608]{0}', space=vmem, size = 0x30000, scoped, tag = 'input window, operand 5, single buffered']
    #allocation5 [shape = 's32[1]{0}', space=sflag, size = 0x4, scoped, tag = 'scoped memory for actor_forward.1']
    %19 = vsyncpa [#allocation3], 0
    %20 = vsyncpa [#allocation5], 0
    // Predicated region
    $region2: #{actor_forward.1} parent=1 // pred_check
      _
    $region3: #{actor_forward.1} parent=1 // pred_check_branch
      %22 = sbr.rel (0) target = $region5
    $region4: #{actor_forward.1} parent=1 // pred_region
      _
    $region5: #{actor_forward.1} parent=1 // pred_fallthru
      _
    // Predicated region
    $region6: #{actor_forward.1} parent=1 // pred_check
      _
    $region7: #{actor_forward.1} parent=1 // pred_check_branch
      %24 = sbr.rel (0) target = $region9
    $region8: #{actor_forward.1} parent=1 // pred_region
      _
    $region9: #{actor_forward.1} parent=1 // pred_fallthru
      _
    // Predicated region
    $region10: #{actor_forward.1} parent=1 // pred_check
      _
    $region11: #{actor_forward.1} parent=1 // pred_check_branch
      %26 = sbr.rel (0) target = $region13
    $region12: #{actor_forward.1} parent=1 // pred_region
      _
    $region13: #{actor_forward.1} parent=1 // pred_fallthru
      _
    // Predicated region
    $region14: #{actor_forward.1} parent=1 // pred_check
      _
    $region15: #{actor_forward.1} parent=1 // pred_check_branch
      %28 = sbr.rel (0) target = $region17
    $region16: #{actor_forward.1} parent=1 // pred_region
      %s30 = ssub.s32 12288, 12288
      %31 = vsyncadd [#allocation3], %s30
      %s32 = sshll.u32 [#allocation2], 4
      %s33 = int_to_ptr.vmem [resolvable:$true] %s32
      %38 = dma.hbm_to_vmem [thread:$0]  %s3, 12288, %s33, [#allocation3], 192, 192, 12
    $region17: #{actor_forward.1} parent=1 // pred_fallthru
      _
    // Predicated region
    $region18: #{actor_forward.1} parent=1 // pred_check
      _
    $region19: #{actor_forward.1} parent=1 // pred_check_branch
      %40 = sbr.rel (0) target = $region21
    $region20: #{actor_forward.1} parent=1 // pred_region
      _
    $region21: #{actor_forward.1} parent=1 // pred_fallthru
      _
    // Predicated region
    $region22: #{actor_forward.1} parent=1 // pred_check
      _
    $region23: #{actor_forward.1} parent=1 // pred_check_branch
      %42 = sbr.rel (0) target = $region25
    $region24: #{actor_forward.1} parent=1 // pred_region
      %s44 = ssub.s32 6144, 6144
      %45 = vsyncadd [#allocation5], %s44
      %s46 = sshll.u32 [#allocation4], 4
      %s47 = int_to_ptr.vmem [resolvable:$true] %s46
      %52 = dma.hbm_to_vmem [thread:$0]  %s5, 6144, %s47, [#allocation5], 128, 128, 8
    $region25: #{actor_forward.1} parent=1 // pred_fallthru
      _
    // Predicated region
    $region26: #{actor_forward.1} parent=1 // pred_check
      _
    $region27: #{actor_forward.1} parent=1 // pred_check_branch
      %54 = sbr.rel (0) target = $region29
    $region28: #{actor_forward.1} parent=1 // pred_region
      _
    $region29: #{actor_forward.1} parent=1 // pred_fallthru
      _
    // Predicated region
    $region30: #{actor_forward.1} parent=1 // pred_check
      _
    $region31: #{actor_forward.1} parent=1 // pred_check_branch
      %56 = sbr.rel (0) target = $region33
    $region32: #{actor_forward.1} parent=1 // pred_region
      _
    $region33: #{actor_forward.1} parent=1 // pred_fallthru
      _
    // Predicated region
    $region34: #{actor_forward.1} parent=1 // pred_check
      _
    $region35: #{actor_forward.1} parent=1 // pred_check_branch
      %58 = sbr.rel (0) target = $region37
    $region36: #{actor_forward.1} parent=1 // pred_region
      _
    $region37: #{actor_forward.1} parent=1 // pred_fallthru
      _
    // Predicated region
    $region38: #{actor_forward.1} parent=1 // pred_check
      _
    $region39: #{actor_forward.1} parent=1 // pred_check_branch
      %60 = sbr.rel (0) target = $region41
    $region40: #{actor_forward.1} parent=1 // pred_region
      _
    $region41: #{actor_forward.1} parent=1 // pred_fallthru
      _
    // Predicated region
    $region42: #{actor_forward.1} parent=1 // pred_check
      _
    $region43: #{actor_forward.1} parent=1 // pred_check_branch
      %62 = sbr.rel (0) target = $region45
    $region44: #{actor_forward.1} parent=1 // pred_region
      _
    $region45: #{actor_forward.1} parent=1 // pred_fallthru
      _
    // Predicated region
    $region46: #{actor_forward.1} parent=1 // pred_check
      _
    $region47: #{actor_forward.1} parent=1 // pred_check_branch
      %64 = sbr.rel (0) target = $region49
    $region48: #{actor_forward.1} parent=1 // pred_region
      _
    $region49: #{actor_forward.1} parent=1 // pred_fallthru
      _
    // Predicated region
    $region50: #{actor_forward.1} parent=1 // pred_check
      _
    $region51: #{actor_forward.1} parent=1 // pred_check_branch
      %66 = sbr.rel (0) target = $region53
    $region52: #{actor_forward.1} parent=1 // pred_region
      _
    $region53: #{actor_forward.1} parent=1 // pred_fallthru
      _
    // Predicated region
    $region54: #{actor_forward.1} parent=1 // pred_check
      _
    $region55: #{actor_forward.1} parent=1 // pred_check_branch
      %68 = sbr.rel (0) target = $region57
    $region56: #{actor_forward.1} parent=1 // pred_region
      _
    $region57: #{actor_forward.1} parent=1 // pred_fallthru
      _
    // Predicated region
    $region58: #{actor_forward.1} parent=1 // pred_check
      _
    $region59: #{actor_forward.1} parent=1 // pred_check_branch
      %70 = sbr.rel (0) target = $region61
    $region60: #{actor_forward.1} parent=1 // pred_region
      %71 = dma.done [#allocation3], 12288
    $region61: #{actor_forward.1} parent=1 // pred_fallthru
      _
    // Predicated region
    $region62: #{actor_forward.1} parent=1 // pred_check
      _
    $region63: #{actor_forward.1} parent=1 // pred_check_branch
      %73 = sbr.rel (0) target = $region65
    $region64: #{actor_forward.1} parent=1 // pred_region
      %74 = dma.done [#allocation5], 6144
    $region65: #{actor_forward.1} parent=1 // pred_fallthru
      _
    %v76 = vld [vmem:[%s0] sm:$0xff]
    %v77 = vld [vmem:[%s0 + $0x8] sm:$0xff]
    %v78 = vld [vmem:[%s0 + $0x10] sm:$0xff]
    %v79 = vld [vmem:[%s0 + $0x18] sm:$0xff]
    %v80 = vld [vmem:[%s0 + $0x20] sm:$0xff]
    %v81 = vld [vmem:[%s0 + $0x28] sm:$0xff]
    %v82 = vld [vmem:[%s0 + $0x30] sm:$0xff]
    %v83 = vld [vmem:[%s0 + $0x38] sm:$0xff]
    %v84 = vld [vmem:[%s0 + $0x40] sm:$0xff]
    %v85 = vld [vmem:[%s0 + $0x48] sm:$0xff]
    %v86 = vld [vmem:[%s0 + $0x50] sm:$0xff]
    %v87 = vld [vmem:[%s0 + $0x58] sm:$0xff]
    %v88 = vld [vmem:[%s0 + $0x60] sm:$0xff]
    %v89 = vld [vmem:[%s0 + $0x68] sm:$0xff]
    %v90 = vld [vmem:[%s0 + $0x70] sm:$0xff]
    %v91 = vld [vmem:[%s0 + $0x78] sm:$0xff]
    %v92 = vld [vmem:[%s0 + $0x80] sm:$0xff]
    %v93 = vld [vmem:[%s0 + $0x88] sm:$0xff]
    %v94 = vld [vmem:[%s0 + $0x90] sm:$0xff]
    %v95 = vld [vmem:[%s0 + $0x98] sm:$0xff]
    %v96 = vld [vmem:[%s0 + $0xa0] sm:$0xff]
    %v97 = vld [vmem:[%s0 + $0xa8] sm:$0xff]
    %v98 = vld [vmem:[%s0 + $0xb0] sm:$0xff]
    %v99 = vld [vmem:[%s0 + $0xb8] sm:$0xff]
    %v100 = vld [vmem:[%s0 + $0xc0] sm:$0xff]
    %v101 = vld [vmem:[%s0 + $0xc8] sm:$0xff]
    %v102 = vld [vmem:[%s0 + $0xd0] sm:$0xff]
    %v103 = vld [vmem:[%s0 + $0xd8] sm:$0xff]
    %v104 = vld [vmem:[%s0 + $0xe0] sm:$0xff]
    %v105 = vld [vmem:[%s0 + $0xe8] sm:$0xff]
    %v106 = vld [vmem:[%s0 + $0xf0] sm:$0xff]
    %v107 = vld [vmem:[%s0 + $0xf8] sm:$0xff]
    %v108 = vpack.c.bf16 %v77, %v76
    %v109 = vpack.c.bf16 %v79, %v78
    %v110 = vpack.c.bf16 %v81, %v80
    %v111 = vpack.c.bf16 %v83, %v82
    %v112 = vpack.c.bf16 %v85, %v84
    %v113 = vpack.c.bf16 %v87, %v86
    %v114 = vpack.c.bf16 %v89, %v88
    %v115 = vpack.c.bf16 %v91, %v90
    %v116 = vpack.c.bf16 %v93, %v92
    %v117 = vpack.c.bf16 %v95, %v94
    %v118 = vpack.c.bf16 %v97, %v96
    %v119 = vpack.c.bf16 %v99, %v98
    %v120 = vpack.c.bf16 %v101, %v100
    %v121 = vpack.c.bf16 %v103, %v102
    %v122 = vpack.c.bf16 %v105, %v104
    %v123 = vpack.c.bf16 %v107, %v106
    %v124 = vld [vmem:[%s1] sm:$0xff]
    %v125 = vld [vmem:[%s1 + $0x8] sm:$0xff]
    %v126 = vld [vmem:[%s1 + $0x10] sm:$0xff]
    %v127 = vld [vmem:[%s1 + $0x18] sm:$0xff]
    %v128 = vld [vmem:[%s2] sm:$0xf]
    %v130 = vlaneseq
    %v131 = vshrl.u32 %v130, 7
    %v132 = vsub.s32 0, %v131
    %v133 = vrot.slane %v128, %v132
    %v134 = vlaneseq
    %v135 = vshrl.u32 %v134, 7
    %v136 = vsub.s32 1, %v135
    %v137 = vrot.slane %v128, %v136
    %v138 = vlaneseq
    %v139 = vshrl.u32 %v138, 7
    %v140 = vsub.s32 2, %v139
    %v141 = vrot.slane %v128, %v140
    %v142 = vlaneseq
    %v143 = vshrl.u32 %v142, 7
    %v144 = vsub.s32 3, %v143
    %v145 = vrot.slane %v128, %v144
    %v154 = vunpack.c.l.b16 %v124
    %v155 = vunpack.c.h.b16 %v124
    %v156 = vunpack.c.l.b16 %v125
    %v157 = vunpack.c.h.b16 %v125
    %v158 = vunpack.c.l.b16 %v126
    %v159 = vunpack.c.h.b16 %v126
    %v160 = vunpack.c.l.b16 %v127
    %v161 = vunpack.c.h.b16 %v127
    %v162 = vpack.c.b16 %v158, %v154
    %v163 = vpack.c.b16 %v159, %v155
    %v164 = vpack.c.b16 %v160, %v156
    %v165 = vpack.c.b16 %v161, %v157
    %vm170 = vcmask 130048
    %v172 = vsel %vm170, %v108, 0
    %v175 = vsel %vm170, %v109, 0
    %v178 = vsel %vm170, %v110, 0
    %v181 = vsel %vm170, %v111, 0
    %v184 = vsel %vm170, %v112, 0
    %v187 = vsel %vm170, %v113, 0
    %v190 = vsel %vm170, %v114, 0
    %v193 = vsel %vm170, %v115, 0
    %v196 = vsel %vm170, %v116, 0
    %v199 = vsel %vm170, %v117, 0
    %v202 = vsel %vm170, %v118, 0
    %v205 = vsel %vm170, %v119, 0
    %v208 = vsel %vm170, %v120, 0
    %v211 = vsel %vm170, %v121, 0
    %v214 = vsel %vm170, %v122, 0
    %v217 = vsel %vm170, %v123, 0
    %219 = vmatprep.subr.bf16.mxu0 %v163
    %220 = vmatpush1.bf16.msra.mxu0 %v162
    %221 = vmatprep.subr.bf16.mxu0 0
    %222 = vmatpush1.bf16.msra.mxu0 0
    %223 = vmatprep.subr.bf16.mxu0 0
    %224 = vmatpush1.bf16.msra.mxu0 0
    %225 = vmatprep.subr.bf16.mxu0 0
    %226 = vmatpush1.bf16.msra.mxu0 0
    %227 = vmatprep.subr.bf16.mxu0 0
    %228 = vmatpush1.bf16.msra.mxu0 0
    %229 = vmatprep.subr.bf16.mxu0 0
    %230 = vmatpush1.bf16.msra.mxu0 0
    %231 = vmatprep.subr.bf16.mxu0 0
    %232 = vmatpush1.bf16.msra.mxu0 0
    %233 = vmatprep.subr.bf16.mxu0 0
    %234 = vmatpush1.bf16.msra.mxu0 0
    %235 = vmatprep.subr.bf16.mxu0 0
    %236 = vmatpush1.bf16.msra.mxu0 0
    %237 = vmatprep.subr.bf16.mxu0 0
    %238 = vmatpush1.bf16.msra.mxu0 0
    %239 = vmatprep.subr.bf16.mxu0 0
    %240 = vmatpush1.bf16.msra.mxu0 0
    %241 = vmatprep.subr.bf16.mxu0 0
    %242 = vmatpush1.bf16.msra.mxu0 0
    %243 = vmatprep.subr.bf16.mxu0 0
    %244 = vmatpush1.bf16.msra.mxu0 0
    %245 = vmatprep.subr.bf16.mxu0 0
    %246 = vmatpush1.bf16.msra.mxu0 0
    %247 = vmatprep.subr.bf16.mxu0 0
    %248 = vmatpush1.bf16.msra.mxu0 0
    %249 = vmatprep.subr.bf16.mxu0 0
    %250 = vmatpush1.bf16.msra.mxu0 0
    %251 = vmatprep.mubr.bf16.mxu0 0
    %252 = vmatmul.mubr.bf16.gmra.mrb[0].mxu0 %v172
    %v253 = vpop.f32.mrb[0].mxu0
    %v254 = vadd.f32 %v133, %v253
    %v255 = vpop.f32.mrb[0].mxu0
    %v256 = vadd.f32 %v137, %v255
    %v257 = vpop.f32.mrb[0].mxu0
    %v258 = vadd.f32 %v133, %v257
    %v259 = vpop.f32.mrb[0].mxu0
    %v260 = vadd.f32 %v137, %v259
    %261 = vmatprep.mubr.bf16.mxu0 0
    %262 = vmatmul.mubr.bf16.gmra.mrb[0].mxu0 %v175
    %v263 = vpop.f32.mrb[0].mxu0
    %v264 = vadd.f32 %v133, %v263
    %v265 = vpop.f32.mrb[0].mxu0
    %v266 = vadd.f32 %v137, %v265
    %v267 = vpop.f32.mrb[0].mxu0
    %v268 = vadd.f32 %v133, %v267
    %v269 = vpop.f32.mrb[0].mxu0
    %v270 = vadd.f32 %v137, %v269
    %271 = vmatprep.mubr.bf16.mxu0 0
    %272 = vmatmul.mubr.bf16.gmra.mrb[0].mxu0 %v178
    %v273 = vpop.f32.mrb[0].mxu0
    %v274 = vadd.f32 %v133, %v273
    %v275 = vpop.f32.mrb[0].mxu0
    %v276 = vadd.f32 %v137, %v275
    %v277 = vpop.f32.mrb[0].mxu0
    %v278 = vadd.f32 %v133, %v277
    %v279 = vpop.f32.mrb[0].mxu0
    %v280 = vadd.f32 %v137, %v279
    %281 = vmatprep.mubr.bf16.mxu0 0
    %282 = vmatmul.mubr.bf16.gmra.mrb[0].mxu0 %v181
    %v283 = vpop.f32.mrb[0].mxu0
    %v284 = vadd.f32 %v133, %v283
    %v285 = vpop.f32.mrb[0].mxu0
    %v286 = vadd.f32 %v137, %v285
    %v287 = vpop.f32.mrb[0].mxu0
    %v288 = vadd.f32 %v133, %v287
    %v289 = vpop.f32.mrb[0].mxu0
    %v290 = vadd.f32 %v137, %v289
    %291 = vmatprep.mubr.bf16.mxu0 0
    %292 = vmatmul.mubr.bf16.gmra.mrb[0].mxu0 %v184
    %v293 = vpop.f32.mrb[0].mxu0
    %v294 = vadd.f32 %v133, %v293
    %v295 = vpop.f32.mrb[0].mxu0
    %v296 = vadd.f32 %v137, %v295
    %v297 = vpop.f32.mrb[0].mxu0
    %v298 = vadd.f32 %v133, %v297
    %v299 = vpop.f32.mrb[0].mxu0
    %v300 = vadd.f32 %v137, %v299
    %301 = vmatprep.mubr.bf16.mxu0 0
    %302 = vmatmul.mubr.bf16.gmra.mrb[0].mxu0 %v187
    %v303 = vpop.f32.mrb[0].mxu0
    %v304 = vadd.f32 %v133, %v303
    %v305 = vpop.f32.mrb[0].mxu0
    %v306 = vadd.f32 %v137, %v305
    %v307 = vpop.f32.mrb[0].mxu0
    %v308 = vadd.f32 %v133, %v307
    %v309 = vpop.f32.mrb[0].mxu0
    %v310 = vadd.f32 %v137, %v309
    %311 = vmatprep.mubr.bf16.mxu0 0
    %312 = vmatmul.mubr.bf16.gmra.mrb[0].mxu0 %v190
    %v313 = vpop.f32.mrb[0].mxu0
    %v314 = vadd.f32 %v133, %v313
    %v315 = vpop.f32.mrb[0].mxu0
    %v316 = vadd.f32 %v137, %v315
    %v317 = vpop.f32.mrb[0].mxu0
    %v318 = vadd.f32 %v133, %v317
    %v319 = vpop.f32.mrb[0].mxu0
    %v320 = vadd.f32 %v137, %v319
    %321 = vmatprep.mubr.bf16.mxu0 0
    %322 = vmatmul.mubr.bf16.gmra.mrb[0].mxu0 %v193
    %v323 = vpop.f32.mrb[0].mxu0
    %v324 = vadd.f32 %v133, %v323
    %v325 = vpop.f32.mrb[0].mxu0
    %v326 = vadd.f32 %v137, %v325
    %v327 = vpop.f32.mrb[0].mxu0
    %v328 = vadd.f32 %v133, %v327
    %v329 = vpop.f32.mrb[0].mxu0
    %v330 = vadd.f32 %v137, %v329
    %331 = vmatprep.mubr.bf16.mxu0 0
    %332 = vmatmul.mubr.bf16.gmra.mrb[0].mxu0 %v196
    %v333 = vpop.f32.mrb[0].mxu0
    %v334 = vadd.f32 %v133, %v333
    %v335 = vpop.f32.mrb[0].mxu0
    %v336 = vadd.f32 %v137, %v335
    %v337 = vpop.f32.mrb[0].mxu0
    %v338 = vadd.f32 %v133, %v337
    %v339 = vpop.f32.mrb[0].mxu0
    %v340 = vadd.f32 %v137, %v339
    %341 = vmatprep.mubr.bf16.mxu0 0
    %342 = vmatmul.mubr.bf16.gmra.mrb[0].mxu0 %v199
    %v343 = vpop.f32.mrb[0].mxu0
    %v344 = vadd.f32 %v133, %v343
    %v345 = vpop.f32.mrb[0].mxu0
    %v346 = vadd.f32 %v137, %v345
    %v347 = vpop.f32.mrb[0].mxu0
    %v348 = vadd.f32 %v133, %v347
    %v349 = vpop.f32.mrb[0].mxu0
    %v350 = vadd.f32 %v137, %v349
    %351 = vmatprep.mubr.bf16.mxu0 0
    %352 = vmatmul.mubr.bf16.gmra.mrb[0].mxu0 %v202
    %v353 = vpop.f32.mrb[0].mxu0
    %v354 = vadd.f32 %v133, %v353
    %v355 = vpop.f32.mrb[0].mxu0
    %v356 = vadd.f32 %v137, %v355
    %v357 = vpop.f32.mrb[0].mxu0
    %v358 = vadd.f32 %v133, %v357
    %v359 = vpop.f32.mrb[0].mxu0
    %v360 = vadd.f32 %v137, %v359
    %361 = vmatprep.mubr.bf16.mxu0 0
    %362 = vmatmul.mubr.bf16.gmra.mrb[0].mxu0 %v205
    %v363 = vpop.f32.mrb[0].mxu0
    %v364 = vadd.f32 %v133, %v363
    %v365 = vpop.f32.mrb[0].mxu0
    %v366 = vadd.f32 %v137, %v365
    %v367 = vpop.f32.mrb[0].mxu0
    %v368 = vadd.f32 %v133, %v367
    %v369 = vpop.f32.mrb[0].mxu0
    %v370 = vadd.f32 %v137, %v369
    %371 = vmatprep.mubr.bf16.mxu0 0
    %372 = vmatmul.mubr.bf16.gmra.mrb[0].mxu0 %v208
    %v373 = vpop.f32.mrb[0].mxu0
    %v374 = vadd.f32 %v133, %v373
    %v375 = vpop.f32.mrb[0].mxu0
    %v376 = vadd.f32 %v137, %v375
    %v377 = vpop.f32.mrb[0].mxu0
    %v378 = vadd.f32 %v133, %v377
    %v379 = vpop.f32.mrb[0].mxu0
    %v380 = vadd.f32 %v137, %v379
    %381 = vmatprep.mubr.bf16.mxu0 0
    %382 = vmatmul.mubr.bf16.gmra.mrb[0].mxu0 %v211
    %v383 = vpop.f32.mrb[0].mxu0
    %v384 = vadd.f32 %v133, %v383
    %v385 = vpop.f32.mrb[0].mxu0
    %v386 = vadd.f32 %v137, %v385
    %v387 = vpop.f32.mrb[0].mxu0
    %v388 = vadd.f32 %v133, %v387
    %v389 = vpop.f32.mrb[0].mxu0
    %v390 = vadd.f32 %v137, %v389
    %391 = vmatprep.mubr.bf16.mxu0 0
    %392 = vmatmul.mubr.bf16.gmra.mrb[0].mxu0 %v214
    %v393 = vpop.f32.mrb[0].mxu0
    %v394 = vadd.f32 %v133, %v393
    %v395 = vpop.f32.mrb[0].mxu0
    %v396 = vadd.f32 %v137, %v395
    %v397 = vpop.f32.mrb[0].mxu0
    %v398 = vadd.f32 %v133, %v397
    %v399 = vpop.f32.mrb[0].mxu0
    %v400 = vadd.f32 %v137, %v399
    %401 = vmatprep.mubr.bf16.mxu0 0
    %402 = vmatmul.mubr.bf16.gmra.mrb[0].mxu0 %v217
    %v403 = vpop.f32.mrb[0].mxu0
    %v404 = vadd.f32 %v133, %v403
    %v405 = vpop.f32.mrb[0].mxu0
    %v406 = vadd.f32 %v137, %v405
    %v407 = vpop.f32.mrb[0].mxu0
    %v408 = vadd.f32 %v133, %v407
    %v409 = vpop.f32.mrb[0].mxu0
    %v410 = vadd.f32 %v137, %v409
    %411 = vdwg.mxu0
    %412 = vmatprep.subr.bf16.mxu0 %v165
    %413 = vmatpush1.bf16.msra.mxu0 %v164
    %414 = vmatprep.subr.bf16.mxu0 0
    %415 = vmatpush1.bf16.msra.mxu0 0
    %416 = vmatprep.subr.bf16.mxu0 0
    %417 = vmatpush1.bf16.msra.mxu0 0
    %418 = vmatprep.subr.bf16.mxu0 0
    %419 = vmatpush1.bf16.msra.mxu0 0
    %420 = vmatprep.subr.bf16.mxu0 0
    %421 = vmatpush1.bf16.msra.mxu0 0
    %422 = vmatprep.subr.bf16.mxu0 0
    %423 = vmatpush1.bf16.msra.mxu0 0
    %424 = vmatprep.subr.bf16.mxu0 0
    %425 = vmatpush1.bf16.msra.mxu0 0
    %426 = vmatprep.subr.bf16.mxu0 0
    %427 = vmatpush1.bf16.msra.mxu0 0
    %428 = vmatprep.subr.bf16.mxu0 0
    %429 = vmatpush1.bf16.msra.mxu0 0
    %430 = vmatprep.subr.bf16.mxu0 0
    %431 = vmatpush1.bf16.msra.mxu0 0
    %432 = vmatprep.subr.bf16.mxu0 0
    %433 = vmatpush1.bf16.msra.mxu0 0
    %434 = vmatprep.subr.bf16.mxu0 0
    %435 = vmatpush1.bf16.msra.mxu0 0
    %436 = vmatprep.subr.bf16.mxu0 0
    %437 = vmatpush1.bf16.msra.mxu0 0
    %438 = vmatprep.subr.bf16.mxu0 0
    %439 = vmatpush1.bf16.msra.mxu0 0
    %440 = vmatprep.subr.bf16.mxu0 0
    %441 = vmatpush1.bf16.msra.mxu0 0
    %442 = vmatprep.subr.bf16.mxu0 0
    %443 = vmatpush1.bf16.msra.mxu0 0
    %444 = vmatprep.mubr.bf16.mxu0 0
    %445 = vmatmul.mubr.bf16.gmra.mrb[0].mxu0 %v172
    %v446 = vpop.f32.mrb[0].mxu0
    %v447 = vadd.f32 %v141, %v446
    %v448 = vpop.f32.mrb[0].mxu0
    %v449 = vadd.f32 %v145, %v448
    %v450 = vpop.f32.mrb[0].mxu0
    %v451 = vadd.f32 %v141, %v450
    %v452 = vpop.f32.mrb[0].mxu0
    %v453 = vadd.f32 %v145, %v452
    %454 = vmatprep.mubr.bf16.mxu0 0
    %455 = vmatmul.mubr.bf16.gmra.mrb[0].mxu0 %v175
    %v456 = vpop.f32.mrb[0].mxu0
    %v457 = vadd.f32 %v141, %v456
    %v458 = vpop.f32.mrb[0].mxu0
    %v459 = vadd.f32 %v145, %v458
    %v460 = vpop.f32.mrb[0].mxu0
    %v461 = vadd.f32 %v141, %v460
    %v462 = vpop.f32.mrb[0].mxu0
    %v463 = vadd.f32 %v145, %v462
    %464 = vmatprep.mubr.bf16.mxu0 0
    %465 = vmatmul.mubr.bf16.gmra.mrb[0].mxu0 %v178
    %v466 = vpop.f32.mrb[0].mxu0
    %v467 = vadd.f32 %v141, %v466
    %v468 = vpop.f32.mrb[0].mxu0
    %v469 = vadd.f32 %v145, %v468
    %v470 = vpop.f32.mrb[0].mxu0
    %v471 = vadd.f32 %v141, %v470
    %v472 = vpop.f32.mrb[0].mxu0
    %v473 = vadd.f32 %v145, %v472
    %474 = vmatprep.mubr.bf16.mxu0 0
    %475 = vmatmul.mubr.bf16.gmra.mrb[0].mxu0 %v181
    %v476 = vpop.f32.mrb[0].mxu0
    %v477 = vadd.f32 %v141, %v476
    %v478 = vpop.f32.mrb[0].mxu0
    %v479 = vadd.f32 %v145, %v478
    %v480 = vpop.f32.mrb[0].mxu0
    %v481 = vadd.f32 %v141, %v480
    %v482 = vpop.f32.mrb[0].mxu0
    %v483 = vadd.f32 %v145, %v482
    %484 = vmatprep.mubr.bf16.mxu0 0
    %485 = vmatmul.mubr.bf16.gmra.mrb[0].mxu0 %v184
    %v486 = vpop.f32.mrb[0].mxu0
    %v487 = vadd.f32 %v141, %v486
    %v488 = vpop.f32.mrb[0].mxu0
    %v489 = vadd.f32 %v145, %v488
    %v490 = vpop.f32.mrb[0].mxu0
    %v491 = vadd.f32 %v141, %v490
    %v492 = vpop.f32.mrb[0].mxu0
    %v493 = vadd.f32 %v145, %v492
    %494 = vmatprep.mubr.bf16.mxu0 0
    %495 = vmatmul.mubr.bf16.gmra.mrb[0].mxu0 %v187
    %v496 = vpop.f32.mrb[0].mxu0
    %v497 = vadd.f32 %v141, %v496
    %v498 = vpop.f32.mrb[0].mxu0
    %v499 = vadd.f32 %v145, %v498
    %v500 = vpop.f32.mrb[0].mxu0
    %v501 = vadd.f32 %v141, %v500
    %v502 = vpop.f32.mrb[0].mxu0
    %v503 = vadd.f32 %v145, %v502
    %504 = vmatprep.mubr.bf16.mxu0 0
    %505 = vmatmul.mubr.bf16.gmra.mrb[0].mxu0 %v190
    %v506 = vpop.f32.mrb[0].mxu0
    %v507 = vadd.f32 %v141, %v506
    %v508 = vpop.f32.mrb[0].mxu0
    %v509 = vadd.f32 %v145, %v508
    %v510 = vpop.f32.mrb[0].mxu0
    %v511 = vadd.f32 %v141, %v510
    %v512 = vpop.f32.mrb[0].mxu0
    %v513 = vadd.f32 %v145, %v512
    %514 = vmatprep.mubr.bf16.mxu0 0
    %515 = vmatmul.mubr.bf16.gmra.mrb[0].mxu0 %v193
    %v516 = vpop.f32.mrb[0].mxu0
    %v517 = vadd.f32 %v141, %v516
    %v518 = vpop.f32.mrb[0].mxu0
    %v519 = vadd.f32 %v145, %v518
    %v520 = vpop.f32.mrb[0].mxu0
    %v521 = vadd.f32 %v141, %v520
    %v522 = vpop.f32.mrb[0].mxu0
    %v523 = vadd.f32 %v145, %v522
    %524 = vmatprep.mubr.bf16.mxu0 0
    %525 = vmatmul.mubr.bf16.gmra.mrb[0].mxu0 %v196
    %v526 = vpop.f32.mrb[0].mxu0
    %v527 = vadd.f32 %v141, %v526
    %v528 = vpop.f32.mrb[0].mxu0
    %v529 = vadd.f32 %v145, %v528
    %v530 = vpop.f32.mrb[0].mxu0
    %v531 = vadd.f32 %v141, %v530
    %v532 = vpop.f32.mrb[0].mxu0
    %v533 = vadd.f32 %v145, %v532
    %534 = vmatprep.mubr.bf16.mxu0 0
    %535 = vmatmul.mubr.bf16.gmra.mrb[0].mxu0 %v199
    %v536 = vpop.f32.mrb[0].mxu0
    %v537 = vadd.f32 %v141, %v536
    %v538 = vpop.f32.mrb[0].mxu0
    %v539 = vadd.f32 %v145, %v538
    %v540 = vpop.f32.mrb[0].mxu0
    %v541 = vadd.f32 %v141, %v540
    %v542 = vpop.f32.mrb[0].mxu0
    %v543 = vadd.f32 %v145, %v542
    %544 = vmatprep.mubr.bf16.mxu0 0
    %545 = vmatmul.mubr.bf16.gmra.mrb[0].mxu0 %v202
    %v546 = vpop.f32.mrb[0].mxu0
    %v547 = vadd.f32 %v141, %v546
    %v548 = vpop.f32.mrb[0].mxu0
    %v549 = vadd.f32 %v145, %v548
    %v550 = vpop.f32.mrb[0].mxu0
    %v551 = vadd.f32 %v141, %v550
    %v552 = vpop.f32.mrb[0].mxu0
    %v553 = vadd.f32 %v145, %v552
    %554 = vmatprep.mubr.bf16.mxu0 0
    %555 = vmatmul.mubr.bf16.gmra.mrb[0].mxu0 %v205
    %v556 = vpop.f32.mrb[0].mxu0
    %v557 = vadd.f32 %v141, %v556
    %v558 = vpop.f32.mrb[0].mxu0
    %v559 = vadd.f32 %v145, %v558
    %v560 = vpop.f32.mrb[0].mxu0
    %v561 = vadd.f32 %v141, %v560
    %v562 = vpop.f32.mrb[0].mxu0
    %v563 = vadd.f32 %v145, %v562
    %564 = vmatprep.mubr.bf16.mxu0 0
    %565 = vmatmul.mubr.bf16.gmra.mrb[0].mxu0 %v208
    %v566 = vpop.f32.mrb[0].mxu0
    %v567 = vadd.f32 %v141, %v566
    %v568 = vpop.f32.mrb[0].mxu0
    %v569 = vadd.f32 %v145, %v568
    %v570 = vpop.f32.mrb[0].mxu0
    %v571 = vadd.f32 %v141, %v570
    %v572 = vpop.f32.mrb[0].mxu0
    %v573 = vadd.f32 %v145, %v572
    %574 = vmatprep.mubr.bf16.mxu0 0
    %575 = vmatmul.mubr.bf16.gmra.mrb[0].mxu0 %v211
    %v576 = vpop.f32.mrb[0].mxu0
    %v577 = vadd.f32 %v141, %v576
    %v578 = vpop.f32.mrb[0].mxu0
    %v579 = vadd.f32 %v145, %v578
    %v580 = vpop.f32.mrb[0].mxu0
    %v581 = vadd.f32 %v141, %v580
    %v582 = vpop.f32.mrb[0].mxu0
    %v583 = vadd.f32 %v145, %v582
    %584 = vmatprep.mubr.bf16.mxu0 0
    %585 = vmatmul.mubr.bf16.gmra.mrb[0].mxu0 %v214
    %v586 = vpop.f32.mrb[0].mxu0
    %v587 = vadd.f32 %v141, %v586
    %v588 = vpop.f32.mrb[0].mxu0
    %v589 = vadd.f32 %v145, %v588
    %v590 = vpop.f32.mrb[0].mxu0
    %v591 = vadd.f32 %v141, %v590
    %v592 = vpop.f32.mrb[0].mxu0
    %v593 = vadd.f32 %v145, %v592
    %594 = vmatprep.mubr.bf16.mxu0 0
    %595 = vmatmul.mubr.bf16.gmra.mrb[0].mxu0 %v217
    %v596 = vpop.f32.mrb[0].mxu0
    %v597 = vadd.f32 %v141, %v596
    %v598 = vpop.f32.mrb[0].mxu0
    %v599 = vadd.f32 %v145, %v598
    %v600 = vpop.f32.mrb[0].mxu0
    %v601 = vadd.f32 %v141, %v600
    %v602 = vpop.f32.mrb[0].mxu0
    %v603 = vadd.f32 %v145, %v602
    %604 = vdwg.mxu0
    %v605 = vmax.f32 %v254, 0.0
    %v606 = vmax.f32 %v256, 0.0
    %v607 = vmax.f32 %v447, 0.0
    %v608 = vmax.f32 %v449, 0.0
    %v609 = vmax.f32 %v258, 0.0
    %v610 = vmax.f32 %v260, 0.0
    %v611 = vmax.f32 %v451, 0.0
    %v612 = vmax.f32 %v453, 0.0
    %v613 = vmax.f32 %v264, 0.0
    %v614 = vmax.f32 %v266, 0.0
    %v615 = vmax.f32 %v457, 0.0
    %v616 = vmax.f32 %v459, 0.0
    %v617 = vmax.f32 %v268, 0.0
    %v618 = vmax.f32 %v270, 0.0
    %v619 = vmax.f32 %v461, 0.0
    %v620 = vmax.f32 %v463, 0.0
    %v621 = vmax.f32 %v274, 0.0
    %v622 = vmax.f32 %v276, 0.0
    %v623 = vmax.f32 %v467, 0.0
    %v624 = vmax.f32 %v469, 0.0
    %v625 = vmax.f32 %v278, 0.0
    %v626 = vmax.f32 %v280, 0.0
    %v627 = vmax.f32 %v471, 0.0
    %v628 = vmax.f32 %v473, 0.0
    %v629 = vmax.f32 %v284, 0.0
    %v630 = vmax.f32 %v286, 0.0
    %v631 = vmax.f32 %v477, 0.0
    %v632 = vmax.f32 %v479, 0.0
    %v633 = vmax.f32 %v288, 0.0
    %v634 = vmax.f32 %v290, 0.0
    %v635 = vmax.f32 %v481, 0.0
    %v636 = vmax.f32 %v483, 0.0
    %v637 = vmax.f32 %v294, 0.0
    %v638 = vmax.f32 %v296, 0.0
    %v639 = vmax.f32 %v487, 0.0
    %v640 = vmax.f32 %v489, 0.0
    %v641 = vmax.f32 %v298, 0.0
    %v642 = vmax.f32 %v300, 0.0
    %v643 = vmax.f32 %v491, 0.0
    %v644 = vmax.f32 %v493, 0.0
    %v645 = vmax.f32 %v304, 0.0
    %v646 = vmax.f32 %v306, 0.0
    %v647 = vmax.f32 %v497, 0.0
    %v648 = vmax.f32 %v499, 0.0
    %v649 = vmax.f32 %v308, 0.0
    %v650 = vmax.f32 %v310, 0.0
    %v651 = vmax.f32 %v501, 0.0
    %v652 = vmax.f32 %v503, 0.0
    %v653 = vmax.f32 %v314, 0.0
    %v654 = vmax.f32 %v316, 0.0
    %v655 = vmax.f32 %v507, 0.0
    %v656 = vmax.f32 %v509, 0.0
    %v657 = vmax.f32 %v318, 0.0
    %v658 = vmax.f32 %v320, 0.0
    %v659 = vmax.f32 %v511, 0.0
    %v660 = vmax.f32 %v513, 0.0
    %v661 = vmax.f32 %v324, 0.0
    %v662 = vmax.f32 %v326, 0.0
    %v663 = vmax.f32 %v517, 0.0
    %v664 = vmax.f32 %v519, 0.0
    %v665 = vmax.f32 %v328, 0.0
    %v666 = vmax.f32 %v330, 0.0
    %v667 = vmax.f32 %v521, 0.0
    %v668 = vmax.f32 %v523, 0.0
    %v669 = vmax.f32 %v334, 0.0
    %v670 = vmax.f32 %v336, 0.0
    %v671 = vmax.f32 %v527, 0.0
    %v672 = vmax.f32 %v529, 0.0
    %v673 = vmax.f32 %v338, 0.0
    %v674 = vmax.f32 %v340, 0.0
    %v675 = vmax.f32 %v531, 0.0
    %v676 = vmax.f32 %v533, 0.0
    %v677 = vmax.f32 %v344, 0.0
    %v678 = vmax.f32 %v346, 0.0
    %v679 = vmax.f32 %v537, 0.0
    %v680 = vmax.f32 %v539, 0.0
    %v681 = vmax.f32 %v348, 0.0
    %v682 = vmax.f32 %v350, 0.0
    %v683 = vmax.f32 %v541, 0.0
    %v684 = vmax.f32 %v543, 0.0
    %v685 = vmax.f32 %v354, 0.0
    %v686 = vmax.f32 %v356, 0.0
    %v687 = vmax.f32 %v547, 0.0
    %v688 = vmax.f32 %v549, 0.0
    %v689 = vmax.f32 %v358, 0.0
    %v690 = vmax.f32 %v360, 0.0
    %v691 = vmax.f32 %v551, 0.0
    %v692 = vmax.f32 %v553, 0.0
    %v693 = vmax.f32 %v364, 0.0
    %v694 = vmax.f32 %v366, 0.0
    %v695 = vmax.f32 %v557, 0.0
    %v696 = vmax.f32 %v559, 0.0
    %v697 = vmax.f32 %v368, 0.0
    %v698 = vmax.f32 %v370, 0.0
    %v699 = vmax.f32 %v561, 0.0
    %v700 = vmax.f32 %v563, 0.0
    %v701 = vmax.f32 %v374, 0.0
    %v702 = vmax.f32 %v376, 0.0
    %v703 = vmax.f32 %v567, 0.0
    %v704 = vmax.f32 %v569, 0.0
    %v705 = vmax.f32 %v378, 0.0
    %v706 = vmax.f32 %v380, 0.0
    %v707 = vmax.f32 %v571, 0.0
    %v708 = vmax.f32 %v573, 0.0
    %v709 = vmax.f32 %v384, 0.0
    %v710 = vmax.f32 %v386, 0.0
    %v711 = vmax.f32 %v577, 0.0
    %v712 = vmax.f32 %v579, 0.0
    %v713 = vmax.f32 %v388, 0.0
    %v714 = vmax.f32 %v390, 0.0
    %v715 = vmax.f32 %v581, 0.0
    %v716 = vmax.f32 %v583, 0.0
    %v717 = vmax.f32 %v394, 0.0
    %v718 = vmax.f32 %v396, 0.0
    %v719 = vmax.f32 %v587, 0.0
    %v720 = vmax.f32 %v589, 0.0
    %v721 = vmax.f32 %v398, 0.0
    %v722 = vmax.f32 %v400, 0.0
    %v723 = vmax.f32 %v591, 0.0
    %v724 = vmax.f32 %v593, 0.0
    %v725 = vmax.f32 %v404, 0.0
    %v726 = vmax.f32 %v406, 0.0
    %v727 = vmax.f32 %v597, 0.0
    %v728 = vmax.f32 %v599, 0.0
    %v729 = vmax.f32 %v408, 0.0
    %v730 = vmax.f32 %v410, 0.0
    %v731 = vmax.f32 %v601, 0.0
    %v732 = vmax.f32 %v603, 0.0
    %v733 = vpack.c.bf16 %v609, %v605
    %v734 = vpack.c.bf16 %v610, %v606
    %v735 = vpack.c.bf16 %v611, %v607
    %v736 = vpack.c.bf16 %v612, %v608
    %v737 = vpack.c.bf16 %v617, %v613
    %v738 = vpack.c.bf16 %v618, %v614
    %v739 = vpack.c.bf16 %v619, %v615
    %v740 = vpack.c.bf16 %v620, %v616
    %v741 = vpack.c.bf16 %v625, %v621
    %v742 = vpack.c.bf16 %v626, %v622
    %v743 = vpack.c.bf16 %v627, %v623
    %v744 = vpack.c.bf16 %v628, %v624
    %v745 = vpack.c.bf16 %v633, %v629
    %v746 = vpack.c.bf16 %v634, %v630
    %v747 = vpack.c.bf16 %v635, %v631
    %v748 = vpack.c.bf16 %v636, %v632
    %v749 = vpack.c.bf16 %v641, %v637
    %v750 = vpack.c.bf16 %v642, %v638
    %v751 = vpack.c.bf16 %v643, %v639
    %v752 = vpack.c.bf16 %v644, %v640
    %v753 = vpack.c.bf16 %v649, %v645
    %v754 = vpack.c.bf16 %v650, %v646
    %v755 = vpack.c.bf16 %v651, %v647
    %v756 = vpack.c.bf16 %v652, %v648
    %v757 = vpack.c.bf16 %v657, %v653
    %v758 = vpack.c.bf16 %v658, %v654
    %v759 = vpack.c.bf16 %v659, %v655
    %v760 = vpack.c.bf16 %v660, %v656
    %v761 = vpack.c.bf16 %v665, %v661
    %v762 = vpack.c.bf16 %v666, %v662
    %v763 = vpack.c.bf16 %v667, %v663
    %v764 = vpack.c.bf16 %v668, %v664
    %v765 = vpack.c.bf16 %v673, %v669
    %v766 = vpack.c.bf16 %v674, %v670
    %v767 = vpack.c.bf16 %v675, %v671
    %v768 = vpack.c.bf16 %v676, %v672
    %v769 = vpack.c.bf16 %v681, %v677
    %v770 = vpack.c.bf16 %v682, %v678
    %v771 = vpack.c.bf16 %v683, %v679
    %v772 = vpack.c.bf16 %v684, %v680
    %v773 = vpack.c.bf16 %v689, %v685
    %v774 = vpack.c.bf16 %v690, %v686
    %v775 = vpack.c.bf16 %v691, %v687
    %v776 = vpack.c.bf16 %v692, %v688
    %v777 = vpack.c.bf16 %v697, %v693
    %v778 = vpack.c.bf16 %v698, %v694
    %v779 = vpack.c.bf16 %v699, %v695
    %v780 = vpack.c.bf16 %v700, %v696
    %v781 = vpack.c.bf16 %v705, %v701
    %v782 = vpack.c.bf16 %v706, %v702
    %v783 = vpack.c.bf16 %v707, %v703
    %v784 = vpack.c.bf16 %v708, %v704
    %v785 = vpack.c.bf16 %v713, %v709
    %v786 = vpack.c.bf16 %v714, %v710
    %v787 = vpack.c.bf16 %v715, %v711
    %v788 = vpack.c.bf16 %v716, %v712
    %v789 = vpack.c.bf16 %v721, %v717
    %v790 = vpack.c.bf16 %v722, %v718
    %v791 = vpack.c.bf16 %v723, %v719
    %v792 = vpack.c.bf16 %v724, %v720
    %v793 = vpack.c.bf16 %v729, %v725
    %v794 = vpack.c.bf16 %v730, %v726
    %v795 = vpack.c.bf16 %v731, %v727
    %v796 = vpack.c.bf16 %v732, %v728
    %v797 = vld [vmem:[#allocation2] sm:$0xff]
    %v798 = vld [vmem:[#allocation2 + $0x8] sm:$0xf]
    %v799 = vld [vmem:[#allocation2 + $0xc] sm:$0xff]
    %v800 = vld [vmem:[#allocation2 + $0x14] sm:$0xf]
    %v801 = vld [vmem:[#allocation2 + $0x18] sm:$0xff]
    %v802 = vld [vmem:[#allocation2 + $0x20] sm:$0xf]
    %v803 = vld [vmem:[#allocation2 + $0x24] sm:$0xff]
    %v804 = vld [vmem:[#allocation2 + $0x2c] sm:$0xf]
    %v805 = vld [vmem:[#allocation2 + $0x30] sm:$0xff]
    %v806 = vld [vmem:[#allocation2 + $0x38] sm:$0xf]
    %v807 = vld [vmem:[#allocation2 + $0x3c] sm:$0xff]
    %v808 = vld [vmem:[#allocation2 + $0x44] sm:$0xf]
    %v809 = vld [vmem:[#allocation2 + $0x48] sm:$0xff]
    %v810 = vld [vmem:[#allocation2 + $0x50] sm:$0xf]
    %v811 = vld [vmem:[#allocation2 + $0x54] sm:$0xff]
    %v812 = vld [vmem:[#allocation2 + $0x5c] sm:$0xf]
    %v813 = vld [vmem:[#allocation2 + $0x60] sm:$0xff]
    %v814 = vld [vmem:[#allocation2 + $0x68] sm:$0xf]
    %v815 = vld [vmem:[#allocation2 + $0x6c] sm:$0xff]
    %v816 = vld [vmem:[#allocation2 + $0x74] sm:$0xf]
    %v817 = vld [vmem:[#allocation2 + $0x78] sm:$0xff]
    %v818 = vld [vmem:[#allocation2 + $0x80] sm:$0xf]
    %v819 = vld [vmem:[#allocation2 + $0x84] sm:$0xff]
    %v820 = vld [vmem:[#allocation2 + $0x8c] sm:$0xf]
    %v821 = vld [vmem:[#allocation2 + $0x90] sm:$0xff]
    %v822 = vld [vmem:[#allocation2 + $0x98] sm:$0xf]
    %v823 = vld [vmem:[#allocation2 + $0x9c] sm:$0xff]
    %v824 = vld [vmem:[#allocation2 + $0xa4] sm:$0xf]
    %v825 = vld [vmem:[#allocation2 + $0xa8] sm:$0xff]
    %v826 = vld [vmem:[#allocation2 + $0xb0] sm:$0xf]
    %v827 = vld [vmem:[#allocation2 + $0xb4] sm:$0xff]
    %v828 = vld [vmem:[#allocation2 + $0xbc] sm:$0xf]
    %v829 = vld [vmem:[#allocation2 + $0xc0] sm:$0xff]
    %v830 = vld [vmem:[#allocation2 + $0xc8] sm:$0xf]
    %v831 = vld [vmem:[#allocation2 + $0xcc] sm:$0xff]
    %v832 = vld [vmem:[#allocation2 + $0xd4] sm:$0xf]
    %v833 = vld [vmem:[#allocation2 + $0xd8] sm:$0xff]
    %v834 = vld [vmem:[#allocation2 + $0xe0] sm:$0xf]
    %v835 = vld [vmem:[#allocation2 + $0xe4] sm:$0xff]
    %v836 = vld [vmem:[#allocation2 + $0xec] sm:$0xf]
    %v837 = vld [vmem:[#allocation2 + $0xf0] sm:$0xff]
    %v838 = vld [vmem:[#allocation2 + $0xf8] sm:$0xf]
    %v839 = vld [vmem:[#allocation2 + $0xfc] sm:$0xff]
    %v840 = vld [vmem:[#allocation2 + $0x104] sm:$0xf]
    %v841 = vld [vmem:[#allocation2 + $0x108] sm:$0xff]
    %v842 = vld [vmem:[#allocation2 + $0x110] sm:$0xf]
    %v843 = vld [vmem:[#allocation2 + $0x114] sm:$0xff]
    %v844 = vld [vmem:[#allocation2 + $0x11c] sm:$0xf]
    %v845 = vld [vmem:[#allocation2 + $0x120] sm:$0xff]
    %v846 = vld [vmem:[#allocation2 + $0x128] sm:$0xf]
    %v847 = vld [vmem:[#allocation2 + $0x12c] sm:$0xff]
    %v848 = vld [vmem:[#allocation2 + $0x134] sm:$0xf]
    %v849 = vld [vmem:[#allocation2 + $0x138] sm:$0xff]
    %v850 = vld [vmem:[#allocation2 + $0x140] sm:$0xf]
    %v851 = vld [vmem:[#allocation2 + $0x144] sm:$0xff]
    %v852 = vld [vmem:[#allocation2 + $0x14c] sm:$0xf]
    %v853 = vld [vmem:[#allocation2 + $0x150] sm:$0xff]
    %v854 = vld [vmem:[#allocation2 + $0x158] sm:$0xf]
    %v855 = vld [vmem:[#allocation2 + $0x15c] sm:$0xff]
    %v856 = vld [vmem:[#allocation2 + $0x164] sm:$0xf]
    %v857 = vld [vmem:[#allocation2 + $0x168] sm:$0xff]
    %v858 = vld [vmem:[#allocation2 + $0x170] sm:$0xf]
    %v859 = vld [vmem:[#allocation2 + $0x174] sm:$0xff]
    %v860 = vld [vmem:[#allocation2 + $0x17c] sm:$0xf]
    %v861 = vld [vmem:[#allocation2 + $0x180] sm:$0xff]
    %v862 = vld [vmem:[#allocation2 + $0x188] sm:$0xf]
    %v863 = vld [vmem:[#allocation2 + $0x18c] sm:$0xff]
    %v864 = vld [vmem:[#allocation2 + $0x194] sm:$0xf]
    %v865 = vld [vmem:[#allocation2 + $0x198] sm:$0xff]
    %v866 = vld [vmem:[#allocation2 + $0x1a0] sm:$0xf]
    %v867 = vld [vmem:[#allocation2 + $0x1a4] sm:$0xff]
    %v868 = vld [vmem:[#allocation2 + $0x1ac] sm:$0xf]
    %v869 = vld [vmem:[#allocation2 + $0x1b0] sm:$0xff]
    %v870 = vld [vmem:[#allocation2 + $0x1b8] sm:$0xf]
    %v871 = vld [vmem:[#allocation2 + $0x1bc] sm:$0xff]
    %v872 = vld [vmem:[#allocation2 + $0x1c4] sm:$0xf]
    %v873 = vld [vmem:[#allocation2 + $0x1c8] sm:$0xff]
    %v874 = vld [vmem:[#allocation2 + $0x1d0] sm:$0xf]
    %v875 = vld [vmem:[#allocation2 + $0x1d4] sm:$0xff]
    %v876 = vld [vmem:[#allocation2 + $0x1dc] sm:$0xf]
    %v877 = vld [vmem:[#allocation2 + $0x1e0] sm:$0xff]
    %v878 = vld [vmem:[#allocation2 + $0x1e8] sm:$0xf]
    %v879 = vld [vmem:[#allocation2 + $0x1ec] sm:$0xff]
    %v880 = vld [vmem:[#allocation2 + $0x1f4] sm:$0xf]
    %v881 = vld [vmem:[#allocation2 + $0x1f8] sm:$0xff]
    %v882 = vld [vmem:[#allocation2 + $0x200] sm:$0xf]
    %v883 = vld [vmem:[#allocation2 + $0x204] sm:$0xff]
    %v884 = vld [vmem:[#allocation2 + $0x20c] sm:$0xf]
    %v885 = vld [vmem:[#allocation2 + $0x210] sm:$0xff]
    %v886 = vld [vmem:[#allocation2 + $0x218] sm:$0xf]
    %v887 = vld [vmem:[#allocation2 + $0x21c] sm:$0xff]
    %v888 = vld [vmem:[#allocation2 + $0x224] sm:$0xf]
    %v889 = vld [vmem:[#allocation2 + $0x228] sm:$0xff]
    %v890 = vld [vmem:[#allocation2 + $0x230] sm:$0xf]
    %v891 = vld [vmem:[#allocation2 + $0x234] sm:$0xff]
    %v892 = vld [vmem:[#allocation2 + $0x23c] sm:$0xf]
    %v893 = vld [vmem:[#allocation2 + $0x240] sm:$0xff]
    %v894 = vld [vmem:[#allocation2 + $0x248] sm:$0xf]
    %v895 = vld [vmem:[#allocation2 + $0x24c] sm:$0xff]
    %v896 = vld [vmem:[#allocation2 + $0x254] sm:$0xf]
    %v897 = vld [vmem:[#allocation2 + $0x258] sm:$0xff]
    %v898 = vld [vmem:[#allocation2 + $0x260] sm:$0xf]
    %v899 = vld [vmem:[#allocation2 + $0x264] sm:$0xff]
    %v900 = vld [vmem:[#allocation2 + $0x26c] sm:$0xf]
    %v901 = vld [vmem:[#allocation2 + $0x270] sm:$0xff]
    %v902 = vld [vmem:[#allocation2 + $0x278] sm:$0xf]
    %v903 = vld [vmem:[#allocation2 + $0x27c] sm:$0xff]
    %v904 = vld [vmem:[#allocation2 + $0x284] sm:$0xf]
    %v905 = vld [vmem:[#allocation2 + $0x288] sm:$0xff]
    %v906 = vld [vmem:[#allocation2 + $0x290] sm:$0xf]
    %v907 = vld [vmem:[#allocation2 + $0x294] sm:$0xff]
    %v908 = vld [vmem:[#allocation2 + $0x29c] sm:$0xf]
    %v909 = vld [vmem:[#allocation2 + $0x2a0] sm:$0xff]
    %v910 = vld [vmem:[#allocation2 + $0x2a8] sm:$0xf]
    %v911 = vld [vmem:[#allocation2 + $0x2ac] sm:$0xff]
    %v912 = vld [vmem:[#allocation2 + $0x2b4] sm:$0xf]
    %v913 = vld [vmem:[#allocation2 + $0x2b8] sm:$0xff]
    %v914 = vld [vmem:[#allocation2 + $0x2c0] sm:$0xf]
    %v915 = vld [vmem:[#allocation2 + $0x2c4] sm:$0xff]
    %v916 = vld [vmem:[#allocation2 + $0x2cc] sm:$0xf]
    %v917 = vld [vmem:[#allocation2 + $0x2d0] sm:$0xff]
    %v918 = vld [vmem:[#allocation2 + $0x2d8] sm:$0xf]
    %v919 = vld [vmem:[#allocation2 + $0x2dc] sm:$0xff]
    %v920 = vld [vmem:[#allocation2 + $0x2e4] sm:$0xf]
    %v921 = vld [vmem:[#allocation2 + $0x2e8] sm:$0xff]
    %v922 = vld [vmem:[#allocation2 + $0x2f0] sm:$0xf]
    %v923 = vld [vmem:[#allocation2 + $0x2f4] sm:$0xff]
    %v924 = vld [vmem:[#allocation2 + $0x2fc] sm:$0xf]
    %v925 = vld [vmem:[%s4] sm:$0x7]
    %v927 = vlaneseq
    %v928 = vshrl.u32 %v927, 7
    %v929 = vsub.s32 0, %v928
    %v930 = vrot.slane %v925, %v929
    %v931 = vlaneseq
    %v932 = vshrl.u32 %v931, 7
    %v933 = vsub.s32 1, %v932
    %v934 = vrot.slane %v925, %v933
    %v935 = vlaneseq
    %v936 = vshrl.u32 %v935, 7
    %v937 = vsub.s32 2, %v936
    %v938 = vrot.slane %v925, %v937
    %v1070 = vunpack.c.l.b16 %v797
    %v1071 = vunpack.c.h.b16 %v797
    %v1072 = vunpack.c.l.b16 %v798
    %v1073 = vunpack.c.l.b16 %v799
    %v1074 = vunpack.c.h.b16 %v799
    %v1075 = vunpack.c.l.b16 %v800
    %v1076 = vunpack.c.l.b16 %v801
    %v1077 = vunpack.c.h.b16 %v801
    %v1078 = vunpack.c.l.b16 %v802
    %v1079 = vunpack.c.l.b16 %v803
    %v1080 = vunpack.c.h.b16 %v803
    %v1081 = vunpack.c.l.b16 %v804
    %v1082 = vunpack.c.l.b16 %v805
    %v1083 = vunpack.c.h.b16 %v805
    %v1084 = vunpack.c.l.b16 %v806
    %v1085 = vunpack.c.l.b16 %v807
    %v1086 = vunpack.c.h.b16 %v807
    %v1087 = vunpack.c.l.b16 %v808
    %v1088 = vunpack.c.l.b16 %v809
    %v1089 = vunpack.c.h.b16 %v809
    %v1090 = vunpack.c.l.b16 %v810
    %v1091 = vunpack.c.l.b16 %v811
    %v1092 = vunpack.c.h.b16 %v811
    %v1093 = vunpack.c.l.b16 %v812
    %v1094 = vunpack.c.l.b16 %v813
    %v1095 = vunpack.c.h.b16 %v813
    %v1096 = vunpack.c.l.b16 %v814
    %v1097 = vunpack.c.l.b16 %v815
    %v1098 = vunpack.c.h.b16 %v815
    %v1099 = vunpack.c.l.b16 %v816
    %v1100 = vunpack.c.l.b16 %v817
    %v1101 = vunpack.c.h.b16 %v817
    %v1102 = vunpack.c.l.b16 %v818
    %v1103 = vunpack.c.l.b16 %v819
    %v1104 = vunpack.c.h.b16 %v819
    %v1105 = vunpack.c.l.b16 %v820
    %v1106 = vunpack.c.l.b16 %v821
    %v1107 = vunpack.c.h.b16 %v821
    %v1108 = vunpack.c.l.b16 %v822
    %v1109 = vunpack.c.l.b16 %v823
    %v1110 = vunpack.c.h.b16 %v823
    %v1111 = vunpack.c.l.b16 %v824
    %v1112 = vunpack.c.l.b16 %v825
    %v1113 = vunpack.c.h.b16 %v825
    %v1114 = vunpack.c.l.b16 %v826
    %v1115 = vunpack.c.l.b16 %v827
    %v1116 = vunpack.c.h.b16 %v827
    %v1117 = vunpack.c.l.b16 %v828
    %v1118 = vunpack.c.l.b16 %v829
    %v1119 = vunpack.c.h.b16 %v829
    %v1120 = vunpack.c.l.b16 %v830
    %v1121 = vunpack.c.l.b16 %v831
    %v1122 = vunpack.c.h.b16 %v831
    %v1123 = vunpack.c.l.b16 %v832
    %v1124 = vunpack.c.l.b16 %v833
    %v1125 = vunpack.c.h.b16 %v833
    %v1126 = vunpack.c.l.b16 %v834
    %v1127 = vunpack.c.l.b16 %v835
    %v1128 = vunpack.c.h.b16 %v835
    %v1129 = vunpack.c.l.b16 %v836
    %v1130 = vunpack.c.l.b16 %v837
    %v1131 = vunpack.c.h.b16 %v837
    %v1132 = vunpack.c.l.b16 %v838
    %v1133 = vunpack.c.l.b16 %v839
    %v1134 = vunpack.c.h.b16 %v839
    %v1135 = vunpack.c.l.b16 %v840
    %v1136 = vunpack.c.l.b16 %v841
    %v1137 = vunpack.c.h.b16 %v841
    %v1138 = vunpack.c.l.b16 %v842
    %v1139 = vunpack.c.l.b16 %v843
    %v1140 = vunpack.c.h.b16 %v843
    %v1141 = vunpack.c.l.b16 %v844
    %v1142 = vunpack.c.l.b16 %v845
    %v1143 = vunpack.c.h.b16 %v845
    %v1144 = vunpack.c.l.b16 %v846
    %v1145 = vunpack.c.l.b16 %v847
    %v1146 = vunpack.c.h.b16 %v847
    %v1147 = vunpack.c.l.b16 %v848
    %v1148 = vunpack.c.l.b16 %v849
    %v1149 = vunpack.c.h.b16 %v849
    %v1150 = vunpack.c.l.b16 %v850
    %v1151 = vunpack.c.l.b16 %v851
    %v1152 = vunpack.c.h.b16 %v851
    %v1153 = vunpack.c.l.b16 %v852
    %v1154 = vunpack.c.l.b16 %v853
    %v1155 = vunpack.c.h.b16 %v853
    %v1156 = vunpack.c.l.b16 %v854
    %v1157 = vunpack.c.l.b16 %v855
    %v1158 = vunpack.c.h.b16 %v855
    %v1159 = vunpack.c.l.b16 %v856
    %v1160 = vunpack.c.l.b16 %v857
    %v1161 = vunpack.c.h.b16 %v857
    %v1162 = vunpack.c.l.b16 %v858
    %v1163 = vunpack.c.l.b16 %v859
    %v1164 = vunpack.c.h.b16 %v859
    %v1165 = vunpack.c.l.b16 %v860
    %v1166 = vunpack.c.l.b16 %v861
    %v1167 = vunpack.c.h.b16 %v861
    %v1168 = vunpack.c.l.b16 %v862
    %v1169 = vunpack.c.l.b16 %v863
    %v1170 = vunpack.c.h.b16 %v863
    %v1171 = vunpack.c.l.b16 %v864
    %v1172 = vunpack.c.l.b16 %v865
    %v1173 = vunpack.c.h.b16 %v865
    %v1174 = vunpack.c.l.b16 %v866
    %v1175 = vunpack.c.l.b16 %v867
    %v1176 = vunpack.c.h.b16 %v867
    %v1177 = vunpack.c.l.b16 %v868
    %v1178 = vunpack.c.l.b16 %v869
    %v1179 = vunpack.c.h.b16 %v869
    %v1180 = vunpack.c.l.b16 %v870
    %v1181 = vunpack.c.l.b16 %v871
    %v1182 = vunpack.c.h.b16 %v871
    %v1183 = vunpack.c.l.b16 %v872
    %v1184 = vunpack.c.l.b16 %v873
    %v1185 = vunpack.c.h.b16 %v873
    %v1186 = vunpack.c.l.b16 %v874
    %v1187 = vunpack.c.l.b16 %v875
    %v1188 = vunpack.c.h.b16 %v875
    %v1189 = vunpack.c.l.b16 %v876
    %v1190 = vunpack.c.l.b16 %v877
    %v1191 = vunpack.c.h.b16 %v877
    %v1192 = vunpack.c.l.b16 %v878
    %v1193 = vunpack.c.l.b16 %v879
    %v1194 = vunpack.c.h.b16 %v879
    %v1195 = vunpack.c.l.b16 %v880
    %v1196 = vunpack.c.l.b16 %v881
    %v1197 = vunpack.c.h.b16 %v881
    %v1198 = vunpack.c.l.b16 %v882
    %v1199 = vunpack.c.l.b16 %v883
    %v1200 = vunpack.c.h.b16 %v883
    %v1201 = vunpack.c.l.b16 %v884
    %v1202 = vunpack.c.l.b16 %v885
    %v1203 = vunpack.c.h.b16 %v885
    %v1204 = vunpack.c.l.b16 %v886
    %v1205 = vunpack.c.l.b16 %v887
    %v1206 = vunpack.c.h.b16 %v887
    %v1207 = vunpack.c.l.b16 %v888
    %v1208 = vunpack.c.l.b16 %v889
    %v1209 = vunpack.c.h.b16 %v889
    %v1210 = vunpack.c.l.b16 %v890
    %v1211 = vunpack.c.l.b16 %v891
    %v1212 = vunpack.c.h.b16 %v891
    %v1213 = vunpack.c.l.b16 %v892
    %v1214 = vunpack.c.l.b16 %v893
    %v1215 = vunpack.c.h.b16 %v893
    %v1216 = vunpack.c.l.b16 %v894
    %v1217 = vunpack.c.l.b16 %v895
    %v1218 = vunpack.c.h.b16 %v895
    %v1219 = vunpack.c.l.b16 %v896
    %v1220 = vunpack.c.l.b16 %v897
    %v1221 = vunpack.c.h.b16 %v897
    %v1222 = vunpack.c.l.b16 %v898
    %v1223 = vunpack.c.l.b16 %v899
    %v1224 = vunpack.c.h.b16 %v899
    %v1225 = vunpack.c.l.b16 %v900
    %v1226 = vunpack.c.l.b16 %v901
    %v1227 = vunpack.c.h.b16 %v901
    %v1228 = vunpack.c.l.b16 %v902
    %v1229 = vunpack.c.l.b16 %v903
    %v1230 = vunpack.c.h.b16 %v903
    %v1231 = vunpack.c.l.b16 %v904
    %v1232 = vunpack.c.l.b16 %v905
    %v1233 = vunpack.c.h.b16 %v905
    %v1234 = vunpack.c.l.b16 %v906
    %v1235 = vunpack.c.l.b16 %v907
    %v1236 = vunpack.c.h.b16 %v907
    %v1237 = vunpack.c.l.b16 %v908
    %v1238 = vunpack.c.l.b16 %v909
    %v1239 = vunpack.c.h.b16 %v909
    %v1240 = vunpack.c.l.b16 %v910
    %v1241 = vunpack.c.l.b16 %v911
    %v1242 = vunpack.c.h.b16 %v911
    %v1243 = vunpack.c.l.b16 %v912
    %v1244 = vunpack.c.l.b16 %v913
    %v1245 = vunpack.c.h.b16 %v913
    %v1246 = vunpack.c.l.b16 %v914
    %v1247 = vunpack.c.l.b16 %v915
    %v1248 = vunpack.c.h.b16 %v915
    %v1249 = vunpack.c.l.b16 %v916
    %v1250 = vunpack.c.l.b16 %v917
    %v1251 = vunpack.c.h.b16 %v917
    %v1252 = vunpack.c.l.b16 %v918
    %v1253 = vunpack.c.l.b16 %v919
    %v1254 = vunpack.c.h.b16 %v919
    %v1255 = vunpack.c.l.b16 %v920
    %v1256 = vunpack.c.l.b16 %v921
    %v1257 = vunpack.c.h.b16 %v921
    %v1258 = vunpack.c.l.b16 %v922
    %v1259 = vunpack.c.l.b16 %v923
    %v1260 = vunpack.c.h.b16 %v923
    %v1261 = vunpack.c.l.b16 %v924
    %v1262 = vpack.c.b16 %v1073, %v1070
    %v1263 = vpack.c.b16 %v1074, %v1071
    %v1264 = vpack.c.b16 %v1075, %v1072
    %v1265 = vpack.c.b16 %v1079, %v1076
    %v1266 = vpack.c.b16 %v1080, %v1077
    %v1267 = vpack.c.b16 %v1081, %v1078
    %v1268 = vpack.c.b16 %v1085, %v1082
    %v1269 = vpack.c.b16 %v1086, %v1083
    %v1270 = vpack.c.b16 %v1087, %v1084
    %v1271 = vpack.c.b16 %v1091, %v1088
    %v1272 = vpack.c.b16 %v1092, %v1089
    %v1273 = vpack.c.b16 %v1093, %v1090
    %v1274 = vpack.c.b16 %v1097, %v1094
    %v1275 = vpack.c.b16 %v1098, %v1095
    %v1276 = vpack.c.b16 %v1099, %v1096
    %v1277 = vpack.c.b16 %v1103, %v1100
    %v1278 = vpack.c.b16 %v1104, %v1101
    %v1279 = vpack.c.b16 %v1105, %v1102
    %v1280 = vpack.c.b16 %v1109, %v1106
    %v1281 = vpack.c.b16 %v1110, %v1107
    %v1282 = vpack.c.b16 %v1111, %v1108
    %v1283 = vpack.c.b16 %v1115, %v1112
    %v1284 = vpack.c.b16 %v1116, %v1113
    %v1285 = vpack.c.b16 %v1117, %v1114
    %v1286 = vpack.c.b16 %v1121, %v1118
    %v1287 = vpack.c.b16 %v1122, %v1119
    %v1288 = vpack.c.b16 %v1123, %v1120
    %v1289 = vpack.c.b16 %v1127, %v1124
    %v1290 = vpack.c.b16 %v1128, %v1125
    %v1291 = vpack.c.b16 %v1129, %v1126
    %v1292 = vpack.c.b16 %v1133, %v1130
    %v1293 = vpack.c.b16 %v1134, %v1131
    %v1294 = vpack.c.b16 %v1135, %v1132
    %v1295 = vpack.c.b16 %v1139, %v1136
    %v1296 = vpack.c.b16 %v1140, %v1137
    %v1297 = vpack.c.b16 %v1141, %v1138
    %v1298 = vpack.c.b16 %v1145, %v1142
    %v1299 = vpack.c.b16 %v1146, %v1143
    %v1300 = vpack.c.b16 %v1147, %v1144
    %v1301 = vpack.c.b16 %v1151, %v1148
    %v1302 = vpack.c.b16 %v1152, %v1149
    %v1303 = vpack.c.b16 %v1153, %v1150
    %v1304 = vpack.c.b16 %v1157, %v1154
    %v1305 = vpack.c.b16 %v1158, %v1155
    %v1306 = vpack.c.b16 %v1159, %v1156
    %v1307 = vpack.c.b16 %v1163, %v1160
    %v1308 = vpack.c.b16 %v1164, %v1161
    %v1309 = vpack.c.b16 %v1165, %v1162
    %v1310 = vpack.c.b16 %v1169, %v1166
    %v1311 = vpack.c.b16 %v1170, %v1167
    %v1312 = vpack.c.b16 %v1171, %v1168
    %v1313 = vpack.c.b16 %v1175, %v1172
    %v1314 = vpack.c.b16 %v1176, %v1173
    %v1315 = vpack.c.b16 %v1177, %v1174
    %v1316 = vpack.c.b16 %v1181, %v1178
    %v1317 = vpack.c.b16 %v1182, %v1179
    %v1318 = vpack.c.b16 %v1183, %v1180
    %v1319 = vpack.c.b16 %v1187, %v1184
    %v1320 = vpack.c.b16 %v1188, %v1185
    %v1321 = vpack.c.b16 %v1189, %v1186
    %v1322 = vpack.c.b16 %v1193, %v1190
    %v1323 = vpack.c.b16 %v1194, %v1191
    %v1324 = vpack.c.b16 %v1195, %v1192
    %v1325 = vpack.c.b16 %v1199, %v1196
    %v1326 = vpack.c.b16 %v1200, %v1197
    %v1327 = vpack.c.b16 %v1201, %v1198
    %v1328 = vpack.c.b16 %v1205, %v1202
    %v1329 = vpack.c.b16 %v1206, %v1203
    %v1330 = vpack.c.b16 %v1207, %v1204
    %v1331 = vpack.c.b16 %v1211, %v1208
    %v1332 = vpack.c.b16 %v1212, %v1209
    %v1333 = vpack.c.b16 %v1213, %v1210
    %v1334 = vpack.c.b16 %v1217, %v1214
    %v1335 = vpack.c.b16 %v1218, %v1215
    %v1336 = vpack.c.b16 %v1219, %v1216
    %v1337 = vpack.c.b16 %v1223, %v1220
    %v1338 = vpack.c.b16 %v1224, %v1221
    %v1339 = vpack.c.b16 %v1225, %v1222
    %v1340 = vpack.c.b16 %v1229, %v1226
    %v1341 = vpack.c.b16 %v1230, %v1227
    %v1342 = vpack.c.b16 %v1231, %v1228
    %v1343 = vpack.c.b16 %v1235, %v1232
    %v1344 = vpack.c.b16 %v1236, %v1233
    %v1345 = vpack.c.b16 %v1237, %v1234
    %v1346 = vpack.c.b16 %v1241, %v1238
    %v1347 = vpack.c.b16 %v1242, %v1239
    %v1348 = vpack.c.b16 %v1243, %v1240
    %v1349 = vpack.c.b16 %v1247, %v1244
    %v1350 = vpack.c.b16 %v1248, %v1245
    %v1351 = vpack.c.b16 %v1249, %v1246
    %v1352 = vpack.c.b16 %v1253, %v1250
    %v1353 = vpack.c.b16 %v1254, %v1251
    %v1354 = vpack.c.b16 %v1255, %v1252
    %v1355 = vpack.c.b16 %v1259, %v1256
    %v1356 = vpack.c.b16 %v1260, %v1257
    %v1357 = vpack.c.b16 %v1261, %v1258
    %1454 = vmatprep.subr.bf16.mxu0 %v1263
    %1455 = vmatpush1.bf16.msra.mxu0 %v1262
    %1456 = vmatprep.subr.bf16.mxu0 %v1266
    %1457 = vmatpush1.bf16.msra.mxu0 %v1265
    %1458 = vmatprep.subr.bf16.mxu0 %v1269
    %1459 = vmatpush1.bf16.msra.mxu0 %v1268
    %1460 = vmatprep.subr.bf16.mxu0 %v1272
    %1461 = vmatpush1.bf16.msra.mxu0 %v1271
    %1462 = vmatprep.subr.bf16.mxu0 %v1275
    %1463 = vmatpush1.bf16.msra.mxu0 %v1274
    %1464 = vmatprep.subr.bf16.mxu0 %v1278
    %1465 = vmatpush1.bf16.msra.mxu0 %v1277
    %1466 = vmatprep.subr.bf16.mxu0 %v1281
    %1467 = vmatpush1.bf16.msra.mxu0 %v1280
    %1468 = vmatprep.subr.bf16.mxu0 %v1284
    %1469 = vmatpush1.bf16.msra.mxu0 %v1283
    %1470 = vmatprep.subr.bf16.mxu0 %v1287
    %1471 = vmatpush1.bf16.msra.mxu0 %v1286
    %1472 = vmatprep.subr.bf16.mxu0 %v1290
    %1473 = vmatpush1.bf16.msra.mxu0 %v1289
    %1474 = vmatprep.subr.bf16.mxu0 %v1293
    %1475 = vmatpush1.bf16.msra.mxu0 %v1292
    %1476 = vmatprep.subr.bf16.mxu0 %v1296
    %1477 = vmatpush1.bf16.msra.mxu0 %v1295
    %1478 = vmatprep.subr.bf16.mxu0 %v1299
    %1479 = vmatpush1.bf16.msra.mxu0 %v1298
    %1480 = vmatprep.subr.bf16.mxu0 %v1302
    %1481 = vmatpush1.bf16.msra.mxu0 %v1301
    %1482 = vmatprep.subr.bf16.mxu0 %v1305
    %1483 = vmatpush1.bf16.msra.mxu0 %v1304
    %1484 = vmatprep.subr.bf16.mxu0 %v1308
    %1485 = vmatpush1.bf16.msra.mxu0 %v1307
    %1486 = vmatprep.mubr.bf16.mxu0 %v734
    %1487 = vmatmul.mubr.bf16.gmra.mrb[0].mxu0 %v733
    %v1488 = vpop.f32.mrb[0].mxu0
    %v1489 = vadd.f32 %v930, %v1488
    %v1490 = vpop.f32.mrb[0].mxu0
    %v1491 = vadd.f32 %v934, %v1490
    %v1492 = vpop.f32.mrb[0].mxu0
    %v1493 = vadd.f32 %v930, %v1492
    %v1494 = vpop.f32.mrb[0].mxu0
    %v1495 = vadd.f32 %v934, %v1494
    %1496 = vmatprep.mubr.bf16.mxu0 %v738
    %1497 = vmatmul.mubr.bf16.gmra.mrb[0].mxu0 %v737
    %v1498 = vpop.f32.mrb[0].mxu0
    %v1499 = vadd.f32 %v930, %v1498
    %v1500 = vpop.f32.mrb[0].mxu0
    %v1501 = vadd.f32 %v934, %v1500
    %v1502 = vpop.f32.mrb[0].mxu0
    %v1503 = vadd.f32 %v930, %v1502
    %v1504 = vpop.f32.mrb[0].mxu0
    %v1505 = vadd.f32 %v934, %v1504
    %1506 = vmatprep.mubr.bf16.mxu0 %v742
    %1507 = vmatmul.mubr.bf16.gmra.mrb[0].mxu0 %v741
    %v1508 = vpop.f32.mrb[0].mxu0
    %v1509 = vadd.f32 %v930, %v1508
    %v1510 = vpop.f32.mrb[0].mxu0
    %v1511 = vadd.f32 %v934, %v1510
    %v1512 = vpop.f32.mrb[0].mxu0
    %v1513 = vadd.f32 %v930, %v1512
    %v1514 = vpop.f32.mrb[0].mxu0
    %v1515 = vadd.f32 %v934, %v1514
    %1516 = vmatprep.mubr.bf16.mxu0 %v746
    %1517 = vmatmul.mubr.bf16.gmra.mrb[0].mxu0 %v745
    %v1518 = vpop.f32.mrb[0].mxu0
    %v1519 = vadd.f32 %v930, %v1518
    %v1520 = vpop.f32.mrb[0].mxu0
    %v1521 = vadd.f32 %v934, %v1520
    %v1522 = vpop.f32.mrb[0].mxu0
    %v1523 = vadd.f32 %v930, %v1522
    %v1524 = vpop.f32.mrb[0].mxu0
    %v1525 = vadd.f32 %v934, %v1524
    %1526 = vmatprep.mubr.bf16.mxu0 %v750
    %1527 = vmatmul.mubr.bf16.gmra.mrb[0].mxu0 %v749
    %v1528 = vpop.f32.mrb[0].mxu0
    %v1529 = vadd.f32 %v930, %v1528
    %v1530 = vpop.f32.mrb[0].mxu0
    %v1531 = vadd.f32 %v934, %v1530
    %v1532 = vpop.f32.mrb[0].mxu0
    %v1533 = vadd.f32 %v930, %v1532
    %v1534 = vpop.f32.mrb[0].mxu0
    %v1535 = vadd.f32 %v934, %v1534
    %1536 = vmatprep.mubr.bf16.mxu0 %v754
    %1537 = vmatmul.mubr.bf16.gmra.mrb[0].mxu0 %v753
    %v1538 = vpop.f32.mrb[0].mxu0
    %v1539 = vadd.f32 %v930, %v1538
    %v1540 = vpop.f32.mrb[0].mxu0
    %v1541 = vadd.f32 %v934, %v1540
    %v1542 = vpop.f32.mrb[0].mxu0
    %v1543 = vadd.f32 %v930, %v1542
    %v1544 = vpop.f32.mrb[0].mxu0
    %v1545 = vadd.f32 %v934, %v1544
    %1546 = vmatprep.mubr.bf16.mxu0 %v758
    %1547 = vmatmul.mubr.bf16.gmra.mrb[0].mxu0 %v757
    %v1548 = vpop.f32.mrb[0].mxu0
    %v1549 = vadd.f32 %v930, %v1548
    %v1550 = vpop.f32.mrb[0].mxu0
    %v1551 = vadd.f32 %v934, %v1550
    %v1552 = vpop.f32.mrb[0].mxu0
    %v1553 = vadd.f32 %v930, %v1552
    %v1554 = vpop.f32.mrb[0].mxu0
    %v1555 = vadd.f32 %v934, %v1554
    %1556 = vmatprep.mubr.bf16.mxu0 %v762
    %1557 = vmatmul.mubr.bf16.gmra.mrb[0].mxu0 %v761
    %v1558 = vpop.f32.mrb[0].mxu0
    %v1559 = vadd.f32 %v930, %v1558
    %v1560 = vpop.f32.mrb[0].mxu0
    %v1561 = vadd.f32 %v934, %v1560
    %v1562 = vpop.f32.mrb[0].mxu0
    %v1563 = vadd.f32 %v930, %v1562
    %v1564 = vpop.f32.mrb[0].mxu0
    %v1565 = vadd.f32 %v934, %v1564
    %1566 = vmatprep.mubr.bf16.mxu0 %v766
    %1567 = vmatmul.mubr.bf16.gmra.mrb[0].mxu0 %v765
    %v1568 = vpop.f32.mrb[0].mxu0
    %v1569 = vadd.f32 %v930, %v1568
    %v1570 = vpop.f32.mrb[0].mxu0
    %v1571 = vadd.f32 %v934, %v1570
    %v1572 = vpop.f32.mrb[0].mxu0
    %v1573 = vadd.f32 %v930, %v1572
    %v1574 = vpop.f32.mrb[0].mxu0
    %v1575 = vadd.f32 %v934, %v1574
    %1576 = vmatprep.mubr.bf16.mxu0 %v770
    %1577 = vmatmul.mubr.bf16.gmra.mrb[0].mxu0 %v769
    %v1578 = vpop.f32.mrb[0].mxu0
    %v1579 = vadd.f32 %v930, %v1578
    %v1580 = vpop.f32.mrb[0].mxu0
    %v1581 = vadd.f32 %v934, %v1580
    %v1582 = vpop.f32.mrb[0].mxu0
    %v1583 = vadd.f32 %v930, %v1582
    %v1584 = vpop.f32.mrb[0].mxu0
    %v1585 = vadd.f32 %v934, %v1584
    %1586 = vmatprep.mubr.bf16.mxu0 %v774
    %1587 = vmatmul.mubr.bf16.gmra.mrb[0].mxu0 %v773
    %v1588 = vpop.f32.mrb[0].mxu0
    %v1589 = vadd.f32 %v930, %v1588
    %v1590 = vpop.f32.mrb[0].mxu0
    %v1591 = vadd.f32 %v934, %v1590
    %v1592 = vpop.f32.mrb[0].mxu0
    %v1593 = vadd.f32 %v930, %v1592
    %v1594 = vpop.f32.mrb[0].mxu0
    %v1595 = vadd.f32 %v934, %v1594
    %1596 = vmatprep.mubr.bf16.mxu0 %v778
    %1597 = vmatmul.mubr.bf16.gmra.mrb[0].mxu0 %v777
    %v1598 = vpop.f32.mrb[0].mxu0
    %v1599 = vadd.f32 %v930, %v1598
    %v1600 = vpop.f32.mrb[0].mxu0
    %v1601 = vadd.f32 %v934, %v1600
    %v1602 = vpop.f32.mrb[0].mxu0
    %v1603 = vadd.f32 %v930, %v1602
    %v1604 = vpop.f32.mrb[0].mxu0
    %v1605 = vadd.f32 %v934, %v1604
    %1606 = vmatprep.mubr.bf16.mxu0 %v782
    %1607 = vmatmul.mubr.bf16.gmra.mrb[0].mxu0 %v781
    %v1608 = vpop.f32.mrb[0].mxu0
    %v1609 = vadd.f32 %v930, %v1608
    %v1610 = vpop.f32.mrb[0].mxu0
    %v1611 = vadd.f32 %v934, %v1610
    %v1612 = vpop.f32.mrb[0].mxu0
    %v1613 = vadd.f32 %v930, %v1612
    %v1614 = vpop.f32.mrb[0].mxu0
    %v1615 = vadd.f32 %v934, %v1614
    %1616 = vmatprep.mubr.bf16.mxu0 %v786
    %1617 = vmatmul.mubr.bf16.gmra.mrb[0].mxu0 %v785
    %v1618 = vpop.f32.mrb[0].mxu0
    %v1619 = vadd.f32 %v930, %v1618
    %v1620 = vpop.f32.mrb[0].mxu0
    %v1621 = vadd.f32 %v934, %v1620
    %v1622 = vpop.f32.mrb[0].mxu0
    %v1623 = vadd.f32 %v930, %v1622
    %v1624 = vpop.f32.mrb[0].mxu0
    %v1625 = vadd.f32 %v934, %v1624
    %1626 = vmatprep.mubr.bf16.mxu0 %v790
    %1627 = vmatmul.mubr.bf16.gmra.mrb[0].mxu0 %v789
    %v1628 = vpop.f32.mrb[0].mxu0
    %v1629 = vadd.f32 %v930, %v1628
    %v1630 = vpop.f32.mrb[0].mxu0
    %v1631 = vadd.f32 %v934, %v1630
    %v1632 = vpop.f32.mrb[0].mxu0
    %v1633 = vadd.f32 %v930, %v1632
    %v1634 = vpop.f32.mrb[0].mxu0
    %v1635 = vadd.f32 %v934, %v1634
    %1636 = vmatprep.mubr.bf16.mxu0 %v794
    %1637 = vmatmul.mubr.bf16.gmra.mrb[0].mxu0 %v793
    %v1638 = vpop.f32.mrb[0].mxu0
    %v1639 = vadd.f32 %v930, %v1638
    %v1640 = vpop.f32.mrb[0].mxu0
    %v1641 = vadd.f32 %v934, %v1640
    %v1642 = vpop.f32.mrb[0].mxu0
    %v1643 = vadd.f32 %v930, %v1642
    %v1644 = vpop.f32.mrb[0].mxu0
    %v1645 = vadd.f32 %v934, %v1644
    %1646 = vdwg.mxu0
    %1647 = vmatprep.subr.bf16.mxu0 %v1311
    %1648 = vmatpush1.bf16.msra.mxu0 %v1310
    %1649 = vmatprep.subr.bf16.mxu0 %v1314
    %1650 = vmatpush1.bf16.msra.mxu0 %v1313
    %1651 = vmatprep.subr.bf16.mxu0 %v1317
    %1652 = vmatpush1.bf16.msra.mxu0 %v1316
    %1653 = vmatprep.subr.bf16.mxu0 %v1320
    %1654 = vmatpush1.bf16.msra.mxu0 %v1319
    %1655 = vmatprep.subr.bf16.mxu0 %v1323
    %1656 = vmatpush1.bf16.msra.mxu0 %v1322
    %1657 = vmatprep.subr.bf16.mxu0 %v1326
    %1658 = vmatpush1.bf16.msra.mxu0 %v1325
    %1659 = vmatprep.subr.bf16.mxu0 %v1329
    %1660 = vmatpush1.bf16.msra.mxu0 %v1328
    %1661 = vmatprep.subr.bf16.mxu0 %v1332
    %1662 = vmatpush1.bf16.msra.mxu0 %v1331
    %1663 = vmatprep.subr.bf16.mxu0 %v1335
    %1664 = vmatpush1.bf16.msra.mxu0 %v1334
    %1665 = vmatprep.subr.bf16.mxu0 %v1338
    %1666 = vmatpush1.bf16.msra.mxu0 %v1337
    %1667 = vmatprep.subr.bf16.mxu0 %v1341
    %1668 = vmatpush1.bf16.msra.mxu0 %v1340
    %1669 = vmatprep.subr.bf16.mxu0 %v1344
    %1670 = vmatpush1.bf16.msra.mxu0 %v1343
    %1671 = vmatprep.subr.bf16.mxu0 %v1347
    %1672 = vmatpush1.bf16.msra.mxu0 %v1346
    %1673 = vmatprep.subr.bf16.mxu0 %v1350
    %1674 = vmatpush1.bf16.msra.mxu0 %v1349
    %1675 = vmatprep.subr.bf16.mxu0 %v1353
    %1676 = vmatpush1.bf16.msra.mxu0 %v1352
    %1677 = vmatprep.subr.bf16.mxu0 %v1356
    %1678 = vmatpush1.bf16.msra.mxu0 %v1355
    %1679 = vmatprep.mubr.bf16.mxu0 %v736
    %1680 = vmatmul.mubr.bf16.gmra.mrb[0].mxu0 %v735
    %v1681 = vpop.f32.mrb[0].mxu0
    %v1682 = vadd.f32 %v1489, %v1681
    %v1683 = vpop.f32.mrb[0].mxu0
    %v1684 = vadd.f32 %v1491, %v1683
    %v1685 = vpop.f32.mrb[0].mxu0
    %v1686 = vadd.f32 %v1493, %v1685
    %v1687 = vpop.f32.mrb[0].mxu0
    %v1688 = vadd.f32 %v1495, %v1687
    %1689 = vmatprep.mubr.bf16.mxu0 %v740
    %1690 = vmatmul.mubr.bf16.gmra.mrb[0].mxu0 %v739
    %v1691 = vpop.f32.mrb[0].mxu0
    %v1692 = vadd.f32 %v1499, %v1691
    %v1693 = vpop.f32.mrb[0].mxu0
    %v1694 = vadd.f32 %v1501, %v1693
    %v1695 = vpop.f32.mrb[0].mxu0
    %v1696 = vadd.f32 %v1503, %v1695
    %v1697 = vpop.f32.mrb[0].mxu0
    %v1698 = vadd.f32 %v1505, %v1697
    %1699 = vmatprep.mubr.bf16.mxu0 %v744
    %1700 = vmatmul.mubr.bf16.gmra.mrb[0].mxu0 %v743
    %v1701 = vpop.f32.mrb[0].mxu0
    %v1702 = vadd.f32 %v1509, %v1701
    %v1703 = vpop.f32.mrb[0].mxu0
    %v1704 = vadd.f32 %v1511, %v1703
    %v1705 = vpop.f32.mrb[0].mxu0
    %v1706 = vadd.f32 %v1513, %v1705
    %v1707 = vpop.f32.mrb[0].mxu0
    %v1708 = vadd.f32 %v1515, %v1707
    %1709 = vmatprep.mubr.bf16.mxu0 %v748
    %1710 = vmatmul.mubr.bf16.gmra.mrb[0].mxu0 %v747
    %v1711 = vpop.f32.mrb[0].mxu0
    %v1712 = vadd.f32 %v1519, %v1711
    %v1713 = vpop.f32.mrb[0].mxu0
    %v1714 = vadd.f32 %v1521, %v1713
    %v1715 = vpop.f32.mrb[0].mxu0
    %v1716 = vadd.f32 %v1523, %v1715
    %v1717 = vpop.f32.mrb[0].mxu0
    %v1718 = vadd.f32 %v1525, %v1717
    %1719 = vmatprep.mubr.bf16.mxu0 %v752
    %1720 = vmatmul.mubr.bf16.gmra.mrb[0].mxu0 %v751
    %v1721 = vpop.f32.mrb[0].mxu0
    %v1722 = vadd.f32 %v1529, %v1721
    %v1723 = vpop.f32.mrb[0].mxu0
    %v1724 = vadd.f32 %v1531, %v1723
    %v1725 = vpop.f32.mrb[0].mxu0
    %v1726 = vadd.f32 %v1533, %v1725
    %v1727 = vpop.f32.mrb[0].mxu0
    %v1728 = vadd.f32 %v1535, %v1727
    %1729 = vmatprep.mubr.bf16.mxu0 %v756
    %1730 = vmatmul.mubr.bf16.gmra.mrb[0].mxu0 %v755
    %v1731 = vpop.f32.mrb[0].mxu0
    %v1732 = vadd.f32 %v1539, %v1731
    %v1733 = vpop.f32.mrb[0].mxu0
    %v1734 = vadd.f32 %v1541, %v1733
    %v1735 = vpop.f32.mrb[0].mxu0
    %v1736 = vadd.f32 %v1543, %v1735
    %v1737 = vpop.f32.mrb[0].mxu0
    %v1738 = vadd.f32 %v1545, %v1737
    %1739 = vmatprep.mubr.bf16.mxu0 %v760
    %1740 = vmatmul.mubr.bf16.gmra.mrb[0].mxu0 %v759
    %v1741 = vpop.f32.mrb[0].mxu0
    %v1742 = vadd.f32 %v1549, %v1741
    %v1743 = vpop.f32.mrb[0].mxu0
    %v1744 = vadd.f32 %v1551, %v1743
    %v1745 = vpop.f32.mrb[0].mxu0
    %v1746 = vadd.f32 %v1553, %v1745
    %v1747 = vpop.f32.mrb[0].mxu0
    %v1748 = vadd.f32 %v1555, %v1747
    %1749 = vmatprep.mubr.bf16.mxu0 %v764
    %1750 = vmatmul.mubr.bf16.gmra.mrb[0].mxu0 %v763
    %v1751 = vpop.f32.mrb[0].mxu0
    %v1752 = vadd.f32 %v1559, %v1751
    %v1753 = vpop.f32.mrb[0].mxu0
    %v1754 = vadd.f32 %v1561, %v1753
    %v1755 = vpop.f32.mrb[0].mxu0
    %v1756 = vadd.f32 %v1563, %v1755
    %v1757 = vpop.f32.mrb[0].mxu0
    %v1758 = vadd.f32 %v1565, %v1757
    %1759 = vmatprep.mubr.bf16.mxu0 %v768
    %1760 = vmatmul.mubr.bf16.gmra.mrb[0].mxu0 %v767
    %v1761 = vpop.f32.mrb[0].mxu0
    %v1762 = vadd.f32 %v1569, %v1761
    %v1763 = vpop.f32.mrb[0].mxu0
    %v1764 = vadd.f32 %v1571, %v1763
    %v1765 = vpop.f32.mrb[0].mxu0
    %v1766 = vadd.f32 %v1573, %v1765
    %v1767 = vpop.f32.mrb[0].mxu0
    %v1768 = vadd.f32 %v1575, %v1767
    %1769 = vmatprep.mubr.bf16.mxu0 %v772
    %1770 = vmatmul.mubr.bf16.gmra.mrb[0].mxu0 %v771
    %v1771 = vpop.f32.mrb[0].mxu0
    %v1772 = vadd.f32 %v1579, %v1771
    %v1773 = vpop.f32.mrb[0].mxu0
    %v1774 = vadd.f32 %v1581, %v1773
    %v1775 = vpop.f32.mrb[0].mxu0
    %v1776 = vadd.f32 %v1583, %v1775
    %v1777 = vpop.f32.mrb[0].mxu0
    %v1778 = vadd.f32 %v1585, %v1777
    %1779 = vmatprep.mubr.bf16.mxu0 %v776
    %1780 = vmatmul.mubr.bf16.gmra.mrb[0].mxu0 %v775
    %v1781 = vpop.f32.mrb[0].mxu0
    %v1782 = vadd.f32 %v1589, %v1781
    %v1783 = vpop.f32.mrb[0].mxu0
    %v1784 = vadd.f32 %v1591, %v1783
    %v1785 = vpop.f32.mrb[0].mxu0
    %v1786 = vadd.f32 %v1593, %v1785
    %v1787 = vpop.f32.mrb[0].mxu0
    %v1788 = vadd.f32 %v1595, %v1787
    %1789 = vmatprep.mubr.bf16.mxu0 %v780
    %1790 = vmatmul.mubr.bf16.gmra.mrb[0].mxu0 %v779
    %v1791 = vpop.f32.mrb[0].mxu0
    %v1792 = vadd.f32 %v1599, %v1791
    %v1793 = vpop.f32.mrb[0].mxu0
    %v1794 = vadd.f32 %v1601, %v1793
    %v1795 = vpop.f32.mrb[0].mxu0
    %v1796 = vadd.f32 %v1603, %v1795
    %v1797 = vpop.f32.mrb[0].mxu0
    %v1798 = vadd.f32 %v1605, %v1797
    %1799 = vmatprep.mubr.bf16.mxu0 %v784
    %1800 = vmatmul.mubr.bf16.gmra.mrb[0].mxu0 %v783
    %v1801 = vpop.f32.mrb[0].mxu0
    %v1802 = vadd.f32 %v1609, %v1801
    %v1803 = vpop.f32.mrb[0].mxu0
    %v1804 = vadd.f32 %v1611, %v1803
    %v1805 = vpop.f32.mrb[0].mxu0
    %v1806 = vadd.f32 %v1613, %v1805
    %v1807 = vpop.f32.mrb[0].mxu0
    %v1808 = vadd.f32 %v1615, %v1807
    %1809 = vmatprep.mubr.bf16.mxu0 %v788
    %1810 = vmatmul.mubr.bf16.gmra.mrb[0].mxu0 %v787
    %v1811 = vpop.f32.mrb[0].mxu0
    %v1812 = vadd.f32 %v1619, %v1811
    %v1813 = vpop.f32.mrb[0].mxu0
    %v1814 = vadd.f32 %v1621, %v1813
    %v1815 = vpop.f32.mrb[0].mxu0
    %v1816 = vadd.f32 %v1623, %v1815
    %v1817 = vpop.f32.mrb[0].mxu0
    %v1818 = vadd.f32 %v1625, %v1817
    %1819 = vmatprep.mubr.bf16.mxu0 %v792
    %1820 = vmatmul.mubr.bf16.gmra.mrb[0].mxu0 %v791
    %v1821 = vpop.f32.mrb[0].mxu0
    %v1822 = vadd.f32 %v1629, %v1821
    %v1823 = vpop.f32.mrb[0].mxu0
    %v1824 = vadd.f32 %v1631, %v1823
    %v1825 = vpop.f32.mrb[0].mxu0
    %v1826 = vadd.f32 %v1633, %v1825
    %v1827 = vpop.f32.mrb[0].mxu0
    %v1828 = vadd.f32 %v1635, %v1827
    %1829 = vmatprep.mubr.bf16.mxu0 %v796
    %1830 = vmatmul.mubr.bf16.gmra.mrb[0].mxu0 %v795
    %v1831 = vpop.f32.mrb[0].mxu0
    %v1832 = vadd.f32 %v1639, %v1831
    %v1833 = vpop.f32.mrb[0].mxu0
    %v1834 = vadd.f32 %v1641, %v1833
    %v1835 = vpop.f32.mrb[0].mxu0
    %v1836 = vadd.f32 %v1643, %v1835
    %v1837 = vpop.f32.mrb[0].mxu0
    %v1838 = vadd.f32 %v1645, %v1837
    %1839 = vdwg.mxu0
    %1840 = vmatprep.subr.bf16.mxu0 0
    %1841 = vmatpush1.bf16.msra.mxu0 %v1264
    %1842 = vmatprep.subr.bf16.mxu0 0
    %1843 = vmatpush1.bf16.msra.mxu0 %v1267
    %1844 = vmatprep.subr.bf16.mxu0 0
    %1845 = vmatpush1.bf16.msra.mxu0 %v1270
    %1846 = vmatprep.subr.bf16.mxu0 0
    %1847 = vmatpush1.bf16.msra.mxu0 %v1273
    %1848 = vmatprep.subr.bf16.mxu0 0
    %1849 = vmatpush1.bf16.msra.mxu0 %v1276
    %1850 = vmatprep.subr.bf16.mxu0 0
    %1851 = vmatpush1.bf16.msra.mxu0 %v1279
    %1852 = vmatprep.subr.bf16.mxu0 0
    %1853 = vmatpush1.bf16.msra.mxu0 %v1282
    %1854 = vmatprep.subr.bf16.mxu0 0
    %1855 = vmatpush1.bf16.msra.mxu0 %v1285
    %1856 = vmatprep.subr.bf16.mxu0 0
    %1857 = vmatpush1.bf16.msra.mxu0 %v1288
    %1858 = vmatprep.subr.bf16.mxu0 0
    %1859 = vmatpush1.bf16.msra.mxu0 %v1291
    %1860 = vmatprep.subr.bf16.mxu0 0
    %1861 = vmatpush1.bf16.msra.mxu0 %v1294
    %1862 = vmatprep.subr.bf16.mxu0 0
    %1863 = vmatpush1.bf16.msra.mxu0 %v1297
    %1864 = vmatprep.subr.bf16.mxu0 0
    %1865 = vmatpush1.bf16.msra.mxu0 %v1300
    %1866 = vmatprep.subr.bf16.mxu0 0
    %1867 = vmatpush1.bf16.msra.mxu0 %v1303
    %1868 = vmatprep.subr.bf16.mxu0 0
    %1869 = vmatpush1.bf16.msra.mxu0 %v1306
    %1870 = vmatprep.subr.bf16.mxu0 0
    %1871 = vmatpush1.bf16.msra.mxu0 %v1309
    %1872 = vmatprep.mubr.bf16.mxu0 %v734
    %1873 = vmatmul.mubr.bf16.gmra.mrb[0].mxu0 %v733
    %v1874 = vpop.f32.mrb[0].mxu0
    %v1875 = vadd.f32 %v938, %v1874
    %v1876 = vpop.f32.mrb[0].mxu0
    %v1877 = vpop.f32.mrb[0].mxu0
    %v1878 = vadd.f32 %v938, %v1877
    %v1879 = vpop.f32.mrb[0].mxu0
    %1880 = vmatprep.mubr.bf16.mxu0 %v738
    %1881 = vmatmul.mubr.bf16.gmra.mrb[0].mxu0 %v737
    %v1882 = vpop.f32.mrb[0].mxu0
    %v1883 = vadd.f32 %v938, %v1882
    %v1884 = vpop.f32.mrb[0].mxu0
    %v1885 = vpop.f32.mrb[0].mxu0
    %v1886 = vadd.f32 %v938, %v1885
    %v1887 = vpop.f32.mrb[0].mxu0
    %1888 = vmatprep.mubr.bf16.mxu0 %v742
    %1889 = vmatmul.mubr.bf16.gmra.mrb[0].mxu0 %v741
    %v1890 = vpop.f32.mrb[0].mxu0
    %v1891 = vadd.f32 %v938, %v1890
    %v1892 = vpop.f32.mrb[0].mxu0
    %v1893 = vpop.f32.mrb[0].mxu0
    %v1894 = vadd.f32 %v938, %v1893
    %v1895 = vpop.f32.mrb[0].mxu0
    %1896 = vmatprep.mubr.bf16.mxu0 %v746
    %1897 = vmatmul.mubr.bf16.gmra.mrb[0].mxu0 %v745
    %v1898 = vpop.f32.mrb[0].mxu0
    %v1899 = vadd.f32 %v938, %v1898
    %v1900 = vpop.f32.mrb[0].mxu0
    %v1901 = vpop.f32.mrb[0].mxu0
    %v1902 = vadd.f32 %v938, %v1901
    %v1903 = vpop.f32.mrb[0].mxu0
    %1904 = vmatprep.mubr.bf16.mxu0 %v750
    %1905 = vmatmul.mubr.bf16.gmra.mrb[0].mxu0 %v749
    %v1906 = vpop.f32.mrb[0].mxu0
    %v1907 = vadd.f32 %v938, %v1906
    %v1908 = vpop.f32.mrb[0].mxu0
    %v1909 = vpop.f32.mrb[0].mxu0
    %v1910 = vadd.f32 %v938, %v1909
    %v1911 = vpop.f32.mrb[0].mxu0
    %1912 = vmatprep.mubr.bf16.mxu0 %v754
    %1913 = vmatmul.mubr.bf16.gmra.mrb[0].mxu0 %v753
    %v1914 = vpop.f32.mrb[0].mxu0
    %v1915 = vadd.f32 %v938, %v1914
    %v1916 = vpop.f32.mrb[0].mxu0
    %v1917 = vpop.f32.mrb[0].mxu0
    %v1918 = vadd.f32 %v938, %v1917
    %v1919 = vpop.f32.mrb[0].mxu0
    %1920 = vmatprep.mubr.bf16.mxu0 %v758
    %1921 = vmatmul.mubr.bf16.gmra.mrb[0].mxu0 %v757
    %v1922 = vpop.f32.mrb[0].mxu0
    %v1923 = vadd.f32 %v938, %v1922
    %v1924 = vpop.f32.mrb[0].mxu0
    %v1925 = vpop.f32.mrb[0].mxu0
    %v1926 = vadd.f32 %v938, %v1925
    %v1927 = vpop.f32.mrb[0].mxu0
    %1928 = vmatprep.mubr.bf16.mxu0 %v762
    %1929 = vmatmul.mubr.bf16.gmra.mrb[0].mxu0 %v761
    %v1930 = vpop.f32.mrb[0].mxu0
    %v1931 = vadd.f32 %v938, %v1930
    %v1932 = vpop.f32.mrb[0].mxu0
    %v1933 = vpop.f32.mrb[0].mxu0
    %v1934 = vadd.f32 %v938, %v1933
    %v1935 = vpop.f32.mrb[0].mxu0
    %1936 = vmatprep.mubr.bf16.mxu0 %v766
    %1937 = vmatmul.mubr.bf16.gmra.mrb[0].mxu0 %v765
    %v1938 = vpop.f32.mrb[0].mxu0
    %v1939 = vadd.f32 %v938, %v1938
    %v1940 = vpop.f32.mrb[0].mxu0
    %v1941 = vpop.f32.mrb[0].mxu0
    %v1942 = vadd.f32 %v938, %v1941
    %v1943 = vpop.f32.mrb[0].mxu0
    %1944 = vmatprep.mubr.bf16.mxu0 %v770
    %1945 = vmatmul.mubr.bf16.gmra.mrb[0].mxu0 %v769
    %v1946 = vpop.f32.mrb[0].mxu0
    %v1947 = vadd.f32 %v938, %v1946
    %v1948 = vpop.f32.mrb[0].mxu0
    %v1949 = vpop.f32.mrb[0].mxu0
    %v1950 = vadd.f32 %v938, %v1949
    %v1951 = vpop.f32.mrb[0].mxu0
    %1952 = vmatprep.mubr.bf16.mxu0 %v774
    %1953 = vmatmul.mubr.bf16.gmra.mrb[0].mxu0 %v773
    %v1954 = vpop.f32.mrb[0].mxu0
    %v1955 = vadd.f32 %v938, %v1954
    %v1956 = vpop.f32.mrb[0].mxu0
    %v1957 = vpop.f32.mrb[0].mxu0
    %v1958 = vadd.f32 %v938, %v1957
    %v1959 = vpop.f32.mrb[0].mxu0
    %1960 = vmatprep.mubr.bf16.mxu0 %v778
    %1961 = vmatmul.mubr.bf16.gmra.mrb[0].mxu0 %v777
    %v1962 = vpop.f32.mrb[0].mxu0
    %v1963 = vadd.f32 %v938, %v1962
    %v1964 = vpop.f32.mrb[0].mxu0
    %v1965 = vpop.f32.mrb[0].mxu0
    %v1966 = vadd.f32 %v938, %v1965
    %v1967 = vpop.f32.mrb[0].mxu0
    %1968 = vmatprep.mubr.bf16.mxu0 %v782
    %1969 = vmatmul.mubr.bf16.gmra.mrb[0].mxu0 %v781
    %v1970 = vpop.f32.mrb[0].mxu0
    %v1971 = vadd.f32 %v938, %v1970
    %v1972 = vpop.f32.mrb[0].mxu0
    %v1973 = vpop.f32.mrb[0].mxu0
    %v1974 = vadd.f32 %v938, %v1973
    %v1975 = vpop.f32.mrb[0].mxu0
    %1976 = vmatprep.mubr.bf16.mxu0 %v786
    %1977 = vmatmul.mubr.bf16.gmra.mrb[0].mxu0 %v785
    %v1978 = vpop.f32.mrb[0].mxu0
    %v1979 = vadd.f32 %v938, %v1978
    %v1980 = vpop.f32.mrb[0].mxu0
    %v1981 = vpop.f32.mrb[0].mxu0
    %v1982 = vadd.f32 %v938, %v1981
    %v1983 = vpop.f32.mrb[0].mxu0
    %1984 = vmatprep.mubr.bf16.mxu0 %v790
    %1985 = vmatmul.mubr.bf16.gmra.mrb[0].mxu0 %v789
    %v1986 = vpop.f32.mrb[0].mxu0
    %v1987 = vadd.f32 %v938, %v1986
    %v1988 = vpop.f32.mrb[0].mxu0
    %v1989 = vpop.f32.mrb[0].mxu0
    %v1990 = vadd.f32 %v938, %v1989
    %v1991 = vpop.f32.mrb[0].mxu0
    %1992 = vmatprep.mubr.bf16.mxu0 %v794
    %1993 = vmatmul.mubr.bf16.gmra.mrb[0].mxu0 %v793
    %v1994 = vpop.f32.mrb[0].mxu0
    %v1995 = vadd.f32 %v938, %v1994
    %v1996 = vpop.f32.mrb[0].mxu0
    %v1997 = vpop.f32.mrb[0].mxu0
    %v1998 = vadd.f32 %v938, %v1997
    %v1999 = vpop.f32.mrb[0].mxu0
    %2000 = vdwg.mxu0
    %2001 = vmatprep.subr.bf16.mxu0 0
    %2002 = vmatpush1.bf16.msra.mxu0 %v1312
    %2003 = vmatprep.subr.bf16.mxu0 0
    %2004 = vmatpush1.bf16.msra.mxu0 %v1315
    %2005 = vmatprep.subr.bf16.mxu0 0
    %2006 = vmatpush1.bf16.msra.mxu0 %v1318
    %2007 = vmatprep.subr.bf16.mxu0 0
    %2008 = vmatpush1.bf16.msra.mxu0 %v1321
    %2009 = vmatprep.subr.bf16.mxu0 0
    %2010 = vmatpush1.bf16.msra.mxu0 %v1324
    %2011 = vmatprep.subr.bf16.mxu0 0
    %2012 = vmatpush1.bf16.msra.mxu0 %v1327
    %2013 = vmatprep.subr.bf16.mxu0 0
    %2014 = vmatpush1.bf16.msra.mxu0 %v1330
    %2015 = vmatprep.subr.bf16.mxu0 0
    %2016 = vmatpush1.bf16.msra.mxu0 %v1333
    %2017 = vmatprep.subr.bf16.mxu0 0
    %2018 = vmatpush1.bf16.msra.mxu0 %v1336
    %2019 = vmatprep.subr.bf16.mxu0 0
    %2020 = vmatpush1.bf16.msra.mxu0 %v1339
    %2021 = vmatprep.subr.bf16.mxu0 0
    %2022 = vmatpush1.bf16.msra.mxu0 %v1342
    %2023 = vmatprep.subr.bf16.mxu0 0
    %2024 = vmatpush1.bf16.msra.mxu0 %v1345
    %2025 = vmatprep.subr.bf16.mxu0 0
    %2026 = vmatpush1.bf16.msra.mxu0 %v1348
    %2027 = vmatprep.subr.bf16.mxu0 0
    %2028 = vmatpush1.bf16.msra.mxu0 %v1351
    %2029 = vmatprep.subr.bf16.mxu0 0
    %2030 = vmatpush1.bf16.msra.mxu0 %v1354
    %2031 = vmatprep.subr.bf16.mxu0 0
    %2032 = vmatpush1.bf16.msra.mxu0 %v1357
    %2033 = vmatprep.mubr.bf16.mxu0 %v736
    %2034 = vmatmul.mubr.bf16.gmra.mrb[0].mxu0 %v735
    %v2035 = vpop.f32.mrb[0].mxu0
    %v2036 = vadd.f32 %v1875, %v2035
    %v2037 = vpop.f32.mrb[0].mxu0
    %v2038 = vpop.f32.mrb[0].mxu0
    %v2039 = vadd.f32 %v1878, %v2038
    %v2040 = vpop.f32.mrb[0].mxu0
    %2041 = vmatprep.mubr.bf16.mxu0 %v740
    %2042 = vmatmul.mubr.bf16.gmra.mrb[0].mxu0 %v739
    %v2043 = vpop.f32.mrb[0].mxu0
    %v2044 = vadd.f32 %v1883, %v2043
    %v2045 = vpop.f32.mrb[0].mxu0
    %v2046 = vpop.f32.mrb[0].mxu0
    %v2047 = vadd.f32 %v1886, %v2046
    %v2048 = vpop.f32.mrb[0].mxu0
    %2049 = vmatprep.mubr.bf16.mxu0 %v744
    %2050 = vmatmul.mubr.bf16.gmra.mrb[0].mxu0 %v743
    %v2051 = vpop.f32.mrb[0].mxu0
    %v2052 = vadd.f32 %v1891, %v2051
    %v2053 = vpop.f32.mrb[0].mxu0
    %v2054 = vpop.f32.mrb[0].mxu0
    %v2055 = vadd.f32 %v1894, %v2054
    %v2056 = vpop.f32.mrb[0].mxu0
    %2057 = vmatprep.mubr.bf16.mxu0 %v748
    %2058 = vmatmul.mubr.bf16.gmra.mrb[0].mxu0 %v747
    %v2059 = vpop.f32.mrb[0].mxu0
    %v2060 = vadd.f32 %v1899, %v2059
    %v2061 = vpop.f32.mrb[0].mxu0
    %v2062 = vpop.f32.mrb[0].mxu0
    %v2063 = vadd.f32 %v1902, %v2062
    %v2064 = vpop.f32.mrb[0].mxu0
    %2065 = vmatprep.mubr.bf16.mxu0 %v752
    %2066 = vmatmul.mubr.bf16.gmra.mrb[0].mxu0 %v751
    %v2067 = vpop.f32.mrb[0].mxu0
    %v2068 = vadd.f32 %v1907, %v2067
    %v2069 = vpop.f32.mrb[0].mxu0
    %v2070 = vpop.f32.mrb[0].mxu0
    %v2071 = vadd.f32 %v1910, %v2070
    %v2072 = vpop.f32.mrb[0].mxu0
    %2073 = vmatprep.mubr.bf16.mxu0 %v756
    %2074 = vmatmul.mubr.bf16.gmra.mrb[0].mxu0 %v755
    %v2075 = vpop.f32.mrb[0].mxu0
    %v2076 = vadd.f32 %v1915, %v2075
    %v2077 = vpop.f32.mrb[0].mxu0
    %v2078 = vpop.f32.mrb[0].mxu0
    %v2079 = vadd.f32 %v1918, %v2078
    %v2080 = vpop.f32.mrb[0].mxu0
    %2081 = vmatprep.mubr.bf16.mxu0 %v760
    %2082 = vmatmul.mubr.bf16.gmra.mrb[0].mxu0 %v759
    %v2083 = vpop.f32.mrb[0].mxu0
    %v2084 = vadd.f32 %v1923, %v2083
    %v2085 = vpop.f32.mrb[0].mxu0
    %v2086 = vpop.f32.mrb[0].mxu0
    %v2087 = vadd.f32 %v1926, %v2086
    %v2088 = vpop.f32.mrb[0].mxu0
    %2089 = vmatprep.mubr.bf16.mxu0 %v764
    %2090 = vmatmul.mubr.bf16.gmra.mrb[0].mxu0 %v763
    %v2091 = vpop.f32.mrb[0].mxu0
    %v2092 = vadd.f32 %v1931, %v2091
    %v2093 = vpop.f32.mrb[0].mxu0
    %v2094 = vpop.f32.mrb[0].mxu0
    %v2095 = vadd.f32 %v1934, %v2094
    %v2096 = vpop.f32.mrb[0].mxu0
    %2097 = vmatprep.mubr.bf16.mxu0 %v768
    %2098 = vmatmul.mubr.bf16.gmra.mrb[0].mxu0 %v767
    %v2099 = vpop.f32.mrb[0].mxu0
    %v2100 = vadd.f32 %v1939, %v2099
    %v2101 = vpop.f32.mrb[0].mxu0
    %v2102 = vpop.f32.mrb[0].mxu0
    %v2103 = vadd.f32 %v1942, %v2102
    %v2104 = vpop.f32.mrb[0].mxu0
    %2105 = vmatprep.mubr.bf16.mxu0 %v772
    %2106 = vmatmul.mubr.bf16.gmra.mrb[0].mxu0 %v771
    %v2107 = vpop.f32.mrb[0].mxu0
    %v2108 = vadd.f32 %v1947, %v2107
    %v2109 = vpop.f32.mrb[0].mxu0
    %v2110 = vpop.f32.mrb[0].mxu0
    %v2111 = vadd.f32 %v1950, %v2110
    %v2112 = vpop.f32.mrb[0].mxu0
    %2113 = vmatprep.mubr.bf16.mxu0 %v776
    %2114 = vmatmul.mubr.bf16.gmra.mrb[0].mxu0 %v775
    %v2115 = vpop.f32.mrb[0].mxu0
    %v2116 = vadd.f32 %v1955, %v2115
    %v2117 = vpop.f32.mrb[0].mxu0
    %v2118 = vpop.f32.mrb[0].mxu0
    %v2119 = vadd.f32 %v1958, %v2118
    %v2120 = vpop.f32.mrb[0].mxu0
    %2121 = vmatprep.mubr.bf16.mxu0 %v780
    %2122 = vmatmul.mubr.bf16.gmra.mrb[0].mxu0 %v779
    %v2123 = vpop.f32.mrb[0].mxu0
    %v2124 = vadd.f32 %v1963, %v2123
    %v2125 = vpop.f32.mrb[0].mxu0
    %v2126 = vpop.f32.mrb[0].mxu0
    %v2127 = vadd.f32 %v1966, %v2126
    %v2128 = vpop.f32.mrb[0].mxu0
    %2129 = vmatprep.mubr.bf16.mxu0 %v784
    %2130 = vmatmul.mubr.bf16.gmra.mrb[0].mxu0 %v783
    %v2131 = vpop.f32.mrb[0].mxu0
    %v2132 = vadd.f32 %v1971, %v2131
    %v2133 = vpop.f32.mrb[0].mxu0
    %v2134 = vpop.f32.mrb[0].mxu0
    %v2135 = vadd.f32 %v1974, %v2134
    %v2136 = vpop.f32.mrb[0].mxu0
    %2137 = vmatprep.mubr.bf16.mxu0 %v788
    %2138 = vmatmul.mubr.bf16.gmra.mrb[0].mxu0 %v787
    %v2139 = vpop.f32.mrb[0].mxu0
    %v2140 = vadd.f32 %v1979, %v2139
    %v2141 = vpop.f32.mrb[0].mxu0
    %v2142 = vpop.f32.mrb[0].mxu0
    %v2143 = vadd.f32 %v1982, %v2142
    %v2144 = vpop.f32.mrb[0].mxu0
    %2145 = vmatprep.mubr.bf16.mxu0 %v792
    %2146 = vmatmul.mubr.bf16.gmra.mrb[0].mxu0 %v791
    %v2147 = vpop.f32.mrb[0].mxu0
    %v2148 = vadd.f32 %v1987, %v2147
    %v2149 = vpop.f32.mrb[0].mxu0
    %v2150 = vpop.f32.mrb[0].mxu0
    %v2151 = vadd.f32 %v1990, %v2150
    %v2152 = vpop.f32.mrb[0].mxu0
    %2153 = vmatprep.mubr.bf16.mxu0 %v796
    %2154 = vmatmul.mubr.bf16.gmra.mrb[0].mxu0 %v795
    %v2155 = vpop.f32.mrb[0].mxu0
    %v2156 = vadd.f32 %v1995, %v2155
    %v2157 = vpop.f32.mrb[0].mxu0
    %v2158 = vpop.f32.mrb[0].mxu0
    %v2159 = vadd.f32 %v1998, %v2158
    %v2160 = vpop.f32.mrb[0].mxu0
    %2161 = vdwg.mxu0
    %v2162 = vmax.f32 %v1682, 0.0
    %v2163 = vmax.f32 %v1684, 0.0
    %v2164 = vmax.f32 %v2036, 0.0
    %v2165 = vmax.f32 %v1686, 0.0
    %v2166 = vmax.f32 %v1688, 0.0
    %v2167 = vmax.f32 %v2039, 0.0
    %v2168 = vmax.f32 %v1692, 0.0
    %v2169 = vmax.f32 %v1694, 0.0
    %v2170 = vmax.f32 %v2044, 0.0
    %v2171 = vmax.f32 %v1696, 0.0
    %v2172 = vmax.f32 %v1698, 0.0
    %v2173 = vmax.f32 %v2047, 0.0
    %v2174 = vmax.f32 %v1702, 0.0
    %v2175 = vmax.f32 %v1704, 0.0
    %v2176 = vmax.f32 %v2052, 0.0
    %v2177 = vmax.f32 %v1706, 0.0
    %v2178 = vmax.f32 %v1708, 0.0
    %v2179 = vmax.f32 %v2055, 0.0
    %v2180 = vmax.f32 %v1712, 0.0
    %v2181 = vmax.f32 %v1714, 0.0
    %v2182 = vmax.f32 %v2060, 0.0
    %v2183 = vmax.f32 %v1716, 0.0
    %v2184 = vmax.f32 %v1718, 0.0
    %v2185 = vmax.f32 %v2063, 0.0
    %v2186 = vmax.f32 %v1722, 0.0
    %v2187 = vmax.f32 %v1724, 0.0
    %v2188 = vmax.f32 %v2068, 0.0
    %v2189 = vmax.f32 %v1726, 0.0
    %v2190 = vmax.f32 %v1728, 0.0
    %v2191 = vmax.f32 %v2071, 0.0
    %v2192 = vmax.f32 %v1732, 0.0
    %v2193 = vmax.f32 %v1734, 0.0
    %v2194 = vmax.f32 %v2076, 0.0
    %v2195 = vmax.f32 %v1736, 0.0
    %v2196 = vmax.f32 %v1738, 0.0
    %v2197 = vmax.f32 %v2079, 0.0
    %v2198 = vmax.f32 %v1742, 0.0
    %v2199 = vmax.f32 %v1744, 0.0
    %v2200 = vmax.f32 %v2084, 0.0
    %v2201 = vmax.f32 %v1746, 0.0
    %v2202 = vmax.f32 %v1748, 0.0
    %v2203 = vmax.f32 %v2087, 0.0
    %v2204 = vmax.f32 %v1752, 0.0
    %v2205 = vmax.f32 %v1754, 0.0
    %v2206 = vmax.f32 %v2092, 0.0
    %v2207 = vmax.f32 %v1756, 0.0
    %v2208 = vmax.f32 %v1758, 0.0
    %v2209 = vmax.f32 %v2095, 0.0
    %v2210 = vmax.f32 %v1762, 0.0
    %v2211 = vmax.f32 %v1764, 0.0
    %v2212 = vmax.f32 %v2100, 0.0
    %v2213 = vmax.f32 %v1766, 0.0
    %v2214 = vmax.f32 %v1768, 0.0
    %v2215 = vmax.f32 %v2103, 0.0
    %v2216 = vmax.f32 %v1772, 0.0
    %v2217 = vmax.f32 %v1774, 0.0
    %v2218 = vmax.f32 %v2108, 0.0
    %v2219 = vmax.f32 %v1776, 0.0
    %v2220 = vmax.f32 %v1778, 0.0
    %v2221 = vmax.f32 %v2111, 0.0
    %v2222 = vmax.f32 %v1782, 0.0
    %v2223 = vmax.f32 %v1784, 0.0
    %v2224 = vmax.f32 %v2116, 0.0
    %v2225 = vmax.f32 %v1786, 0.0
    %v2226 = vmax.f32 %v1788, 0.0
    %v2227 = vmax.f32 %v2119, 0.0
    %v2228 = vmax.f32 %v1792, 0.0
    %v2229 = vmax.f32 %v1794, 0.0
    %v2230 = vmax.f32 %v2124, 0.0
    %v2231 = vmax.f32 %v1796, 0.0
    %v2232 = vmax.f32 %v1798, 0.0
    %v2233 = vmax.f32 %v2127, 0.0
    %v2234 = vmax.f32 %v1802, 0.0
    %v2235 = vmax.f32 %v1804, 0.0
    %v2236 = vmax.f32 %v2132, 0.0
    %v2237 = vmax.f32 %v1806, 0.0
    %v2238 = vmax.f32 %v1808, 0.0
    %v2239 = vmax.f32 %v2135, 0.0
    %v2240 = vmax.f32 %v1812, 0.0
    %v2241 = vmax.f32 %v1814, 0.0
    %v2242 = vmax.f32 %v2140, 0.0
    %v2243 = vmax.f32 %v1816, 0.0
    %v2244 = vmax.f32 %v1818, 0.0
    %v2245 = vmax.f32 %v2143, 0.0
    %v2246 = vmax.f32 %v1822, 0.0
    %v2247 = vmax.f32 %v1824, 0.0
    %v2248 = vmax.f32 %v2148, 0.0
    %v2249 = vmax.f32 %v1826, 0.0
    %v2250 = vmax.f32 %v1828, 0.0
    %v2251 = vmax.f32 %v2151, 0.0
    %v2252 = vmax.f32 %v1832, 0.0
    %v2253 = vmax.f32 %v1834, 0.0
    %v2254 = vmax.f32 %v2156, 0.0
    %v2255 = vmax.f32 %v1836, 0.0
    %v2256 = vmax.f32 %v1838, 0.0
    %v2257 = vmax.f32 %v2159, 0.0
    %v2258 = vpack.c.bf16 %v2165, %v2162
    %v2259 = vpack.c.bf16 %v2166, %v2163
    %v2260 = vpack.c.bf16 %v2167, %v2164
    %v2261 = vpack.c.bf16 %v2171, %v2168
    %v2262 = vpack.c.bf16 %v2172, %v2169
    %v2263 = vpack.c.bf16 %v2173, %v2170
    %v2264 = vpack.c.bf16 %v2177, %v2174
    %v2265 = vpack.c.bf16 %v2178, %v2175
    %v2266 = vpack.c.bf16 %v2179, %v2176
    %v2267 = vpack.c.bf16 %v2183, %v2180
    %v2268 = vpack.c.bf16 %v2184, %v2181
    %v2269 = vpack.c.bf16 %v2185, %v2182
    %v2270 = vpack.c.bf16 %v2189, %v2186
    %v2271 = vpack.c.bf16 %v2190, %v2187
    %v2272 = vpack.c.bf16 %v2191, %v2188
    %v2273 = vpack.c.bf16 %v2195, %v2192
    %v2274 = vpack.c.bf16 %v2196, %v2193
    %v2275 = vpack.c.bf16 %v2197, %v2194
    %v2276 = vpack.c.bf16 %v2201, %v2198
    %v2277 = vpack.c.bf16 %v2202, %v2199
    %v2278 = vpack.c.bf16 %v2203, %v2200
    %v2279 = vpack.c.bf16 %v2207, %v2204
    %v2280 = vpack.c.bf16 %v2208, %v2205
    %v2281 = vpack.c.bf16 %v2209, %v2206
    %v2282 = vpack.c.bf16 %v2213, %v2210
    %v2283 = vpack.c.bf16 %v2214, %v2211
    %v2284 = vpack.c.bf16 %v2215, %v2212
    %v2285 = vpack.c.bf16 %v2219, %v2216
    %v2286 = vpack.c.bf16 %v2220, %v2217
    %v2287 = vpack.c.bf16 %v2221, %v2218
    %v2288 = vpack.c.bf16 %v2225, %v2222
    %v2289 = vpack.c.bf16 %v2226, %v2223
    %v2290 = vpack.c.bf16 %v2227, %v2224
    %v2291 = vpack.c.bf16 %v2231, %v2228
    %v2292 = vpack.c.bf16 %v2232, %v2229
    %v2293 = vpack.c.bf16 %v2233, %v2230
    %v2294 = vpack.c.bf16 %v2237, %v2234
    %v2295 = vpack.c.bf16 %v2238, %v2235
    %v2296 = vpack.c.bf16 %v2239, %v2236
    %v2297 = vpack.c.bf16 %v2243, %v2240
    %v2298 = vpack.c.bf16 %v2244, %v2241
    %v2299 = vpack.c.bf16 %v2245, %v2242
    %v2300 = vpack.c.bf16 %v2249, %v2246
    %v2301 = vpack.c.bf16 %v2250, %v2247
    %v2302 = vpack.c.bf16 %v2251, %v2248
    %v2303 = vpack.c.bf16 %v2255, %v2252
    %v2304 = vpack.c.bf16 %v2256, %v2253
    %v2305 = vpack.c.bf16 %v2257, %v2254
    %v2306 = vld [vmem:[#allocation4] sm:$0xff]
    %v2307 = vld [vmem:[#allocation4 + $0x8] sm:$0xff]
    %v2308 = vld [vmem:[#allocation4 + $0x10] sm:$0xff]
    %v2309 = vld [vmem:[#allocation4 + $0x18] sm:$0xff]
    %v2310 = vld [vmem:[#allocation4 + $0x20] sm:$0xff]
    %v2311 = vld [vmem:[#allocation4 + $0x28] sm:$0xff]
    %v2312 = vld [vmem:[#allocation4 + $0x30] sm:$0xff]
    %v2313 = vld [vmem:[#allocation4 + $0x38] sm:$0xff]
    %v2314 = vld [vmem:[#allocation4 + $0x40] sm:$0xff]
    %v2315 = vld [vmem:[#allocation4 + $0x48] sm:$0xff]
    %v2316 = vld [vmem:[#allocation4 + $0x50] sm:$0xff]
    %v2317 = vld [vmem:[#allocation4 + $0x58] sm:$0xff]
    %v2318 = vld [vmem:[#allocation4 + $0x60] sm:$0xff]
    %v2319 = vld [vmem:[#allocation4 + $0x68] sm:$0xff]
    %v2320 = vld [vmem:[#allocation4 + $0x70] sm:$0xff]
    %v2321 = vld [vmem:[#allocation4 + $0x78] sm:$0xff]
    %v2322 = vld [vmem:[#allocation4 + $0x80] sm:$0xff]
    %v2323 = vld [vmem:[#allocation4 + $0x88] sm:$0xff]
    %v2324 = vld [vmem:[#allocation4 + $0x90] sm:$0xff]
    %v2325 = vld [vmem:[#allocation4 + $0x98] sm:$0xff]
    %v2326 = vld [vmem:[#allocation4 + $0xa0] sm:$0xff]
    %v2327 = vld [vmem:[#allocation4 + $0xa8] sm:$0xff]
    %v2328 = vld [vmem:[#allocation4 + $0xb0] sm:$0xff]
    %v2329 = vld [vmem:[#allocation4 + $0xb8] sm:$0xff]
    %v2330 = vld [vmem:[#allocation4 + $0xc0] sm:$0xff]
    %v2331 = vld [vmem:[#allocation4 + $0xc8] sm:$0xff]
    %v2332 = vld [vmem:[#allocation4 + $0xd0] sm:$0xff]
    %v2333 = vld [vmem:[#allocation4 + $0xd8] sm:$0xff]
    %v2334 = vld [vmem:[#allocation4 + $0xe0] sm:$0xff]
    %v2335 = vld [vmem:[#allocation4 + $0xe8] sm:$0xff]
    %v2336 = vld [vmem:[#allocation4 + $0xf0] sm:$0xff]
    %v2337 = vld [vmem:[#allocation4 + $0xf8] sm:$0xff]
    %v2338 = vld [vmem:[#allocation4 + $0x100] sm:$0xff]
    %v2339 = vld [vmem:[#allocation4 + $0x108] sm:$0xff]
    %v2340 = vld [vmem:[#allocation4 + $0x110] sm:$0xff]
    %v2341 = vld [vmem:[#allocation4 + $0x118] sm:$0xff]
    %v2342 = vld [vmem:[#allocation4 + $0x120] sm:$0xff]
    %v2343 = vld [vmem:[#allocation4 + $0x128] sm:$0xff]
    %v2344 = vld [vmem:[#allocation4 + $0x130] sm:$0xff]
    %v2345 = vld [vmem:[#allocation4 + $0x138] sm:$0xff]
    %v2346 = vld [vmem:[#allocation4 + $0x140] sm:$0xff]
    %v2347 = vld [vmem:[#allocation4 + $0x148] sm:$0xff]
    %v2348 = vld [vmem:[#allocation4 + $0x150] sm:$0xff]
    %v2349 = vld [vmem:[#allocation4 + $0x158] sm:$0xff]
    %v2350 = vld [vmem:[#allocation4 + $0x160] sm:$0xff]
    %v2351 = vld [vmem:[#allocation4 + $0x168] sm:$0xff]
    %v2352 = vld [vmem:[#allocation4 + $0x170] sm:$0xff]
    %v2353 = vld [vmem:[#allocation4 + $0x178] sm:$0xff]
    %v2354 = vld [vmem:[%s6] sm:$0x3]
    %v2356 = vlaneseq
    %v2357 = vshrl.u32 %v2356, 7
    %v2358 = vsub.s32 0, %v2357
    %v2359 = vrot.slane %v2354, %v2358
    %v2360 = vlaneseq
    %v2361 = vshrl.u32 %v2360, 7
    %v2362 = vsub.s32 1, %v2361
    %v2363 = vrot.slane %v2354, %v2362
    %v2414 = vunpack.c.l.b16 %v2306
    %v2415 = vunpack.c.h.b16 %v2306
    %v2416 = vunpack.c.l.b16 %v2307
    %v2417 = vunpack.c.h.b16 %v2307
    %v2418 = vunpack.c.l.b16 %v2308
    %v2419 = vunpack.c.h.b16 %v2308
    %v2420 = vunpack.c.l.b16 %v2309
    %v2421 = vunpack.c.h.b16 %v2309
    %v2422 = vunpack.c.l.b16 %v2310
    %v2423 = vunpack.c.h.b16 %v2310
    %v2424 = vunpack.c.l.b16 %v2311
    %v2425 = vunpack.c.h.b16 %v2311
    %v2426 = vunpack.c.l.b16 %v2312
    %v2427 = vunpack.c.h.b16 %v2312
    %v2428 = vunpack.c.l.b16 %v2313
    %v2429 = vunpack.c.h.b16 %v2313
    %v2430 = vunpack.c.l.b16 %v2314
    %v2431 = vunpack.c.h.b16 %v2314
    %v2432 = vunpack.c.l.b16 %v2315
    %v2433 = vunpack.c.h.b16 %v2315
    %v2434 = vunpack.c.l.b16 %v2316
    %v2435 = vunpack.c.h.b16 %v2316
    %v2436 = vunpack.c.l.b16 %v2317
    %v2437 = vunpack.c.h.b16 %v2317
    %v2438 = vunpack.c.l.b16 %v2318
    %v2439 = vunpack.c.h.b16 %v2318
    %v2440 = vunpack.c.l.b16 %v2319
    %v2441 = vunpack.c.h.b16 %v2319
    %v2442 = vunpack.c.l.b16 %v2320
    %v2443 = vunpack.c.h.b16 %v2320
    %v2444 = vunpack.c.l.b16 %v2321
    %v2445 = vunpack.c.h.b16 %v2321
    %v2446 = vunpack.c.l.b16 %v2322
    %v2447 = vunpack.c.h.b16 %v2322
    %v2448 = vunpack.c.l.b16 %v2323
    %v2449 = vunpack.c.h.b16 %v2323
    %v2450 = vunpack.c.l.b16 %v2324
    %v2451 = vunpack.c.h.b16 %v2324
    %v2452 = vunpack.c.l.b16 %v2325
    %v2453 = vunpack.c.h.b16 %v2325
    %v2454 = vunpack.c.l.b16 %v2326
    %v2455 = vunpack.c.h.b16 %v2326
    %v2456 = vunpack.c.l.b16 %v2327
    %v2457 = vunpack.c.h.b16 %v2327
    %v2458 = vunpack.c.l.b16 %v2328
    %v2459 = vunpack.c.h.b16 %v2328
    %v2460 = vunpack.c.l.b16 %v2329
    %v2461 = vunpack.c.h.b16 %v2329
    %v2462 = vunpack.c.l.b16 %v2330
    %v2463 = vunpack.c.h.b16 %v2330
    %v2464 = vunpack.c.l.b16 %v2331
    %v2465 = vunpack.c.h.b16 %v2331
    %v2466 = vunpack.c.l.b16 %v2332
    %v2467 = vunpack.c.h.b16 %v2332
    %v2468 = vunpack.c.l.b16 %v2333
    %v2469 = vunpack.c.h.b16 %v2333
    %v2470 = vunpack.c.l.b16 %v2334
    %v2471 = vunpack.c.h.b16 %v2334
    %v2472 = vunpack.c.l.b16 %v2335
    %v2473 = vunpack.c.h.b16 %v2335
    %v2474 = vunpack.c.l.b16 %v2336
    %v2475 = vunpack.c.h.b16 %v2336
    %v2476 = vunpack.c.l.b16 %v2337
    %v2477 = vunpack.c.h.b16 %v2337
    %v2478 = vunpack.c.l.b16 %v2338
    %v2479 = vunpack.c.h.b16 %v2338
    %v2480 = vunpack.c.l.b16 %v2339
    %v2481 = vunpack.c.h.b16 %v2339
    %v2482 = vunpack.c.l.b16 %v2340
    %v2483 = vunpack.c.h.b16 %v2340
    %v2484 = vunpack.c.l.b16 %v2341
    %v2485 = vunpack.c.h.b16 %v2341
    %v2486 = vunpack.c.l.b16 %v2342
    %v2487 = vunpack.c.h.b16 %v2342
    %v2488 = vunpack.c.l.b16 %v2343
    %v2489 = vunpack.c.h.b16 %v2343
    %v2490 = vunpack.c.l.b16 %v2344
    %v2491 = vunpack.c.h.b16 %v2344
    %v2492 = vunpack.c.l.b16 %v2345
    %v2493 = vunpack.c.h.b16 %v2345
    %v2494 = vunpack.c.l.b16 %v2346
    %v2495 = vunpack.c.h.b16 %v2346
    %v2496 = vunpack.c.l.b16 %v2347
    %v2497 = vunpack.c.h.b16 %v2347
    %v2498 = vunpack.c.l.b16 %v2348
    %v2499 = vunpack.c.h.b16 %v2348
    %v2500 = vunpack.c.l.b16 %v2349
    %v2501 = vunpack.c.h.b16 %v2349
    %v2502 = vunpack.c.l.b16 %v2350
    %v2503 = vunpack.c.h.b16 %v2350
    %v2504 = vunpack.c.l.b16 %v2351
    %v2505 = vunpack.c.h.b16 %v2351
    %v2506 = vunpack.c.l.b16 %v2352
    %v2507 = vunpack.c.h.b16 %v2352
    %v2508 = vunpack.c.l.b16 %v2353
    %v2509 = vunpack.c.h.b16 %v2353
    %v2510 = vpack.c.b16 %v2416, %v2414
    %v2511 = vpack.c.b16 %v2417, %v2415
    %v2512 = vpack.c.b16 %v2420, %v2418
    %v2513 = vpack.c.b16 %v2421, %v2419
    %v2514 = vpack.c.b16 %v2424, %v2422
    %v2515 = vpack.c.b16 %v2425, %v2423
    %v2516 = vpack.c.b16 %v2428, %v2426
    %v2517 = vpack.c.b16 %v2429, %v2427
    %v2518 = vpack.c.b16 %v2432, %v2430
    %v2519 = vpack.c.b16 %v2433, %v2431
    %v2520 = vpack.c.b16 %v2436, %v2434
    %v2521 = vpack.c.b16 %v2437, %v2435
    %v2522 = vpack.c.b16 %v2440, %v2438
    %v2523 = vpack.c.b16 %v2441, %v2439
    %v2524 = vpack.c.b16 %v2444, %v2442
    %v2525 = vpack.c.b16 %v2445, %v2443
    %v2526 = vpack.c.b16 %v2448, %v2446
    %v2527 = vpack.c.b16 %v2449, %v2447
    %v2528 = vpack.c.b16 %v2452, %v2450
    %v2529 = vpack.c.b16 %v2453, %v2451
    %v2530 = vpack.c.b16 %v2456, %v2454
    %v2531 = vpack.c.b16 %v2457, %v2455
    %v2532 = vpack.c.b16 %v2460, %v2458
    %v2533 = vpack.c.b16 %v2461, %v2459
    %v2534 = vpack.c.b16 %v2464, %v2462
    %v2535 = vpack.c.b16 %v2465, %v2463
    %v2536 = vpack.c.b16 %v2468, %v2466
    %v2537 = vpack.c.b16 %v2469, %v2467
    %v2538 = vpack.c.b16 %v2472, %v2470
    %v2539 = vpack.c.b16 %v2473, %v2471
    %v2540 = vpack.c.b16 %v2476, %v2474
    %v2541 = vpack.c.b16 %v2477, %v2475
    %v2542 = vpack.c.b16 %v2480, %v2478
    %v2543 = vpack.c.b16 %v2481, %v2479
    %v2544 = vpack.c.b16 %v2484, %v2482
    %v2545 = vpack.c.b16 %v2485, %v2483
    %v2546 = vpack.c.b16 %v2488, %v2486
    %v2547 = vpack.c.b16 %v2489, %v2487
    %v2548 = vpack.c.b16 %v2492, %v2490
    %v2549 = vpack.c.b16 %v2493, %v2491
    %v2550 = vpack.c.b16 %v2496, %v2494
    %v2551 = vpack.c.b16 %v2497, %v2495
    %v2552 = vpack.c.b16 %v2500, %v2498
    %v2553 = vpack.c.b16 %v2501, %v2499
    %v2554 = vpack.c.b16 %v2504, %v2502
    %v2555 = vpack.c.b16 %v2505, %v2503
    %v2556 = vpack.c.b16 %v2508, %v2506
    %v2557 = vpack.c.b16 %v2509, %v2507
    %2606 = vmatprep.subr.bf16.mxu0 %v2511
    %2607 = vmatpush1.bf16.msra.mxu0 %v2510
    %2608 = vmatprep.subr.bf16.mxu0 %v2513
    %2609 = vmatpush1.bf16.msra.mxu0 %v2512
    %2610 = vmatprep.subr.bf16.mxu0 %v2515
    %2611 = vmatpush1.bf16.msra.mxu0 %v2514
    %2612 = vmatprep.subr.bf16.mxu0 %v2517
    %2613 = vmatpush1.bf16.msra.mxu0 %v2516
    %2614 = vmatprep.subr.bf16.mxu0 %v2519
    %2615 = vmatpush1.bf16.msra.mxu0 %v2518
    %2616 = vmatprep.subr.bf16.mxu0 %v2521
    %2617 = vmatpush1.bf16.msra.mxu0 %v2520
    %2618 = vmatprep.subr.bf16.mxu0 %v2523
    %2619 = vmatpush1.bf16.msra.mxu0 %v2522
    %2620 = vmatprep.subr.bf16.mxu0 %v2525
    %2621 = vmatpush1.bf16.msra.mxu0 %v2524
    %2622 = vmatprep.subr.bf16.mxu0 %v2527
    %2623 = vmatpush1.bf16.msra.mxu0 %v2526
    %2624 = vmatprep.subr.bf16.mxu0 %v2529
    %2625 = vmatpush1.bf16.msra.mxu0 %v2528
    %2626 = vmatprep.subr.bf16.mxu0 %v2531
    %2627 = vmatpush1.bf16.msra.mxu0 %v2530
    %2628 = vmatprep.subr.bf16.mxu0 %v2533
    %2629 = vmatpush1.bf16.msra.mxu0 %v2532
    %2630 = vmatprep.subr.bf16.mxu0 %v2535
    %2631 = vmatpush1.bf16.msra.mxu0 %v2534
    %2632 = vmatprep.subr.bf16.mxu0 %v2537
    %2633 = vmatpush1.bf16.msra.mxu0 %v2536
    %2634 = vmatprep.subr.bf16.mxu0 %v2539
    %2635 = vmatpush1.bf16.msra.mxu0 %v2538
    %2636 = vmatprep.subr.bf16.mxu0 %v2541
    %2637 = vmatpush1.bf16.msra.mxu0 %v2540
    %2638 = vmatprep.mubr.bf16.mxu0 %v2259
    %2639 = vmatmul.mubr.bf16.gmra.mrb[0].mxu0 %v2258
    %v2640 = vpop.f32.mrb[0].mxu0
    %v2641 = vadd.f32 %v2359, %v2640
    %v2642 = vpop.f32.mrb[0].mxu0
    %v2643 = vadd.f32 %v2363, %v2642
    %v2644 = vpop.f32.mrb[0].mxu0
    %v2645 = vadd.f32 %v2359, %v2644
    %v2646 = vpop.f32.mrb[0].mxu0
    %v2647 = vadd.f32 %v2363, %v2646
    %2648 = vmatprep.mubr.bf16.mxu0 %v2262
    %2649 = vmatmul.mubr.bf16.gmra.mrb[0].mxu0 %v2261
    %v2650 = vpop.f32.mrb[0].mxu0
    %v2651 = vadd.f32 %v2359, %v2650
    %v2652 = vpop.f32.mrb[0].mxu0
    %v2653 = vadd.f32 %v2363, %v2652
    %v2654 = vpop.f32.mrb[0].mxu0
    %v2655 = vadd.f32 %v2359, %v2654
    %v2656 = vpop.f32.mrb[0].mxu0
    %v2657 = vadd.f32 %v2363, %v2656
    %2658 = vmatprep.mubr.bf16.mxu0 %v2265
    %2659 = vmatmul.mubr.bf16.gmra.mrb[0].mxu0 %v2264
    %v2660 = vpop.f32.mrb[0].mxu0
    %v2661 = vadd.f32 %v2359, %v2660
    %v2662 = vpop.f32.mrb[0].mxu0
    %v2663 = vadd.f32 %v2363, %v2662
    %v2664 = vpop.f32.mrb[0].mxu0
    %v2665 = vadd.f32 %v2359, %v2664
    %v2666 = vpop.f32.mrb[0].mxu0
    %v2667 = vadd.f32 %v2363, %v2666
    %2668 = vmatprep.mubr.bf16.mxu0 %v2268
    %2669 = vmatmul.mubr.bf16.gmra.mrb[0].mxu0 %v2267
    %v2670 = vpop.f32.mrb[0].mxu0
    %v2671 = vadd.f32 %v2359, %v2670
    %v2672 = vpop.f32.mrb[0].mxu0
    %v2673 = vadd.f32 %v2363, %v2672
    %v2674 = vpop.f32.mrb[0].mxu0
    %v2675 = vadd.f32 %v2359, %v2674
    %v2676 = vpop.f32.mrb[0].mxu0
    %v2677 = vadd.f32 %v2363, %v2676
    %2678 = vmatprep.mubr.bf16.mxu0 %v2271
    %2679 = vmatmul.mubr.bf16.gmra.mrb[0].mxu0 %v2270
    %v2680 = vpop.f32.mrb[0].mxu0
    %v2681 = vadd.f32 %v2359, %v2680
    %v2682 = vpop.f32.mrb[0].mxu0
    %v2683 = vadd.f32 %v2363, %v2682
    %v2684 = vpop.f32.mrb[0].mxu0
    %v2685 = vadd.f32 %v2359, %v2684
    %v2686 = vpop.f32.mrb[0].mxu0
    %v2687 = vadd.f32 %v2363, %v2686
    %2688 = vmatprep.mubr.bf16.mxu0 %v2274
    %2689 = vmatmul.mubr.bf16.gmra.mrb[0].mxu0 %v2273
    %v2690 = vpop.f32.mrb[0].mxu0
    %v2691 = vadd.f32 %v2359, %v2690
    %v2692 = vpop.f32.mrb[0].mxu0
    %v2693 = vadd.f32 %v2363, %v2692
    %v2694 = vpop.f32.mrb[0].mxu0
    %v2695 = vadd.f32 %v2359, %v2694
    %v2696 = vpop.f32.mrb[0].mxu0
    %v2697 = vadd.f32 %v2363, %v2696
    %2698 = vmatprep.mubr.bf16.mxu0 %v2277
    %2699 = vmatmul.mubr.bf16.gmra.mrb[0].mxu0 %v2276
    %v2700 = vpop.f32.mrb[0].mxu0
    %v2701 = vadd.f32 %v2359, %v2700
    %v2702 = vpop.f32.mrb[0].mxu0
    %v2703 = vadd.f32 %v2363, %v2702
    %v2704 = vpop.f32.mrb[0].mxu0
    %v2705 = vadd.f32 %v2359, %v2704
    %v2706 = vpop.f32.mrb[0].mxu0
    %v2707 = vadd.f32 %v2363, %v2706
    %2708 = vmatprep.mubr.bf16.mxu0 %v2280
    %2709 = vmatmul.mubr.bf16.gmra.mrb[0].mxu0 %v2279
    %v2710 = vpop.f32.mrb[0].mxu0
    %v2711 = vadd.f32 %v2359, %v2710
    %v2712 = vpop.f32.mrb[0].mxu0
    %v2713 = vadd.f32 %v2363, %v2712
    %v2714 = vpop.f32.mrb[0].mxu0
    %v2715 = vadd.f32 %v2359, %v2714
    %v2716 = vpop.f32.mrb[0].mxu0
    %v2717 = vadd.f32 %v2363, %v2716
    %2718 = vmatprep.mubr.bf16.mxu0 %v2283
    %2719 = vmatmul.mubr.bf16.gmra.mrb[0].mxu0 %v2282
    %v2720 = vpop.f32.mrb[0].mxu0
    %v2721 = vadd.f32 %v2359, %v2720
    %v2722 = vpop.f32.mrb[0].mxu0
    %v2723 = vadd.f32 %v2363, %v2722
    %v2724 = vpop.f32.mrb[0].mxu0
    %v2725 = vadd.f32 %v2359, %v2724
    %v2726 = vpop.f32.mrb[0].mxu0
    %v2727 = vadd.f32 %v2363, %v2726
    %2728 = vmatprep.mubr.bf16.mxu0 %v2286
    %2729 = vmatmul.mubr.bf16.gmra.mrb[0].mxu0 %v2285
    %v2730 = vpop.f32.mrb[0].mxu0
    %v2731 = vadd.f32 %v2359, %v2730
    %v2732 = vpop.f32.mrb[0].mxu0
    %v2733 = vadd.f32 %v2363, %v2732
    %v2734 = vpop.f32.mrb[0].mxu0
    %v2735 = vadd.f32 %v2359, %v2734
    %v2736 = vpop.f32.mrb[0].mxu0
    %v2737 = vadd.f32 %v2363, %v2736
    %2738 = vmatprep.mubr.bf16.mxu0 %v2289
    %2739 = vmatmul.mubr.bf16.gmra.mrb[0].mxu0 %v2288
    %v2740 = vpop.f32.mrb[0].mxu0
    %v2741 = vadd.f32 %v2359, %v2740
    %v2742 = vpop.f32.mrb[0].mxu0
    %v2743 = vadd.f32 %v2363, %v2742
    %v2744 = vpop.f32.mrb[0].mxu0
    %v2745 = vadd.f32 %v2359, %v2744
    %v2746 = vpop.f32.mrb[0].mxu0
    %v2747 = vadd.f32 %v2363, %v2746
    %2748 = vmatprep.mubr.bf16.mxu0 %v2292
    %2749 = vmatmul.mubr.bf16.gmra.mrb[0].mxu0 %v2291
    %v2750 = vpop.f32.mrb[0].mxu0
    %v2751 = vadd.f32 %v2359, %v2750
    %v2752 = vpop.f32.mrb[0].mxu0
    %v2753 = vadd.f32 %v2363, %v2752
    %v2754 = vpop.f32.mrb[0].mxu0
    %v2755 = vadd.f32 %v2359, %v2754
    %v2756 = vpop.f32.mrb[0].mxu0
    %v2757 = vadd.f32 %v2363, %v2756
    %2758 = vmatprep.mubr.bf16.mxu0 %v2295
    %2759 = vmatmul.mubr.bf16.gmra.mrb[0].mxu0 %v2294
    %v2760 = vpop.f32.mrb[0].mxu0
    %v2761 = vadd.f32 %v2359, %v2760
    %v2762 = vpop.f32.mrb[0].mxu0
    %v2763 = vadd.f32 %v2363, %v2762
    %v2764 = vpop.f32.mrb[0].mxu0
    %v2765 = vadd.f32 %v2359, %v2764
    %v2766 = vpop.f32.mrb[0].mxu0
    %v2767 = vadd.f32 %v2363, %v2766
    %2768 = vmatprep.mubr.bf16.mxu0 %v2298
    %2769 = vmatmul.mubr.bf16.gmra.mrb[0].mxu0 %v2297
    %v2770 = vpop.f32.mrb[0].mxu0
    %v2771 = vadd.f32 %v2359, %v2770
    %v2772 = vpop.f32.mrb[0].mxu0
    %v2773 = vadd.f32 %v2363, %v2772
    %v2774 = vpop.f32.mrb[0].mxu0
    %v2775 = vadd.f32 %v2359, %v2774
    %v2776 = vpop.f32.mrb[0].mxu0
    %v2777 = vadd.f32 %v2363, %v2776
    %2778 = vmatprep.mubr.bf16.mxu0 %v2301
    %2779 = vmatmul.mubr.bf16.gmra.mrb[0].mxu0 %v2300
    %v2780 = vpop.f32.mrb[0].mxu0
    %v2781 = vadd.f32 %v2359, %v2780
    %v2782 = vpop.f32.mrb[0].mxu0
    %v2783 = vadd.f32 %v2363, %v2782
    %v2784 = vpop.f32.mrb[0].mxu0
    %v2785 = vadd.f32 %v2359, %v2784
    %v2786 = vpop.f32.mrb[0].mxu0
    %v2787 = vadd.f32 %v2363, %v2786
    %2788 = vmatprep.mubr.bf16.mxu0 %v2304
    %2789 = vmatmul.mubr.bf16.gmra.mrb[0].mxu0 %v2303
    %v2790 = vpop.f32.mrb[0].mxu0
    %v2791 = vadd.f32 %v2359, %v2790
    %v2792 = vpop.f32.mrb[0].mxu0
    %v2793 = vadd.f32 %v2363, %v2792
    %v2794 = vpop.f32.mrb[0].mxu0
    %v2795 = vadd.f32 %v2359, %v2794
    %v2796 = vpop.f32.mrb[0].mxu0
    %v2797 = vadd.f32 %v2363, %v2796
    %2798 = vdwg.mxu0
    %2799 = vmatprep.subr.bf16.mxu0 %v2543
    %2800 = vmatpush1.bf16.msra.mxu0 %v2542
    %2801 = vmatprep.subr.bf16.mxu0 %v2545
    %2802 = vmatpush1.bf16.msra.mxu0 %v2544
    %2803 = vmatprep.subr.bf16.mxu0 %v2547
    %2804 = vmatpush1.bf16.msra.mxu0 %v2546
    %2805 = vmatprep.subr.bf16.mxu0 %v2549
    %2806 = vmatpush1.bf16.msra.mxu0 %v2548
    %2807 = vmatprep.subr.bf16.mxu0 %v2551
    %2808 = vmatpush1.bf16.msra.mxu0 %v2550
    %2809 = vmatprep.subr.bf16.mxu0 %v2553
    %2810 = vmatpush1.bf16.msra.mxu0 %v2552
    %2811 = vmatprep.subr.bf16.mxu0 %v2555
    %2812 = vmatpush1.bf16.msra.mxu0 %v2554
    %2813 = vmatprep.subr.bf16.mxu0 %v2557
    %2814 = vmatpush1.bf16.msra.mxu0 %v2556
    %2815 = vmatprep.subr.bf16.mxu0 0
    %2816 = vmatpush1.bf16.msra.mxu0 0
    %2817 = vmatprep.subr.bf16.mxu0 0
    %2818 = vmatpush1.bf16.msra.mxu0 0
    %2819 = vmatprep.subr.bf16.mxu0 0
    %2820 = vmatpush1.bf16.msra.mxu0 0
    %2821 = vmatprep.subr.bf16.mxu0 0
    %2822 = vmatpush1.bf16.msra.mxu0 0
    %2823 = vmatprep.subr.bf16.mxu0 0
    %2824 = vmatpush1.bf16.msra.mxu0 0
    %2825 = vmatprep.subr.bf16.mxu0 0
    %2826 = vmatpush1.bf16.msra.mxu0 0
    %2827 = vmatprep.subr.bf16.mxu0 0
    %2828 = vmatpush1.bf16.msra.mxu0 0
    %2829 = vmatprep.subr.bf16.mxu0 0
    %2830 = vmatpush1.bf16.msra.mxu0 0
    %2831 = vmatprep.mubr.bf16.mxu0 0
    %2832 = vmatmul.mubr.bf16.gmra.mrb[0].mxu0 %v2260
    %v2833 = vpop.f32.mrb[0].mxu0
    %v2834 = vadd.f32 %v2641, %v2833
    %v2835 = vpop.f32.mrb[0].mxu0
    %v2836 = vadd.f32 %v2643, %v2835
    %v2837 = vpop.f32.mrb[0].mxu0
    %v2838 = vadd.f32 %v2645, %v2837
    %v2839 = vpop.f32.mrb[0].mxu0
    %v2840 = vadd.f32 %v2647, %v2839
    %2841 = vmatprep.mubr.bf16.mxu0 0
    %2842 = vmatmul.mubr.bf16.gmra.mrb[0].mxu0 %v2263
    %v2843 = vpop.f32.mrb[0].mxu0
    %v2844 = vadd.f32 %v2651, %v2843
    %v2845 = vpop.f32.mrb[0].mxu0
    %v2846 = vadd.f32 %v2653, %v2845
    %v2847 = vpop.f32.mrb[0].mxu0
    %v2848 = vadd.f32 %v2655, %v2847
    %v2849 = vpop.f32.mrb[0].mxu0
    %v2850 = vadd.f32 %v2657, %v2849
    %2851 = vmatprep.mubr.bf16.mxu0 0
    %2852 = vmatmul.mubr.bf16.gmra.mrb[0].mxu0 %v2266
    %v2853 = vpop.f32.mrb[0].mxu0
    %v2854 = vadd.f32 %v2661, %v2853
    %v2855 = vpop.f32.mrb[0].mxu0
    %v2856 = vadd.f32 %v2663, %v2855
    %v2857 = vpop.f32.mrb[0].mxu0
    %v2858 = vadd.f32 %v2665, %v2857
    %v2859 = vpop.f32.mrb[0].mxu0
    %v2860 = vadd.f32 %v2667, %v2859
    %2861 = vmatprep.mubr.bf16.mxu0 0
    %2862 = vmatmul.mubr.bf16.gmra.mrb[0].mxu0 %v2269
    %v2863 = vpop.f32.mrb[0].mxu0
    %v2864 = vadd.f32 %v2671, %v2863
    %v2865 = vpop.f32.mrb[0].mxu0
    %v2866 = vadd.f32 %v2673, %v2865
    %v2867 = vpop.f32.mrb[0].mxu0
    %v2868 = vadd.f32 %v2675, %v2867
    %v2869 = vpop.f32.mrb[0].mxu0
    %v2870 = vadd.f32 %v2677, %v2869
    %2871 = vmatprep.mubr.bf16.mxu0 0
    %2872 = vmatmul.mubr.bf16.gmra.mrb[0].mxu0 %v2272
    %v2873 = vpop.f32.mrb[0].mxu0
    %v2874 = vadd.f32 %v2681, %v2873
    %v2875 = vpop.f32.mrb[0].mxu0
    %v2876 = vadd.f32 %v2683, %v2875
    %v2877 = vpop.f32.mrb[0].mxu0
    %v2878 = vadd.f32 %v2685, %v2877
    %v2879 = vpop.f32.mrb[0].mxu0
    %v2880 = vadd.f32 %v2687, %v2879
    %2881 = vmatprep.mubr.bf16.mxu0 0
    %2882 = vmatmul.mubr.bf16.gmra.mrb[0].mxu0 %v2275
    %v2883 = vpop.f32.mrb[0].mxu0
    %v2884 = vadd.f32 %v2691, %v2883
    %v2885 = vpop.f32.mrb[0].mxu0
    %v2886 = vadd.f32 %v2693, %v2885
    %v2887 = vpop.f32.mrb[0].mxu0
    %v2888 = vadd.f32 %v2695, %v2887
    %v2889 = vpop.f32.mrb[0].mxu0
    %v2890 = vadd.f32 %v2697, %v2889
    %2891 = vmatprep.mubr.bf16.mxu0 0
    %2892 = vmatmul.mubr.bf16.gmra.mrb[0].mxu0 %v2278
    %v2893 = vpop.f32.mrb[0].mxu0
    %v2894 = vadd.f32 %v2701, %v2893
    %v2895 = vpop.f32.mrb[0].mxu0
    %v2896 = vadd.f32 %v2703, %v2895
    %v2897 = vpop.f32.mrb[0].mxu0
    %v2898 = vadd.f32 %v2705, %v2897
    %v2899 = vpop.f32.mrb[0].mxu0
    %v2900 = vadd.f32 %v2707, %v2899
    %2901 = vmatprep.mubr.bf16.mxu0 0
    %2902 = vmatmul.mubr.bf16.gmra.mrb[0].mxu0 %v2281
    %v2903 = vpop.f32.mrb[0].mxu0
    %v2904 = vadd.f32 %v2711, %v2903
    %v2905 = vpop.f32.mrb[0].mxu0
    %v2906 = vadd.f32 %v2713, %v2905
    %v2907 = vpop.f32.mrb[0].mxu0
    %v2908 = vadd.f32 %v2715, %v2907
    %v2909 = vpop.f32.mrb[0].mxu0
    %v2910 = vadd.f32 %v2717, %v2909
    %2911 = vmatprep.mubr.bf16.mxu0 0
    %2912 = vmatmul.mubr.bf16.gmra.mrb[0].mxu0 %v2284
    %v2913 = vpop.f32.mrb[0].mxu0
    %v2914 = vadd.f32 %v2721, %v2913
    %v2915 = vpop.f32.mrb[0].mxu0
    %v2916 = vadd.f32 %v2723, %v2915
    %v2917 = vpop.f32.mrb[0].mxu0
    %v2918 = vadd.f32 %v2725, %v2917
    %v2919 = vpop.f32.mrb[0].mxu0
    %v2920 = vadd.f32 %v2727, %v2919
    %2921 = vmatprep.mubr.bf16.mxu0 0
    %2922 = vmatmul.mubr.bf16.gmra.mrb[0].mxu0 %v2287
    %v2923 = vpop.f32.mrb[0].mxu0
    %v2924 = vadd.f32 %v2731, %v2923
    %v2925 = vpop.f32.mrb[0].mxu0
    %v2926 = vadd.f32 %v2733, %v2925
    %v2927 = vpop.f32.mrb[0].mxu0
    %v2928 = vadd.f32 %v2735, %v2927
    %v2929 = vpop.f32.mrb[0].mxu0
    %v2930 = vadd.f32 %v2737, %v2929
    %2931 = vmatprep.mubr.bf16.mxu0 0
    %2932 = vmatmul.mubr.bf16.gmra.mrb[0].mxu0 %v2290
    %v2933 = vpop.f32.mrb[0].mxu0
    %v2934 = vadd.f32 %v2741, %v2933
    %v2935 = vpop.f32.mrb[0].mxu0
    %v2936 = vadd.f32 %v2743, %v2935
    %v2937 = vpop.f32.mrb[0].mxu0
    %v2938 = vadd.f32 %v2745, %v2937
    %v2939 = vpop.f32.mrb[0].mxu0
    %v2940 = vadd.f32 %v2747, %v2939
    %2941 = vmatprep.mubr.bf16.mxu0 0
    %2942 = vmatmul.mubr.bf16.gmra.mrb[0].mxu0 %v2293
    %v2943 = vpop.f32.mrb[0].mxu0
    %v2944 = vadd.f32 %v2751, %v2943
    %v2945 = vpop.f32.mrb[0].mxu0
    %v2946 = vadd.f32 %v2753, %v2945
    %v2947 = vpop.f32.mrb[0].mxu0
    %v2948 = vadd.f32 %v2755, %v2947
    %v2949 = vpop.f32.mrb[0].mxu0
    %v2950 = vadd.f32 %v2757, %v2949
    %2951 = vmatprep.mubr.bf16.mxu0 0
    %2952 = vmatmul.mubr.bf16.gmra.mrb[0].mxu0 %v2296
    %v2953 = vpop.f32.mrb[0].mxu0
    %v2954 = vadd.f32 %v2761, %v2953
    %v2955 = vpop.f32.mrb[0].mxu0
    %v2956 = vadd.f32 %v2763, %v2955
    %v2957 = vpop.f32.mrb[0].mxu0
    %v2958 = vadd.f32 %v2765, %v2957
    %v2959 = vpop.f32.mrb[0].mxu0
    %v2960 = vadd.f32 %v2767, %v2959
    %2961 = vmatprep.mubr.bf16.mxu0 0
    %2962 = vmatmul.mubr.bf16.gmra.mrb[0].mxu0 %v2299
    %v2963 = vpop.f32.mrb[0].mxu0
    %v2964 = vadd.f32 %v2771, %v2963
    %v2965 = vpop.f32.mrb[0].mxu0
    %v2966 = vadd.f32 %v2773, %v2965
    %v2967 = vpop.f32.mrb[0].mxu0
    %v2968 = vadd.f32 %v2775, %v2967
    %v2969 = vpop.f32.mrb[0].mxu0
    %v2970 = vadd.f32 %v2777, %v2969
    %2971 = vmatprep.mubr.bf16.mxu0 0
    %2972 = vmatmul.mubr.bf16.gmra.mrb[0].mxu0 %v2302
    %v2973 = vpop.f32.mrb[0].mxu0
    %v2974 = vadd.f32 %v2781, %v2973
    %v2975 = vpop.f32.mrb[0].mxu0
    %v2976 = vadd.f32 %v2783, %v2975
    %v2977 = vpop.f32.mrb[0].mxu0
    %v2978 = vadd.f32 %v2785, %v2977
    %v2979 = vpop.f32.mrb[0].mxu0
    %v2980 = vadd.f32 %v2787, %v2979
    %2981 = vmatprep.mubr.bf16.mxu0 0
    %2982 = vmatmul.mubr.bf16.gmra.mrb[0].mxu0 %v2305
    %v2983 = vpop.f32.mrb[0].mxu0
    %v2984 = vadd.f32 %v2791, %v2983
    %v2985 = vpop.f32.mrb[0].mxu0
    %v2986 = vadd.f32 %v2793, %v2985
    %v2987 = vpop.f32.mrb[0].mxu0
    %v2988 = vadd.f32 %v2795, %v2987
    %v2989 = vpop.f32.mrb[0].mxu0
    %v2990 = vadd.f32 %v2797, %v2989
    %2991 = vdwg.mxu0
    %v2992 = vmax.f32 %v2834, 0.0
    %v2993 = vmax.f32 %v2836, 0.0
    %v2994 = vmax.f32 %v2838, 0.0
    %v2995 = vmax.f32 %v2840, 0.0
    %v2996 = vmax.f32 %v2844, 0.0
    %v2997 = vmax.f32 %v2846, 0.0
    %v2998 = vmax.f32 %v2848, 0.0
    %v2999 = vmax.f32 %v2850, 0.0
    %v3000 = vmax.f32 %v2854, 0.0
    %v3001 = vmax.f32 %v2856, 0.0
    %v3002 = vmax.f32 %v2858, 0.0
    %v3003 = vmax.f32 %v2860, 0.0
    %v3004 = vmax.f32 %v2864, 0.0
    %v3005 = vmax.f32 %v2866, 0.0
    %v3006 = vmax.f32 %v2868, 0.0
    %v3007 = vmax.f32 %v2870, 0.0
    %v3008 = vmax.f32 %v2874, 0.0
    %v3009 = vmax.f32 %v2876, 0.0
    %v3010 = vmax.f32 %v2878, 0.0
    %v3011 = vmax.f32 %v2880, 0.0
    %v3012 = vmax.f32 %v2884, 0.0
    %v3013 = vmax.f32 %v2886, 0.0
    %v3014 = vmax.f32 %v2888, 0.0
    %v3015 = vmax.f32 %v2890, 0.0
    %v3016 = vmax.f32 %v2894, 0.0
    %v3017 = vmax.f32 %v2896, 0.0
    %v3018 = vmax.f32 %v2898, 0.0
    %v3019 = vmax.f32 %v2900, 0.0
    %v3020 = vmax.f32 %v2904, 0.0
    %v3021 = vmax.f32 %v2906, 0.0
    %v3022 = vmax.f32 %v2908, 0.0
    %v3023 = vmax.f32 %v2910, 0.0
    %v3024 = vmax.f32 %v2914, 0.0
    %v3025 = vmax.f32 %v2916, 0.0
    %v3026 = vmax.f32 %v2918, 0.0
    %v3027 = vmax.f32 %v2920, 0.0
    %v3028 = vmax.f32 %v2924, 0.0
    %v3029 = vmax.f32 %v2926, 0.0
    %v3030 = vmax.f32 %v2928, 0.0
    %v3031 = vmax.f32 %v2930, 0.0
    %v3032 = vmax.f32 %v2934, 0.0
    %v3033 = vmax.f32 %v2936, 0.0
    %v3034 = vmax.f32 %v2938, 0.0
    %v3035 = vmax.f32 %v2940, 0.0
    %v3036 = vmax.f32 %v2944, 0.0
    %v3037 = vmax.f32 %v2946, 0.0
    %v3038 = vmax.f32 %v2948, 0.0
    %v3039 = vmax.f32 %v2950, 0.0
    %v3040 = vmax.f32 %v2954, 0.0
    %v3041 = vmax.f32 %v2956, 0.0
    %v3042 = vmax.f32 %v2958, 0.0
    %v3043 = vmax.f32 %v2960, 0.0
    %v3044 = vmax.f32 %v2964, 0.0
    %v3045 = vmax.f32 %v2966, 0.0
    %v3046 = vmax.f32 %v2968, 0.0
    %v3047 = vmax.f32 %v2970, 0.0
    %v3048 = vmax.f32 %v2974, 0.0
    %v3049 = vmax.f32 %v2976, 0.0
    %v3050 = vmax.f32 %v2978, 0.0
    %v3051 = vmax.f32 %v2980, 0.0
    %v3052 = vmax.f32 %v2984, 0.0
    %v3053 = vmax.f32 %v2986, 0.0
    %v3054 = vmax.f32 %v2988, 0.0
    %v3055 = vmax.f32 %v2990, 0.0
    %v3056 = vpack.c.bf16 %v2994, %v2992
    %v3057 = vpack.c.bf16 %v2995, %v2993
    %v3058 = vpack.c.bf16 %v2998, %v2996
    %v3059 = vpack.c.bf16 %v2999, %v2997
    %v3060 = vpack.c.bf16 %v3002, %v3000
    %v3061 = vpack.c.bf16 %v3003, %v3001
    %v3062 = vpack.c.bf16 %v3006, %v3004
    %v3063 = vpack.c.bf16 %v3007, %v3005
    %v3064 = vpack.c.bf16 %v3010, %v3008
    %v3065 = vpack.c.bf16 %v3011, %v3009
    %v3066 = vpack.c.bf16 %v3014, %v3012
    %v3067 = vpack.c.bf16 %v3015, %v3013
    %v3068 = vpack.c.bf16 %v3018, %v3016
    %v3069 = vpack.c.bf16 %v3019, %v3017
    %v3070 = vpack.c.bf16 %v3022, %v3020
    %v3071 = vpack.c.bf16 %v3023, %v3021
    %v3072 = vpack.c.bf16 %v3026, %v3024
    %v3073 = vpack.c.bf16 %v3027, %v3025
    %v3074 = vpack.c.bf16 %v3030, %v3028
    %v3075 = vpack.c.bf16 %v3031, %v3029
    %v3076 = vpack.c.bf16 %v3034, %v3032
    %v3077 = vpack.c.bf16 %v3035, %v3033
    %v3078 = vpack.c.bf16 %v3038, %v3036
    %v3079 = vpack.c.bf16 %v3039, %v3037
    %v3080 = vpack.c.bf16 %v3042, %v3040
    %v3081 = vpack.c.bf16 %v3043, %v3041
    %v3082 = vpack.c.bf16 %v3046, %v3044
    %v3083 = vpack.c.bf16 %v3047, %v3045
    %v3084 = vpack.c.bf16 %v3050, %v3048
    %v3085 = vpack.c.bf16 %v3051, %v3049
    %v3086 = vpack.c.bf16 %v3054, %v3052
    %v3087 = vpack.c.bf16 %v3055, %v3053
    %v3088 = vld [vmem:[%s7] sm:$0xf]
    %v3089 = vld [vmem:[%s7 + $0x4] sm:$0xf]
    %v3090 = vld [vmem:[%s7 + $0x8] sm:$0xf]
    %v3091 = vld [vmem:[%s7 + $0xc] sm:$0xf]
    %v3092 = vld [vmem:[%s7 + $0x10] sm:$0xf]
    %v3093 = vld [vmem:[%s7 + $0x14] sm:$0xf]
    %v3094 = vld [vmem:[%s7 + $0x18] sm:$0xf]
    %v3095 = vld [vmem:[%s7 + $0x1c] sm:$0xf]
    %v3096 = vld [vmem:[%s7 + $0x20] sm:$0xf]
    %v3097 = vld [vmem:[%s7 + $0x24] sm:$0xf]
    %v3098 = vld [vmem:[%s7 + $0x28] sm:$0xf]
    %v3099 = vld [vmem:[%s7 + $0x2c] sm:$0xf]
    %v3100 = vld [vmem:[%s7 + $0x30] sm:$0xf]
    %v3101 = vld [vmem:[%s7 + $0x34] sm:$0xf]
    %v3102 = vld [vmem:[%s7 + $0x38] sm:$0xf]
    %v3103 = vld [vmem:[%s7 + $0x3c] sm:$0xf]
    %v3104 = vld [vmem:[%s7 + $0x40] sm:$0xf]
    %v3105 = vld [vmem:[%s7 + $0x44] sm:$0xf]
    %v3106 = vld [vmem:[%s7 + $0x48] sm:$0xf]
    %v3107 = vld [vmem:[%s7 + $0x4c] sm:$0xf]
    %v3108 = vld [vmem:[%s7 + $0x50] sm:$0xf]
    %v3109 = vld [vmem:[%s7 + $0x54] sm:$0xf]
    %v3110 = vld [vmem:[%s7 + $0x58] sm:$0xf]
    %v3111 = vld [vmem:[%s7 + $0x5c] sm:$0xf]
    %v3112 = vld [vmem:[%s7 + $0x60] sm:$0xf]
    %v3113 = vld [vmem:[%s7 + $0x64] sm:$0xf]
    %v3114 = vld [vmem:[%s7 + $0x68] sm:$0xf]
    %v3115 = vld [vmem:[%s7 + $0x6c] sm:$0xf]
    %v3116 = vld [vmem:[%s7 + $0x70] sm:$0xf]
    %v3117 = vld [vmem:[%s7 + $0x74] sm:$0xf]
    %v3118 = vld [vmem:[%s7 + $0x78] sm:$0xf]
    %v3119 = vld [vmem:[%s7 + $0x7c] sm:$0xf]
    %v3120 = vld [vmem:[%s8] sm:$0x1]
    %v3122 = vlaneseq
    %v3123 = vshrl.u32 %v3122, 7
    %v3124 = vsub.s32 0, %v3123
    %v3125 = vrot.slane %v3120, %v3124
    %v3159 = vunpack.c.l.b16 %v3088
    %v3160 = vunpack.c.l.b16 %v3089
    %v3161 = vunpack.c.l.b16 %v3090
    %v3162 = vunpack.c.l.b16 %v3091
    %v3163 = vunpack.c.l.b16 %v3092
    %v3164 = vunpack.c.l.b16 %v3093
    %v3165 = vunpack.c.l.b16 %v3094
    %v3166 = vunpack.c.l.b16 %v3095
    %v3167 = vunpack.c.l.b16 %v3096
    %v3168 = vunpack.c.l.b16 %v3097
    %v3169 = vunpack.c.l.b16 %v3098
    %v3170 = vunpack.c.l.b16 %v3099
    %v3171 = vunpack.c.l.b16 %v3100
    %v3172 = vunpack.c.l.b16 %v3101
    %v3173 = vunpack.c.l.b16 %v3102
    %v3174 = vunpack.c.l.b16 %v3103
    %v3175 = vunpack.c.l.b16 %v3104
    %v3176 = vunpack.c.l.b16 %v3105
    %v3177 = vunpack.c.l.b16 %v3106
    %v3178 = vunpack.c.l.b16 %v3107
    %v3179 = vunpack.c.l.b16 %v3108
    %v3180 = vunpack.c.l.b16 %v3109
    %v3181 = vunpack.c.l.b16 %v3110
    %v3182 = vunpack.c.l.b16 %v3111
    %v3183 = vunpack.c.l.b16 %v3112
    %v3184 = vunpack.c.l.b16 %v3113
    %v3185 = vunpack.c.l.b16 %v3114
    %v3186 = vunpack.c.l.b16 %v3115
    %v3187 = vunpack.c.l.b16 %v3116
    %v3188 = vunpack.c.l.b16 %v3117
    %v3189 = vunpack.c.l.b16 %v3118
    %v3190 = vunpack.c.l.b16 %v3119
    %v3191 = vpack.c.b16 %v3160, %v3159
    %v3192 = vpack.c.b16 %v3162, %v3161
    %v3193 = vpack.c.b16 %v3164, %v3163
    %v3194 = vpack.c.b16 %v3166, %v3165
    %v3195 = vpack.c.b16 %v3168, %v3167
    %v3196 = vpack.c.b16 %v3170, %v3169
    %v3197 = vpack.c.b16 %v3172, %v3171
    %v3198 = vpack.c.b16 %v3174, %v3173
    %v3199 = vpack.c.b16 %v3176, %v3175
    %v3200 = vpack.c.b16 %v3178, %v3177
    %v3201 = vpack.c.b16 %v3180, %v3179
    %v3202 = vpack.c.b16 %v3182, %v3181
    %v3203 = vpack.c.b16 %v3184, %v3183
    %v3204 = vpack.c.b16 %v3186, %v3185
    %v3205 = vpack.c.b16 %v3188, %v3187
    %v3206 = vpack.c.b16 %v3190, %v3189
    %3223 = vmatprep.subr.bf16.mxu0 0
    %3224 = vmatpush1.bf16.msra.mxu0 %v3191
    %3225 = vmatprep.subr.bf16.mxu0 0
    %3226 = vmatpush1.bf16.msra.mxu0 %v3192
    %3227 = vmatprep.subr.bf16.mxu0 0
    %3228 = vmatpush1.bf16.msra.mxu0 %v3193
    %3229 = vmatprep.subr.bf16.mxu0 0
    %3230 = vmatpush1.bf16.msra.mxu0 %v3194
    %3231 = vmatprep.subr.bf16.mxu0 0
    %3232 = vmatpush1.bf16.msra.mxu0 %v3195
    %3233 = vmatprep.subr.bf16.mxu0 0
    %3234 = vmatpush1.bf16.msra.mxu0 %v3196
    %3235 = vmatprep.subr.bf16.mxu0 0
    %3236 = vmatpush1.bf16.msra.mxu0 %v3197
    %3237 = vmatprep.subr.bf16.mxu0 0
    %3238 = vmatpush1.bf16.msra.mxu0 %v3198
    %3239 = vmatprep.subr.bf16.mxu0 0
    %3240 = vmatpush1.bf16.msra.mxu0 %v3199
    %3241 = vmatprep.subr.bf16.mxu0 0
    %3242 = vmatpush1.bf16.msra.mxu0 %v3200
    %3243 = vmatprep.subr.bf16.mxu0 0
    %3244 = vmatpush1.bf16.msra.mxu0 %v3201
    %3245 = vmatprep.subr.bf16.mxu0 0
    %3246 = vmatpush1.bf16.msra.mxu0 %v3202
    %3247 = vmatprep.subr.bf16.mxu0 0
    %3248 = vmatpush1.bf16.msra.mxu0 %v3203
    %3249 = vmatprep.subr.bf16.mxu0 0
    %3250 = vmatpush1.bf16.msra.mxu0 %v3204
    %3251 = vmatprep.subr.bf16.mxu0 0
    %3252 = vmatpush1.bf16.msra.mxu0 %v3205
    %3253 = vmatprep.subr.bf16.mxu0 0
    %3254 = vmatpush1.bf16.msra.mxu0 %v3206
    %3255 = vmatprep.mubr.bf16.mxu0 %v3057
    %3256 = vmatmul.mubr.bf16.gmra.mrb[0].mxu0 %v3056
    %v3257 = vpop.f32.mrb[0].mxu0
    %v3258 = vadd.f32 %v3125, %v3257
    %v3259 = vpop.f32.mrb[0].mxu0
    %v3260 = vpop.f32.mrb[0].mxu0
    %v3261 = vadd.f32 %v3125, %v3260
    %v3262 = vpop.f32.mrb[0].mxu0
    %3263 = vmatprep.mubr.bf16.mxu0 %v3059
    %3264 = vmatmul.mubr.bf16.gmra.mrb[0].mxu0 %v3058
    %v3265 = vpop.f32.mrb[0].mxu0
    %v3266 = vadd.f32 %v3125, %v3265
    %v3267 = vpop.f32.mrb[0].mxu0
    %v3268 = vpop.f32.mrb[0].mxu0
    %v3269 = vadd.f32 %v3125, %v3268
    %v3270 = vpop.f32.mrb[0].mxu0
    %3271 = vmatprep.mubr.bf16.mxu0 %v3061
    %3272 = vmatmul.mubr.bf16.gmra.mrb[0].mxu0 %v3060
    %v3273 = vpop.f32.mrb[0].mxu0
    %v3274 = vadd.f32 %v3125, %v3273
    %v3275 = vpop.f32.mrb[0].mxu0
    %v3276 = vpop.f32.mrb[0].mxu0
    %v3277 = vadd.f32 %v3125, %v3276
    %v3278 = vpop.f32.mrb[0].mxu0
    %3279 = vmatprep.mubr.bf16.mxu0 %v3063
    %3280 = vmatmul.mubr.bf16.gmra.mrb[0].mxu0 %v3062
    %v3281 = vpop.f32.mrb[0].mxu0
    %v3282 = vadd.f32 %v3125, %v3281
    %v3283 = vpop.f32.mrb[0].mxu0
    %v3284 = vpop.f32.mrb[0].mxu0
    %v3285 = vadd.f32 %v3125, %v3284
    %v3286 = vpop.f32.mrb[0].mxu0
    %3287 = vmatprep.mubr.bf16.mxu0 %v3065
    %3288 = vmatmul.mubr.bf16.gmra.mrb[0].mxu0 %v3064
    %v3289 = vpop.f32.mrb[0].mxu0
    %v3290 = vadd.f32 %v3125, %v3289
    %v3291 = vpop.f32.mrb[0].mxu0
    %v3292 = vpop.f32.mrb[0].mxu0
    %v3293 = vadd.f32 %v3125, %v3292
    %v3294 = vpop.f32.mrb[0].mxu0
    %3295 = vmatprep.mubr.bf16.mxu0 %v3067
    %3296 = vmatmul.mubr.bf16.gmra.mrb[0].mxu0 %v3066
    %v3297 = vpop.f32.mrb[0].mxu0
    %v3298 = vadd.f32 %v3125, %v3297
    %v3299 = vpop.f32.mrb[0].mxu0
    %v3300 = vpop.f32.mrb[0].mxu0
    %v3301 = vadd.f32 %v3125, %v3300
    %v3302 = vpop.f32.mrb[0].mxu0
    %3303 = vmatprep.mubr.bf16.mxu0 %v3069
    %3304 = vmatmul.mubr.bf16.gmra.mrb[0].mxu0 %v3068
    %v3305 = vpop.f32.mrb[0].mxu0
    %v3306 = vadd.f32 %v3125, %v3305
    %v3307 = vpop.f32.mrb[0].mxu0
    %v3308 = vpop.f32.mrb[0].mxu0
    %v3309 = vadd.f32 %v3125, %v3308
    %v3310 = vpop.f32.mrb[0].mxu0
    %3311 = vmatprep.mubr.bf16.mxu0 %v3071
    %3312 = vmatmul.mubr.bf16.gmra.mrb[0].mxu0 %v3070
    %v3313 = vpop.f32.mrb[0].mxu0
    %v3314 = vadd.f32 %v3125, %v3313
    %v3315 = vpop.f32.mrb[0].mxu0
    %v3316 = vpop.f32.mrb[0].mxu0
    %v3317 = vadd.f32 %v3125, %v3316
    %v3318 = vpop.f32.mrb[0].mxu0
    %3319 = vmatprep.mubr.bf16.mxu0 %v3073
    %3320 = vmatmul.mubr.bf16.gmra.mrb[0].mxu0 %v3072
    %v3321 = vpop.f32.mrb[0].mxu0
    %v3322 = vadd.f32 %v3125, %v3321
    %v3323 = vpop.f32.mrb[0].mxu0
    %v3324 = vpop.f32.mrb[0].mxu0
    %v3325 = vadd.f32 %v3125, %v3324
    %v3326 = vpop.f32.mrb[0].mxu0
    %3327 = vmatprep.mubr.bf16.mxu0 %v3075
    %3328 = vmatmul.mubr.bf16.gmra.mrb[0].mxu0 %v3074
    %v3329 = vpop.f32.mrb[0].mxu0
    %v3330 = vadd.f32 %v3125, %v3329
    %v3331 = vpop.f32.mrb[0].mxu0
    %v3332 = vpop.f32.mrb[0].mxu0
    %v3333 = vadd.f32 %v3125, %v3332
    %v3334 = vpop.f32.mrb[0].mxu0
    %3335 = vmatprep.mubr.bf16.mxu0 %v3077
    %3336 = vmatmul.mubr.bf16.gmra.mrb[0].mxu0 %v3076
    %v3337 = vpop.f32.mrb[0].mxu0
    %v3338 = vadd.f32 %v3125, %v3337
    %v3339 = vpop.f32.mrb[0].mxu0
    %v3340 = vpop.f32.mrb[0].mxu0
    %v3341 = vadd.f32 %v3125, %v3340
    %v3342 = vpop.f32.mrb[0].mxu0
    %3343 = vmatprep.mubr.bf16.mxu0 %v3079
    %3344 = vmatmul.mubr.bf16.gmra.mrb[0].mxu0 %v3078
    %v3345 = vpop.f32.mrb[0].mxu0
    %v3346 = vadd.f32 %v3125, %v3345
    %v3347 = vpop.f32.mrb[0].mxu0
    %v3348 = vpop.f32.mrb[0].mxu0
    %v3349 = vadd.f32 %v3125, %v3348
    %v3350 = vpop.f32.mrb[0].mxu0
    %3351 = vmatprep.mubr.bf16.mxu0 %v3081
    %3352 = vmatmul.mubr.bf16.gmra.mrb[0].mxu0 %v3080
    %v3353 = vpop.f32.mrb[0].mxu0
    %v3354 = vadd.f32 %v3125, %v3353
    %v3355 = vpop.f32.mrb[0].mxu0
    %v3356 = vpop.f32.mrb[0].mxu0
    %v3357 = vadd.f32 %v3125, %v3356
    %v3358 = vpop.f32.mrb[0].mxu0
    %3359 = vmatprep.mubr.bf16.mxu0 %v3083
    %3360 = vmatmul.mubr.bf16.gmra.mrb[0].mxu0 %v3082
    %v3361 = vpop.f32.mrb[0].mxu0
    %v3362 = vadd.f32 %v3125, %v3361
    %v3363 = vpop.f32.mrb[0].mxu0
    %v3364 = vpop.f32.mrb[0].mxu0
    %v3365 = vadd.f32 %v3125, %v3364
    %v3366 = vpop.f32.mrb[0].mxu0
    %3367 = vmatprep.mubr.bf16.mxu0 %v3085
    %3368 = vmatmul.mubr.bf16.gmra.mrb[0].mxu0 %v3084
    %v3369 = vpop.f32.mrb[0].mxu0
    %v3370 = vadd.f32 %v3125, %v3369
    %v3371 = vpop.f32.mrb[0].mxu0
    %v3372 = vpop.f32.mrb[0].mxu0
    %v3373 = vadd.f32 %v3125, %v3372
    %v3374 = vpop.f32.mrb[0].mxu0
    %3375 = vmatprep.mubr.bf16.mxu0 %v3087
    %3376 = vmatmul.mubr.bf16.gmra.mrb[0].mxu0 %v3086
    %v3377 = vpop.f32.mrb[0].mxu0
    %v3378 = vadd.f32 %v3125, %v3377
    %v3379 = vpop.f32.mrb[0].mxu0
    %v3380 = vpop.f32.mrb[0].mxu0
    %v3381 = vadd.f32 %v3125, %v3380
    %v3382 = vpop.f32.mrb[0].mxu0
    %3383 = vdwg.mxu0
    %v3384 = vmax.f32 %v3258, 0.0
    %v3385 = vmax.f32 %v3261, 0.0
    %v3386 = vmax.f32 %v3266, 0.0
    %v3387 = vmax.f32 %v3269, 0.0
    %v3388 = vmax.f32 %v3274, 0.0
    %v3389 = vmax.f32 %v3277, 0.0
    %v3390 = vmax.f32 %v3282, 0.0
    %v3391 = vmax.f32 %v3285, 0.0
    %v3392 = vmax.f32 %v3290, 0.0
    %v3393 = vmax.f32 %v3293, 0.0
    %v3394 = vmax.f32 %v3298, 0.0
    %v3395 = vmax.f32 %v3301, 0.0
    %v3396 = vmax.f32 %v3306, 0.0
    %v3397 = vmax.f32 %v3309, 0.0
    %v3398 = vmax.f32 %v3314, 0.0
    %v3399 = vmax.f32 %v3317, 0.0
    %v3400 = vmax.f32 %v3322, 0.0
    %v3401 = vmax.f32 %v3325, 0.0
    %v3402 = vmax.f32 %v3330, 0.0
    %v3403 = vmax.f32 %v3333, 0.0
    %v3404 = vmax.f32 %v3338, 0.0
    %v3405 = vmax.f32 %v3341, 0.0
    %v3406 = vmax.f32 %v3346, 0.0
    %v3407 = vmax.f32 %v3349, 0.0
    %v3408 = vmax.f32 %v3354, 0.0
    %v3409 = vmax.f32 %v3357, 0.0
    %v3410 = vmax.f32 %v3362, 0.0
    %v3411 = vmax.f32 %v3365, 0.0
    %v3412 = vmax.f32 %v3370, 0.0
    %v3413 = vmax.f32 %v3373, 0.0
    %v3414 = vmax.f32 %v3378, 0.0
    %v3415 = vmax.f32 %v3381, 0.0
    %v3416 = vpack.c.bf16 %v3385, %v3384
    %v3417 = vpack.c.bf16 %v3387, %v3386
    %v3418 = vpack.c.bf16 %v3389, %v3388
    %v3419 = vpack.c.bf16 %v3391, %v3390
    %v3420 = vpack.c.bf16 %v3393, %v3392
    %v3421 = vpack.c.bf16 %v3395, %v3394
    %v3422 = vpack.c.bf16 %v3397, %v3396
    %v3423 = vpack.c.bf16 %v3399, %v3398
    %v3424 = vpack.c.bf16 %v3401, %v3400
    %v3425 = vpack.c.bf16 %v3403, %v3402
    %v3426 = vpack.c.bf16 %v3405, %v3404
    %v3427 = vpack.c.bf16 %v3407, %v3406
    %v3428 = vpack.c.bf16 %v3409, %v3408
    %v3429 = vpack.c.bf16 %v3411, %v3410
    %v3430 = vpack.c.bf16 %v3413, %v3412
    %v3431 = vpack.c.bf16 %v3415, %v3414
    %v3432 = vld [vmem:[%s9] sm:$0xf]
    %v3433 = vld [vmem:[%s9 + $0x4] sm:$0xf]
    %v3434 = vld [vmem:[%s9 + $0x8] sm:$0xf]
    %v3435 = vld [vmem:[%s9 + $0xc] sm:$0xf]
    %v3436 = vld [vmem:[%s9 + $0x10] sm:$0xf]
    %v3437 = vld [vmem:[%s9 + $0x14] sm:$0xf]
    %v3438 = vld [vmem:[%s9 + $0x18] sm:$0xf]
    %v3439 = vld [vmem:[%s9 + $0x1c] sm:$0xf]
    %v3440 = vld [vmem:[%s9 + $0x20] sm:$0xf]
    %v3441 = vld [vmem:[%s9 + $0x24] sm:$0xf]
    %v3442 = vld [vmem:[%s9 + $0x28] sm:$0xf]
    %v3443 = vld [vmem:[%s9 + $0x2c] sm:$0xf]
    %v3444 = vld [vmem:[%s9 + $0x30] sm:$0xf]
    %v3445 = vld [vmem:[%s9 + $0x34] sm:$0xf]
    %v3446 = vld [vmem:[%s9 + $0x38] sm:$0xf]
    %v3447 = vld [vmem:[%s9 + $0x3c] sm:$0xf]
    %v3448 = vld [vmem:[%s10] sm:$0x1]
    %v3450 = vlaneseq
    %v3451 = vshrl.u32 %v3450, 7
    %v3452 = vsub.s32 0, %v3451
    %v3453 = vrot.slane %v3448, %v3452
    %v3471 = vunpack.c.l.b16 %v3432
    %v3472 = vunpack.c.l.b16 %v3433
    %v3473 = vunpack.c.l.b16 %v3434
    %v3474 = vunpack.c.l.b16 %v3435
    %v3475 = vunpack.c.l.b16 %v3436
    %v3476 = vunpack.c.l.b16 %v3437
    %v3477 = vunpack.c.l.b16 %v3438
    %v3478 = vunpack.c.l.b16 %v3439
    %v3479 = vunpack.c.l.b16 %v3440
    %v3480 = vunpack.c.l.b16 %v3441
    %v3481 = vunpack.c.l.b16 %v3442
    %v3482 = vunpack.c.l.b16 %v3443
    %v3483 = vunpack.c.l.b16 %v3444
    %v3484 = vunpack.c.l.b16 %v3445
    %v3485 = vunpack.c.l.b16 %v3446
    %v3486 = vunpack.c.l.b16 %v3447
    %v3487 = vpack.c.b16 %v3472, %v3471
    %v3488 = vpack.c.b16 %v3474, %v3473
    %v3489 = vpack.c.b16 %v3476, %v3475
    %v3490 = vpack.c.b16 %v3478, %v3477
    %v3491 = vpack.c.b16 %v3480, %v3479
    %v3492 = vpack.c.b16 %v3482, %v3481
    %v3493 = vpack.c.b16 %v3484, %v3483
    %v3494 = vpack.c.b16 %v3486, %v3485
    %3503 = vmatprep.subr.bf16.mxu0 0
    %3504 = vmatpush1.bf16.msra.mxu0 %v3487
    %3505 = vmatprep.subr.bf16.mxu0 0
    %3506 = vmatpush1.bf16.msra.mxu0 %v3488
    %3507 = vmatprep.subr.bf16.mxu0 0
    %3508 = vmatpush1.bf16.msra.mxu0 %v3489
    %3509 = vmatprep.subr.bf16.mxu0 0
    %3510 = vmatpush1.bf16.msra.mxu0 %v3490
    %3511 = vmatprep.subr.bf16.mxu0 0
    %3512 = vmatpush1.bf16.msra.mxu0 %v3491
    %3513 = vmatprep.subr.bf16.mxu0 0
    %3514 = vmatpush1.bf16.msra.mxu0 %v3492
    %3515 = vmatprep.subr.bf16.mxu0 0
    %3516 = vmatpush1.bf16.msra.mxu0 %v3493
    %3517 = vmatprep.subr.bf16.mxu0 0
    %3518 = vmatpush1.bf16.msra.mxu0 %v3494
    %3519 = vmatprep.subr.bf16.mxu0 0
    %3520 = vmatpush1.bf16.msra.mxu0 0
    %3521 = vmatprep.subr.bf16.mxu0 0
    %3522 = vmatpush1.bf16.msra.mxu0 0
    %3523 = vmatprep.subr.bf16.mxu0 0
    %3524 = vmatpush1.bf16.msra.mxu0 0
    %3525 = vmatprep.subr.bf16.mxu0 0
    %3526 = vmatpush1.bf16.msra.mxu0 0
    %3527 = vmatprep.subr.bf16.mxu0 0
    %3528 = vmatpush1.bf16.msra.mxu0 0
    %3529 = vmatprep.subr.bf16.mxu0 0
    %3530 = vmatpush1.bf16.msra.mxu0 0
    %3531 = vmatprep.subr.bf16.mxu0 0
    %3532 = vmatpush1.bf16.msra.mxu0 0
    %3533 = vmatprep.subr.bf16.mxu0 0
    %3534 = vmatpush1.bf16.msra.mxu0 0
    %3535 = vmatprep.mubr.bf16.mxu0 0
    %3536 = vmatmul.mubr.bf16.gmra.mrb[0].mxu0 %v3416
    %v3537 = vpop.f32.mrb[0].mxu0
    %v3538 = vadd.f32 %v3453, %v3537
    %v3539 = vpop.f32.mrb[0].mxu0
    %v3540 = vpop.f32.mrb[0].mxu0
    %v3541 = vadd.f32 %v3453, %v3540
    %v3542 = vpop.f32.mrb[0].mxu0
    %3543 = vmatprep.mubr.bf16.mxu0 0
    %3544 = vmatmul.mubr.bf16.gmra.mrb[0].mxu0 %v3417
    %v3545 = vpop.f32.mrb[0].mxu0
    %v3546 = vadd.f32 %v3453, %v3545
    %v3547 = vpop.f32.mrb[0].mxu0
    %v3548 = vpop.f32.mrb[0].mxu0
    %v3549 = vadd.f32 %v3453, %v3548
    %v3550 = vpop.f32.mrb[0].mxu0
    %3551 = vmatprep.mubr.bf16.mxu0 0
    %3552 = vmatmul.mubr.bf16.gmra.mrb[0].mxu0 %v3418
    %v3553 = vpop.f32.mrb[0].mxu0
    %v3554 = vadd.f32 %v3453, %v3553
    %v3555 = vpop.f32.mrb[0].mxu0
    %v3556 = vpop.f32.mrb[0].mxu0
    %v3557 = vadd.f32 %v3453, %v3556
    %v3558 = vpop.f32.mrb[0].mxu0
    %3559 = vmatprep.mubr.bf16.mxu0 0
    %3560 = vmatmul.mubr.bf16.gmra.mrb[0].mxu0 %v3419
    %v3561 = vpop.f32.mrb[0].mxu0
    %v3562 = vadd.f32 %v3453, %v3561
    %v3563 = vpop.f32.mrb[0].mxu0
    %v3564 = vpop.f32.mrb[0].mxu0
    %v3565 = vadd.f32 %v3453, %v3564
    %v3566 = vpop.f32.mrb[0].mxu0
    %3567 = vmatprep.mubr.bf16.mxu0 0
    %3568 = vmatmul.mubr.bf16.gmra.mrb[0].mxu0 %v3420
    %v3569 = vpop.f32.mrb[0].mxu0
    %v3570 = vadd.f32 %v3453, %v3569
    %v3571 = vpop.f32.mrb[0].mxu0
    %v3572 = vpop.f32.mrb[0].mxu0
    %v3573 = vadd.f32 %v3453, %v3572
    %v3574 = vpop.f32.mrb[0].mxu0
    %3575 = vmatprep.mubr.bf16.mxu0 0
    %3576 = vmatmul.mubr.bf16.gmra.mrb[0].mxu0 %v3421
    %v3577 = vpop.f32.mrb[0].mxu0
    %v3578 = vadd.f32 %v3453, %v3577
    %v3579 = vpop.f32.mrb[0].mxu0
    %v3580 = vpop.f32.mrb[0].mxu0
    %v3581 = vadd.f32 %v3453, %v3580
    %v3582 = vpop.f32.mrb[0].mxu0
    %3583 = vmatprep.mubr.bf16.mxu0 0
    %3584 = vmatmul.mubr.bf16.gmra.mrb[0].mxu0 %v3422
    %v3585 = vpop.f32.mrb[0].mxu0
    %v3586 = vadd.f32 %v3453, %v3585
    %v3587 = vpop.f32.mrb[0].mxu0
    %v3588 = vpop.f32.mrb[0].mxu0
    %v3589 = vadd.f32 %v3453, %v3588
    %v3590 = vpop.f32.mrb[0].mxu0
    %3591 = vmatprep.mubr.bf16.mxu0 0
    %3592 = vmatmul.mubr.bf16.gmra.mrb[0].mxu0 %v3423
    %v3593 = vpop.f32.mrb[0].mxu0
    %v3594 = vadd.f32 %v3453, %v3593
    %v3595 = vpop.f32.mrb[0].mxu0
    %v3596 = vpop.f32.mrb[0].mxu0
    %v3597 = vadd.f32 %v3453, %v3596
    %v3598 = vpop.f32.mrb[0].mxu0
    %3599 = vmatprep.mubr.bf16.mxu0 0
    %3600 = vmatmul.mubr.bf16.gmra.mrb[0].mxu0 %v3424
    %v3601 = vpop.f32.mrb[0].mxu0
    %v3602 = vadd.f32 %v3453, %v3601
    %v3603 = vpop.f32.mrb[0].mxu0
    %v3604 = vpop.f32.mrb[0].mxu0
    %v3605 = vadd.f32 %v3453, %v3604
    %v3606 = vpop.f32.mrb[0].mxu0
    %3607 = vmatprep.mubr.bf16.mxu0 0
    %3608 = vmatmul.mubr.bf16.gmra.mrb[0].mxu0 %v3425
    %v3609 = vpop.f32.mrb[0].mxu0
    %v3610 = vadd.f32 %v3453, %v3609
    %v3611 = vpop.f32.mrb[0].mxu0
    %v3612 = vpop.f32.mrb[0].mxu0
    %v3613 = vadd.f32 %v3453, %v3612
    %v3614 = vpop.f32.mrb[0].mxu0
    %3615 = vmatprep.mubr.bf16.mxu0 0
    %3616 = vmatmul.mubr.bf16.gmra.mrb[0].mxu0 %v3426
    %v3617 = vpop.f32.mrb[0].mxu0
    %v3618 = vadd.f32 %v3453, %v3617
    %v3619 = vpop.f32.mrb[0].mxu0
    %v3620 = vpop.f32.mrb[0].mxu0
    %v3621 = vadd.f32 %v3453, %v3620
    %v3622 = vpop.f32.mrb[0].mxu0
    %3623 = vmatprep.mubr.bf16.mxu0 0
    %3624 = vmatmul.mubr.bf16.gmra.mrb[0].mxu0 %v3427
    %v3625 = vpop.f32.mrb[0].mxu0
    %v3626 = vadd.f32 %v3453, %v3625
    %v3627 = vpop.f32.mrb[0].mxu0
    %v3628 = vpop.f32.mrb[0].mxu0
    %v3629 = vadd.f32 %v3453, %v3628
    %v3630 = vpop.f32.mrb[0].mxu0
    %3631 = vmatprep.mubr.bf16.mxu0 0
    %3632 = vmatmul.mubr.bf16.gmra.mrb[0].mxu0 %v3428
    %v3633 = vpop.f32.mrb[0].mxu0
    %v3634 = vadd.f32 %v3453, %v3633
    %v3635 = vpop.f32.mrb[0].mxu0
    %v3636 = vpop.f32.mrb[0].mxu0
    %v3637 = vadd.f32 %v3453, %v3636
    %v3638 = vpop.f32.mrb[0].mxu0
    %3639 = vmatprep.mubr.bf16.mxu0 0
    %3640 = vmatmul.mubr.bf16.gmra.mrb[0].mxu0 %v3429
    %v3641 = vpop.f32.mrb[0].mxu0
    %v3642 = vadd.f32 %v3453, %v3641
    %v3643 = vpop.f32.mrb[0].mxu0
    %v3644 = vpop.f32.mrb[0].mxu0
    %v3645 = vadd.f32 %v3453, %v3644
    %v3646 = vpop.f32.mrb[0].mxu0
    %3647 = vmatprep.mubr.bf16.mxu0 0
    %3648 = vmatmul.mubr.bf16.gmra.mrb[0].mxu0 %v3430
    %v3649 = vpop.f32.mrb[0].mxu0
    %v3650 = vadd.f32 %v3453, %v3649
    %v3651 = vpop.f32.mrb[0].mxu0
    %v3652 = vpop.f32.mrb[0].mxu0
    %v3653 = vadd.f32 %v3453, %v3652
    %v3654 = vpop.f32.mrb[0].mxu0
    %3655 = vmatprep.mubr.bf16.mxu0 0
    %3656 = vmatmul.mubr.bf16.gmra.mrb[0].mxu0 %v3431
    %v3657 = vpop.f32.mrb[0].mxu0
    %v3658 = vadd.f32 %v3453, %v3657
    %v3659 = vpop.f32.mrb[0].mxu0
    %v3660 = vpop.f32.mrb[0].mxu0
    %v3661 = vadd.f32 %v3453, %v3660
    %v3662 = vpop.f32.mrb[0].mxu0
    %3663 = vdwg.mxu0
    %v3664 = vmax.f32 %v3538, 0.0
    %v3665 = vmax.f32 %v3541, 0.0
    %v3666 = vmax.f32 %v3546, 0.0
    %v3667 = vmax.f32 %v3549, 0.0
    %v3668 = vmax.f32 %v3554, 0.0
    %v3669 = vmax.f32 %v3557, 0.0
    %v3670 = vmax.f32 %v3562, 0.0
    %v3671 = vmax.f32 %v3565, 0.0
    %v3672 = vmax.f32 %v3570, 0.0
    %v3673 = vmax.f32 %v3573, 0.0
    %v3674 = vmax.f32 %v3578, 0.0
    %v3675 = vmax.f32 %v3581, 0.0
    %v3676 = vmax.f32 %v3586, 0.0
    %v3677 = vmax.f32 %v3589, 0.0
    %v3678 = vmax.f32 %v3594, 0.0
    %v3679 = vmax.f32 %v3597, 0.0
    %v3680 = vmax.f32 %v3602, 0.0
    %v3681 = vmax.f32 %v3605, 0.0
    %v3682 = vmax.f32 %v3610, 0.0
    %v3683 = vmax.f32 %v3613, 0.0
    %v3684 = vmax.f32 %v3618, 0.0
    %v3685 = vmax.f32 %v3621, 0.0
    %v3686 = vmax.f32 %v3626, 0.0
    %v3687 = vmax.f32 %v3629, 0.0
    %v3688 = vmax.f32 %v3634, 0.0
    %v3689 = vmax.f32 %v3637, 0.0
    %v3690 = vmax.f32 %v3642, 0.0
    %v3691 = vmax.f32 %v3645, 0.0
    %v3692 = vmax.f32 %v3650, 0.0
    %v3693 = vmax.f32 %v3653, 0.0
    %v3694 = vmax.f32 %v3658, 0.0
    %v3695 = vmax.f32 %v3661, 0.0
    %v3696 = vpack.c.bf16 %v3665, %v3664
    %v3697 = vpack.c.bf16 %v3667, %v3666
    %v3698 = vpack.c.bf16 %v3669, %v3668
    %v3699 = vpack.c.bf16 %v3671, %v3670
    %v3700 = vpack.c.bf16 %v3673, %v3672
    %v3701 = vpack.c.bf16 %v3675, %v3674
    %v3702 = vpack.c.bf16 %v3677, %v3676
    %v3703 = vpack.c.bf16 %v3679, %v3678
    %v3704 = vpack.c.bf16 %v3681, %v3680
    %v3705 = vpack.c.bf16 %v3683, %v3682
    %v3706 = vpack.c.bf16 %v3685, %v3684
    %v3707 = vpack.c.bf16 %v3687, %v3686
    %v3708 = vpack.c.bf16 %v3689, %v3688
    %v3709 = vpack.c.bf16 %v3691, %v3690
    %v3710 = vpack.c.bf16 %v3693, %v3692
    %v3711 = vpack.c.bf16 %v3695, %v3694
    %v3712 = vld [vmem:[%s11] sm:$0xf]
    %v3713 = vld [vmem:[%s11 + $0x4] sm:$0xf]
    %v3714 = vld [vmem:[%s11 + $0x8] sm:$0xf]
    %v3715 = vld [vmem:[%s11 + $0xc] sm:$0xf]
    %v3716 = vld [vmem:[%s11 + $0x10] sm:$0xf]
    %v3717 = vld [vmem:[%s11 + $0x14] sm:$0xf]
    %v3718 = vld [vmem:[%s11 + $0x18] sm:$0xf]
    %v3719 = vld [vmem:[%s11 + $0x1c] sm:$0xf]
    %v3720 = vld [vmem:[%s11 + $0x20] sm:$0xf]
    %v3721 = vld [vmem:[%s11 + $0x24] sm:$0xf]
    %v3722 = vld [vmem:[%s11 + $0x28] sm:$0xf]
    %v3723 = vld [vmem:[%s11 + $0x2c] sm:$0xf]
    %v3724 = vld [vmem:[%s11 + $0x30] sm:$0xf]
    %v3725 = vld [vmem:[%s11 + $0x34] sm:$0xf]
    %v3726 = vld [vmem:[%s11 + $0x38] sm:$0xf]
    %v3727 = vld [vmem:[%s11 + $0x3c] sm:$0xf]
    %v3728 = vld [vmem:[%s12] sm:$0x1]
    %v3730 = vlaneseq
    %v3731 = vshrl.u32 %v3730, 7
    %v3732 = vsub.s32 0, %v3731
    %v3733 = vrot.slane %v3728, %v3732
    %v3751 = vunpack.c.l.b16 %v3712
    %v3752 = vunpack.c.l.b16 %v3713
    %v3753 = vunpack.c.l.b16 %v3714
    %v3754 = vunpack.c.l.b16 %v3715
    %v3755 = vunpack.c.l.b16 %v3716
    %v3756 = vunpack.c.l.b16 %v3717
    %v3757 = vunpack.c.l.b16 %v3718
    %v3758 = vunpack.c.l.b16 %v3719
    %v3759 = vunpack.c.l.b16 %v3720
    %v3760 = vunpack.c.l.b16 %v3721
    %v3761 = vunpack.c.l.b16 %v3722
    %v3762 = vunpack.c.l.b16 %v3723
    %v3763 = vunpack.c.l.b16 %v3724
    %v3764 = vunpack.c.l.b16 %v3725
    %v3765 = vunpack.c.l.b16 %v3726
    %v3766 = vunpack.c.l.b16 %v3727
    %v3767 = vpack.c.b16 %v3752, %v3751
    %v3768 = vpack.c.b16 %v3754, %v3753
    %v3769 = vpack.c.b16 %v3756, %v3755
    %v3770 = vpack.c.b16 %v3758, %v3757
    %v3771 = vpack.c.b16 %v3760, %v3759
    %v3772 = vpack.c.b16 %v3762, %v3761
    %v3773 = vpack.c.b16 %v3764, %v3763
    %v3774 = vpack.c.b16 %v3766, %v3765
    %3783 = vmatprep.subr.bf16.mxu0 0
    %3784 = vmatpush1.bf16.msra.mxu0 %v3767
    %3785 = vmatprep.subr.bf16.mxu0 0
    %3786 = vmatpush1.bf16.msra.mxu0 %v3768
    %3787 = vmatprep.subr.bf16.mxu0 0
    %3788 = vmatpush1.bf16.msra.mxu0 %v3769
    %3789 = vmatprep.subr.bf16.mxu0 0
    %3790 = vmatpush1.bf16.msra.mxu0 %v3770
    %3791 = vmatprep.subr.bf16.mxu0 0
    %3792 = vmatpush1.bf16.msra.mxu0 %v3771
    %3793 = vmatprep.subr.bf16.mxu0 0
    %3794 = vmatpush1.bf16.msra.mxu0 %v3772
    %3795 = vmatprep.subr.bf16.mxu0 0
    %3796 = vmatpush1.bf16.msra.mxu0 %v3773
    %3797 = vmatprep.subr.bf16.mxu0 0
    %3798 = vmatpush1.bf16.msra.mxu0 %v3774
    %3799 = vmatprep.subr.bf16.mxu0 0
    %3800 = vmatpush1.bf16.msra.mxu0 0
    %3801 = vmatprep.subr.bf16.mxu0 0
    %3802 = vmatpush1.bf16.msra.mxu0 0
    %3803 = vmatprep.subr.bf16.mxu0 0
    %3804 = vmatpush1.bf16.msra.mxu0 0
    %3805 = vmatprep.subr.bf16.mxu0 0
    %3806 = vmatpush1.bf16.msra.mxu0 0
    %3807 = vmatprep.subr.bf16.mxu0 0
    %3808 = vmatpush1.bf16.msra.mxu0 0
    %3809 = vmatprep.subr.bf16.mxu0 0
    %3810 = vmatpush1.bf16.msra.mxu0 0
    %3811 = vmatprep.subr.bf16.mxu0 0
    %3812 = vmatpush1.bf16.msra.mxu0 0
    %3813 = vmatprep.subr.bf16.mxu0 0
    %3814 = vmatpush1.bf16.msra.mxu0 0
    %3815 = vmatprep.mubr.bf16.mxu0 0
    %3816 = vmatmul.mubr.bf16.gmra.mrb[0].mxu0 %v3696
    %v3817 = vpop.f32.mrb[0].mxu0
    %v3818 = vadd.f32 %v3733, %v3817
    %v3819 = vpop.f32.mrb[0].mxu0
    %v3820 = vpop.f32.mrb[0].mxu0
    %v3821 = vadd.f32 %v3733, %v3820
    %v3822 = vpop.f32.mrb[0].mxu0
    %3823 = vmatprep.mubr.bf16.mxu0 0
    %3824 = vmatmul.mubr.bf16.gmra.mrb[0].mxu0 %v3697
    %v3825 = vpop.f32.mrb[0].mxu0
    %v3826 = vadd.f32 %v3733, %v3825
    %v3827 = vpop.f32.mrb[0].mxu0
    %v3828 = vpop.f32.mrb[0].mxu0
    %v3829 = vadd.f32 %v3733, %v3828
    %v3830 = vpop.f32.mrb[0].mxu0
    %3831 = vmatprep.mubr.bf16.mxu0 0
    %3832 = vmatmul.mubr.bf16.gmra.mrb[0].mxu0 %v3698
    %v3833 = vpop.f32.mrb[0].mxu0
    %v3834 = vadd.f32 %v3733, %v3833
    %v3835 = vpop.f32.mrb[0].mxu0
    %v3836 = vpop.f32.mrb[0].mxu0
    %v3837 = vadd.f32 %v3733, %v3836
    %v3838 = vpop.f32.mrb[0].mxu0
    %3839 = vmatprep.mubr.bf16.mxu0 0
    %3840 = vmatmul.mubr.bf16.gmra.mrb[0].mxu0 %v3699
    %v3841 = vpop.f32.mrb[0].mxu0
    %v3842 = vadd.f32 %v3733, %v3841
    %v3843 = vpop.f32.mrb[0].mxu0
    %v3844 = vpop.f32.mrb[0].mxu0
    %v3845 = vadd.f32 %v3733, %v3844
    %v3846 = vpop.f32.mrb[0].mxu0
    %3847 = vmatprep.mubr.bf16.mxu0 0
    %3848 = vmatmul.mubr.bf16.gmra.mrb[0].mxu0 %v3700
    %v3849 = vpop.f32.mrb[0].mxu0
    %v3850 = vadd.f32 %v3733, %v3849
    %v3851 = vpop.f32.mrb[0].mxu0
    %v3852 = vpop.f32.mrb[0].mxu0
    %v3853 = vadd.f32 %v3733, %v3852
    %v3854 = vpop.f32.mrb[0].mxu0
    %3855 = vmatprep.mubr.bf16.mxu0 0
    %3856 = vmatmul.mubr.bf16.gmra.mrb[0].mxu0 %v3701
    %v3857 = vpop.f32.mrb[0].mxu0
    %v3858 = vadd.f32 %v3733, %v3857
    %v3859 = vpop.f32.mrb[0].mxu0
    %v3860 = vpop.f32.mrb[0].mxu0
    %v3861 = vadd.f32 %v3733, %v3860
    %v3862 = vpop.f32.mrb[0].mxu0
    %3863 = vmatprep.mubr.bf16.mxu0 0
    %3864 = vmatmul.mubr.bf16.gmra.mrb[0].mxu0 %v3702
    %v3865 = vpop.f32.mrb[0].mxu0
    %v3866 = vadd.f32 %v3733, %v3865
    %v3867 = vpop.f32.mrb[0].mxu0
    %v3868 = vpop.f32.mrb[0].mxu0
    %v3869 = vadd.f32 %v3733, %v3868
    %v3870 = vpop.f32.mrb[0].mxu0
    %3871 = vmatprep.mubr.bf16.mxu0 0
    %3872 = vmatmul.mubr.bf16.gmra.mrb[0].mxu0 %v3703
    %v3873 = vpop.f32.mrb[0].mxu0
    %v3874 = vadd.f32 %v3733, %v3873
    %v3875 = vpop.f32.mrb[0].mxu0
    %v3876 = vpop.f32.mrb[0].mxu0
    %v3877 = vadd.f32 %v3733, %v3876
    %v3878 = vpop.f32.mrb[0].mxu0
    %3879 = vmatprep.mubr.bf16.mxu0 0
    %3880 = vmatmul.mubr.bf16.gmra.mrb[0].mxu0 %v3704
    %v3881 = vpop.f32.mrb[0].mxu0
    %v3882 = vadd.f32 %v3733, %v3881
    %v3883 = vpop.f32.mrb[0].mxu0
    %v3884 = vpop.f32.mrb[0].mxu0
    %v3885 = vadd.f32 %v3733, %v3884
    %v3886 = vpop.f32.mrb[0].mxu0
    %3887 = vmatprep.mubr.bf16.mxu0 0
    %3888 = vmatmul.mubr.bf16.gmra.mrb[0].mxu0 %v3705
    %v3889 = vpop.f32.mrb[0].mxu0
    %v3890 = vadd.f32 %v3733, %v3889
    %v3891 = vpop.f32.mrb[0].mxu0
    %v3892 = vpop.f32.mrb[0].mxu0
    %v3893 = vadd.f32 %v3733, %v3892
    %v3894 = vpop.f32.mrb[0].mxu0
    %3895 = vmatprep.mubr.bf16.mxu0 0
    %3896 = vmatmul.mubr.bf16.gmra.mrb[0].mxu0 %v3706
    %v3897 = vpop.f32.mrb[0].mxu0
    %v3898 = vadd.f32 %v3733, %v3897
    %v3899 = vpop.f32.mrb[0].mxu0
    %v3900 = vpop.f32.mrb[0].mxu0
    %v3901 = vadd.f32 %v3733, %v3900
    %v3902 = vpop.f32.mrb[0].mxu0
    %3903 = vmatprep.mubr.bf16.mxu0 0
    %3904 = vmatmul.mubr.bf16.gmra.mrb[0].mxu0 %v3707
    %v3905 = vpop.f32.mrb[0].mxu0
    %v3906 = vadd.f32 %v3733, %v3905
    %v3907 = vpop.f32.mrb[0].mxu0
    %v3908 = vpop.f32.mrb[0].mxu0
    %v3909 = vadd.f32 %v3733, %v3908
    %v3910 = vpop.f32.mrb[0].mxu0
    %3911 = vmatprep.mubr.bf16.mxu0 0
    %3912 = vmatmul.mubr.bf16.gmra.mrb[0].mxu0 %v3708
    %v3913 = vpop.f32.mrb[0].mxu0
    %v3914 = vadd.f32 %v3733, %v3913
    %v3915 = vpop.f32.mrb[0].mxu0
    %v3916 = vpop.f32.mrb[0].mxu0
    %v3917 = vadd.f32 %v3733, %v3916
    %v3918 = vpop.f32.mrb[0].mxu0
    %3919 = vmatprep.mubr.bf16.mxu0 0
    %3920 = vmatmul.mubr.bf16.gmra.mrb[0].mxu0 %v3709
    %v3921 = vpop.f32.mrb[0].mxu0
    %v3922 = vadd.f32 %v3733, %v3921
    %v3923 = vpop.f32.mrb[0].mxu0
    %v3924 = vpop.f32.mrb[0].mxu0
    %v3925 = vadd.f32 %v3733, %v3924
    %v3926 = vpop.f32.mrb[0].mxu0
    %3927 = vmatprep.mubr.bf16.mxu0 0
    %3928 = vmatmul.mubr.bf16.gmra.mrb[0].mxu0 %v3710
    %v3929 = vpop.f32.mrb[0].mxu0
    %v3930 = vadd.f32 %v3733, %v3929
    %v3931 = vpop.f32.mrb[0].mxu0
    %v3932 = vpop.f32.mrb[0].mxu0
    %v3933 = vadd.f32 %v3733, %v3932
    %v3934 = vpop.f32.mrb[0].mxu0
    %3935 = vmatprep.mubr.bf16.mxu0 0
    %3936 = vmatmul.mubr.bf16.gmra.mrb[0].mxu0 %v3711
    %v3937 = vpop.f32.mrb[0].mxu0
    %v3938 = vadd.f32 %v3733, %v3937
    %v3939 = vpop.f32.mrb[0].mxu0
    %v3940 = vpop.f32.mrb[0].mxu0
    %v3941 = vadd.f32 %v3733, %v3940
    %v3942 = vpop.f32.mrb[0].mxu0
    %3943 = vdwg.mxu0
    %v3944 = vtanh.pop %v3818
    %v3945 = vtanh.pop %v3821
    %v3946 = vtanh.pop %v3826
    %v3947 = vtanh.pop %v3829
    %v3948 = vtanh.pop %v3834
    %v3949 = vtanh.pop %v3837
    %v3950 = vtanh.pop %v3842
    %v3951 = vtanh.pop %v3845
    %v3952 = vtanh.pop %v3850
    %v3953 = vtanh.pop %v3853
    %v3954 = vtanh.pop %v3858
    %v3955 = vtanh.pop %v3861
    %v3956 = vtanh.pop %v3866
    %v3957 = vtanh.pop %v3869
    %v3958 = vtanh.pop %v3874
    %v3959 = vtanh.pop %v3877
    %v3960 = vtanh.pop %v3882
    %v3961 = vtanh.pop %v3885
    %v3962 = vtanh.pop %v3890
    %v3963 = vtanh.pop %v3893
    %v3964 = vtanh.pop %v3898
    %v3965 = vtanh.pop %v3901
    %v3966 = vtanh.pop %v3906
    %v3967 = vtanh.pop %v3909
    %v3968 = vtanh.pop %v3914
    %v3969 = vtanh.pop %v3917
    %v3970 = vtanh.pop %v3922
    %v3971 = vtanh.pop %v3925
    %v3972 = vtanh.pop %v3930
    %v3973 = vtanh.pop %v3933
    %v3974 = vtanh.pop %v3938
    %v3975 = vtanh.pop %v3941
    %v3976 = vld [vmem:[%s13] sm:$0x1]
    %v3978 = vlaneseq
    %v3979 = vshrl.u32 %v3978, 7
    %v3980 = vsub.s32 0, %v3979
    %v3981 = vrot.slane %v3976, %v3980
    %v3983 = vmul.f32 %v3944, %v3981
    %v3984 = vmul.f32 %v3945, %v3981
    %v3985 = vmul.f32 %v3946, %v3981
    %v3986 = vmul.f32 %v3947, %v3981
    %v3987 = vmul.f32 %v3948, %v3981
    %v3988 = vmul.f32 %v3949, %v3981
    %v3989 = vmul.f32 %v3950, %v3981
    %v3990 = vmul.f32 %v3951, %v3981
    %v3991 = vmul.f32 %v3952, %v3981
    %v3992 = vmul.f32 %v3953, %v3981
    %v3993 = vmul.f32 %v3954, %v3981
    %v3994 = vmul.f32 %v3955, %v3981
    %v3995 = vmul.f32 %v3956, %v3981
    %v3996 = vmul.f32 %v3957, %v3981
    %v3997 = vmul.f32 %v3958, %v3981
    %v3998 = vmul.f32 %v3959, %v3981
    %v3999 = vmul.f32 %v3960, %v3981
    %v4000 = vmul.f32 %v3961, %v3981
    %v4001 = vmul.f32 %v3962, %v3981
    %v4002 = vmul.f32 %v3963, %v3981
    %v4003 = vmul.f32 %v3964, %v3981
    %v4004 = vmul.f32 %v3965, %v3981
    %v4005 = vmul.f32 %v3966, %v3981
    %v4006 = vmul.f32 %v3967, %v3981
    %v4007 = vmul.f32 %v3968, %v3981
    %v4008 = vmul.f32 %v3969, %v3981
    %v4009 = vmul.f32 %v3970, %v3981
    %v4010 = vmul.f32 %v3971, %v3981
    %v4011 = vmul.f32 %v3972, %v3981
    %v4012 = vmul.f32 %v3973, %v3981
    %v4013 = vmul.f32 %v3974, %v3981
    %v4014 = vmul.f32 %v3975, %v3981
    %4015 = vst [vmem:[%s14] sm:$0xff] %v3983
    %4016 = vst [vmem:[%s14 + $0x8] sm:$0xff] %v3984
    %4017 = vst [vmem:[%s14 + $0x10] sm:$0xff] %v3985
    %4018 = vst [vmem:[%s14 + $0x18] sm:$0xff] %v3986
    %4019 = vst [vmem:[%s14 + $0x20] sm:$0xff] %v3987
    %4020 = vst [vmem:[%s14 + $0x28] sm:$0xff] %v3988
    %4021 = vst [vmem:[%s14 + $0x30] sm:$0xff] %v3989
    %4022 = vst [vmem:[%s14 + $0x38] sm:$0xff] %v3990
    %4023 = vst [vmem:[%s14 + $0x40] sm:$0xff] %v3991
    %4024 = vst [vmem:[%s14 + $0x48] sm:$0xff] %v3992
    %4025 = vst [vmem:[%s14 + $0x50] sm:$0xff] %v3993
    %4026 = vst [vmem:[%s14 + $0x58] sm:$0xff] %v3994
    %4027 = vst [vmem:[%s14 + $0x60] sm:$0xff] %v3995
    %4028 = vst [vmem:[%s14 + $0x68] sm:$0xff] %v3996
    %4029 = vst [vmem:[%s14 + $0x70] sm:$0xff] %v3997
    %4030 = vst [vmem:[%s14 + $0x78] sm:$0xff] %v3998
    %4031 = vst [vmem:[%s14 + $0x80] sm:$0xff] %v3999
    %4032 = vst [vmem:[%s14 + $0x88] sm:$0xff] %v4000
    %4033 = vst [vmem:[%s14 + $0x90] sm:$0xff] %v4001
    %4034 = vst [vmem:[%s14 + $0x98] sm:$0xff] %v4002
    %4035 = vst [vmem:[%s14 + $0xa0] sm:$0xff] %v4003
    %4036 = vst [vmem:[%s14 + $0xa8] sm:$0xff] %v4004
    %4037 = vst [vmem:[%s14 + $0xb0] sm:$0xff] %v4005
    %4038 = vst [vmem:[%s14 + $0xb8] sm:$0xff] %v4006
    %4039 = vst [vmem:[%s14 + $0xc0] sm:$0xff] %v4007
    %4040 = vst [vmem:[%s14 + $0xc8] sm:$0xff] %v4008
    %4041 = vst [vmem:[%s14 + $0xd0] sm:$0xff] %v4009
    %4042 = vst [vmem:[%s14 + $0xd8] sm:$0xff] %v4010
    %4043 = vst [vmem:[%s14 + $0xe0] sm:$0xff] %v4011
    %4044 = vst [vmem:[%s14 + $0xe8] sm:$0xff] %v4012
    %4045 = vst [vmem:[%s14 + $0xf0] sm:$0xff] %v4013
    %4046 = vst [vmem:[%s14 + $0xf8] sm:$0xff] %v4014
    // Predicated region
    $region66: #{actor_forward.1} parent=1 // pred_check
      _
    $region67: #{actor_forward.1} parent=1 // pred_check_branch
      %4048 = sbr.rel (0) target = $region69
    $region68: #{actor_forward.1} parent=1 // pred_region
      _
    $region69: #{actor_forward.1} parent=1 // pred_fallthru
      _
    // Predicated region
    $region70: #{actor_forward.1} parent=1 // pred_check
      _
    $region71: #{actor_forward.1} parent=1 // pred_check_branch
      %4050 = sbr.rel (0) target = $region73
    $region72: #{actor_forward.1} parent=1 // pred_region
      _
    $region73: #{actor_forward.1} parent=1 // pred_fallthru
      _
    %4051 = vsyncpa [#allocation3], 1
    %4052 = vsyncpa [#allocation5], 1

</llo_original>
